<compile_context>
chip_gen: v7x
topology: tpu7x:2x2x1
jax: 0.10.0
libtpu: 0.0.40
codegen_flags: <defaults>
</compile_context>

<pallas_src>
import functools

import jax
import jax.numpy as jnp
from jax import lax
from jax.experimental import pallas as pl
from jax.experimental.pallas import tpu as pltpu

EPS_BN = 1e-5
EPS_IN = 1e-5
ACT_DTYPE = jnp.bfloat16
STAGE_PLANES = (64, 128, 256, 512)
STAGE_BLOCKS = (3, 4, 6, 3)          # ResNet-50
STAGE_STRIDES = (1, 2, 2, 2)
BACKBONE_CHANNELS = (256, 512, 1024, 2048)
# Scoped-VMEM cap: well above our worst-case ~15 MiB working set, below v7x's
# 64 MiB physical VMEM (v5e/v6e have 128 MiB).
VMEM_LIMIT = 48 * 1024 * 1024


def _round_up(x, m):
    return (x + m - 1) // m * m


def _largest_div(n, cands):
    for c in cands:
        if n % c == 0:
            return c
    return n


# ----------------------------- Pallas kernels ------------------------------
def _mm_kernel(x_ref, w_ref, b_ref, o_ref, acc_ref, *, nk, relu):
    k = pl.program_id(2)

    @pl.when(k == 0)
    def _():
        acc_ref[...] = jnp.zeros_like(acc_ref)

    acc_ref[...] += jnp.dot(x_ref[...], w_ref[...],
                            preferred_element_type=jnp.float32)

    @pl.when(k == nk - 1)
    def _():
        y = acc_ref[...] + b_ref[...]
        if relu:
            y = jnp.maximum(y, 0.0)
        o_ref[...] = y.astype(o_ref.dtype)


def _mm_res_kernel(x_ref, w_ref, b_ref, r_ref, o_ref, acc_ref, *, nk, relu):
    k = pl.program_id(2)

    @pl.when(k == 0)
    def _():
        acc_ref[...] = jnp.zeros_like(acc_ref)

    acc_ref[...] += jnp.dot(x_ref[...], w_ref[...],
                            preferred_element_type=jnp.float32)

    @pl.when(k == nk - 1)
    def _():
        y = acc_ref[...] + b_ref[...] + r_ref[...].astype(jnp.float32)
        if relu:
            y = jnp.maximum(y, 0.0)
        o_ref[...] = y.astype(o_ref.dtype)


def _conv3x3_kernel(x_ref, w_ref, b_ref, o_ref, acc_ref, *, H, W, cin, relu):
    # x_ref: (1, H+2, W+2, Cin) padded image resident in VMEM.
    # w_ref: (9*Cin, tn) with K ordered (dy, dx, cin).
    # Accumulate 9 shifted 1x1 matmuls — no im2col materialization in HBM.
    acc_ref[...] = jnp.zeros_like(acc_ref)
    for dy in range(3):
        for dx in range(3):
            xt = x_ref[0, dy:dy + H, dx:dx + W, :]          # (H, W, Cin)
            xm = xt.reshape(H * W, cin)                      # W % 8 == 0 -> cheap
            tap = dy * 3 + dx
            acc_ref[...] += jnp.dot(xm, w_ref[tap * cin:(tap + 1) * cin, :],
                                    preferred_element_type=jnp.float32)
    y = acc_ref[...] + b_ref[...]
    if relu:
        y = jnp.maximum(y, 0.0)
    o_ref[0] = y.astype(o_ref.dtype)


def _instnorm_relu_kernel(x_ref, g_ref, b_ref, o_ref, *, relu):
    x = x_ref[...].astype(jnp.float32)                 # (N, HW, C)
    hw = x.shape[1]
    s = jnp.sum(x, axis=1, keepdims=True)
    sq = jnp.sum(x * x, axis=1, keepdims=True)         # one-pass mean / var
    mean = s / hw
    var = jnp.maximum(sq / hw - mean * mean, 0.0)      # clamp bf16 round-off
    y = (x - mean) * lax.rsqrt(var + EPS_IN)
    y = y * g_ref[...] + b_ref[...]
    if relu:
        y = jnp.maximum(y, 0.0)
    o_ref[...] = y.astype(o_ref.dtype)


# --------------------------- Pallas matmul wrapper ---------------------------
def _pick_tiles(M, K, N):
    if M <= 128:
        # Weight-HBM-bound layers (layer3/4, deep decoders): big weight tiles so each
        # grid step streams ~0.5-2 MiB of weights; activations are KiBs.
        tm = _round_up(M, 16)
        tk = _largest_div(K, (512, 384, 256, 128)) if K % 128 == 0 else K
        max_tn = max(256, (2 << 20) // (2 * tk))          # <= ~2 MiB weight tile
        cands = tuple(c for c in (2048, 1536, 1024, 768, 512, 384, 256, 128)
                      if c <= max_tn)
        tn = _largest_div(N, cands) if (N % 128 == 0 and cands) else N
    else:
        tm = min(512, _round_up(M, 16))
        tk = _largest_div(K, (512, 384, 256, 128)) if K % 128 == 0 else K
        tn = _largest_div(N, (512, 384, 256, 128)) if N % 128 == 0 else N
    return tm, tk, tn


def matmul_bias_act(x, w, bias, *, relu, residual=None):
    """x:(M,K) bf16, w:(K,N) bf16 (BN scale pre-folded), bias:(N,) f32.

    Returns relu?(x @ w + bias [+ residual]) : (M,N) in bf16.
    """
    M, K = x.shape
    N = w.shape[1]

    tm, tk, tn = _pick_tiles(M, K, N)
    Mp = _round_up(M, tm)
    nk = K // tk
    grid = (Mp // tm, N // tn, nk)

    xp = x if Mp == M else jnp.pad(x, ((0, Mp - M), (0, 0)))
    b2 = bias.reshape(1, N).astype(jnp.float32)

    in_specs = [
        pl.BlockSpec((tm, tk), lambda i, j, k: (i, k)),
        pl.BlockSpec((tk, tn), lambda i, j, k: (k, j)),
        pl.BlockSpec((1, tn), lambda i, j, k: (0, j)),
    ]
    args = [xp, w, b2]
    if residual is not None:
        rp = residual if Mp == M else jnp.pad(residual, ((0, Mp - M), (0, 0)))
        in_specs.append(pl.BlockSpec((tm, tn), lambda i, j, k: (i, j)))
        args.append(rp)
        kern = functools.partial(_mm_res_kernel, nk=nk, relu=relu)
    else:
        kern = functools.partial(_mm_kernel, nk=nk, relu=relu)

    out = pl.pallas_call(
        kern,
        out_shape=jax.ShapeDtypeStruct((Mp, N), ACT_DTYPE),
        grid_spec=pltpu.PrefetchScalarGridSpec(
            num_scalar_prefetch=0,
            grid=grid,
            in_specs=in_specs,
            out_specs=pl.BlockSpec((tm, tn), lambda i, j, k: (i, j)),
            scratch_shapes=[pltpu.VMEM((tm, tn), jnp.float32)],
        ),
        compiler_params=pltpu.CompilerParams(
            dimension_semantics=("parallel", "parallel", "arbitrary"),
            vmem_limit_bytes=VMEM_LIMIT),
    )(*args)
    return out if Mp == M else out[:M]


# ------------------------------- conv wrappers -------------------------------
def conv1x1(x, wmat, bias, *, stride=1, relu=True, residual=None):
    """1x1 Conv + folded BN + optional residual + ReLU as a Pallas matmul.  x: NHWC."""
    if stride > 1:
        x = x[:, ::stride, ::stride, :]
    n, h, w, cin = x.shape
    cout = wmat.shape[1]
    cols = x.reshape(n * h * w, cin)
    res2d = None if residual is None else residual.reshape(n * h * w, cout)
    y = matmul_bias_act(cols, wmat, bias, relu=relu, residual=res2d)
    return y.reshape(n, h, w, cout)


def _conv3x3_shift(x, w9, bias, *, relu):
    """3x3, stride-1, pad-1 conv as 9 shifted 1x1 matmuls inside one Pallas kernel."""
    n, h, w, cin = x.shape
    cout = w9.shape[1]
    xp = jnp.pad(x, ((0, 0), (1, 1), (1, 1), (0, 0)))
    hp, wp = h + 2, w + 2
    tn = cout if cout <= 256 else _largest_div(cout, (256, 128))
    grid = (n, cout // tn)
    kern = functools.partial(_conv3x3_kernel, H=h, W=w, cin=cin, relu=relu)
    out = pl.pallas_call(
        kern,
        out_shape=jax.ShapeDtypeStruct((n, h * w, cout), ACT_DTYPE),
        grid_spec=pltpu.PrefetchScalarGridSpec(
            num_scalar_prefetch=0,
            grid=grid,
            in_specs=[
                pl.BlockSpec((1, hp, wp, cin), lambda i, j: (i, 0, 0, 0)),
                pl.BlockSpec((9 * cin, tn), lambda i, j: (0, j)),
                pl.BlockSpec((1, tn), lambda i, j: (0, j)),
            ],
            out_specs=pl.BlockSpec((1, h * w, tn), lambda i, j: (i, 0, j)),
            scratch_shapes=[pltpu.VMEM((h * w, tn), jnp.float32)],
        ),
        compiler_params=pltpu.CompilerParams(
            dimension_semantics=("parallel", "parallel"),
            vmem_limit_bytes=VMEM_LIMIT),
    )(xp, w9, bias.reshape(1, cout).astype(jnp.float32))
    return out.reshape(n, h, w, cout)


def _im2col_3x3(x, stride):
    """Cheap XLA-side im2col for tiny-spatial 3x3 convs (few hundred KiB at most)."""
    n, h, w, c = x.shape
    ho = (h - 1) // stride + 1
    wo = (w - 1) // stride + 1
    xp = jnp.pad(x, ((0, 0), (1, 1), (1, 1), (0, 0)))
    cols = []
    for dy in range(3):
        for dx in range(3):
            cols.append(lax.slice(
                xp, (0, dy, dx, 0),
                (n, dy + (ho - 1) * stride + 1, dx + (wo - 1) * stride + 1, c),
                (1, stride, stride, 1)))
    patches = jnp.concatenate(cols, axis=-1)          # K ordered (dy, dx, cin)
    return patches.reshape(n * ho * wo, 9 * c), ho, wo


def conv3x3(x, w9, bias, *, stride=1, relu=True):
    """3x3 Conv (pad=1) + folded BN + ReLU on the Pallas/MXU path.  x: NHWC bf16.

    w9: (9*Cin, Cout) bf16 with K ordered (dy, dx, cin)."""
    n, h, w, cin = x.shape
    cout = w9.shape[1]
    win_bytes = (h + 2) * (w + 2) * cin * 2
    acc_bytes = h * w * min(cout, 256) * 4
    if (stride == 1 and w % 8 == 0 and h * w >= 256
            and win_bytes + acc_bytes <= 12 * 1024 * 1024):
        return _conv3x3_shift(x, w9, bias, relu=relu)
    if h * w <= 4096:
        patches, ho, wo = _im2col_3x3(x, stride)
        y = matmul_bias_act(patches, w9, bias, relu=relu)
        return y.reshape(n, ho, wo, cout)
    # TODO(synk): huge-spatial fallback; a halo-DMA tiled Pallas conv would fuse this.
    w_hwio = w9.reshape(3, 3, cin, cout)
    return conv_kxk(x, w_hwio, bias, stride=stride, padding=1, relu=relu)


def conv_kxk(x, w_hwio, bias, *, stride=1, padding=0, relu=True):
    """Generic conv via XLA (used only for the 7x7 stem, ~0.6% of FLOPs)."""
    y = lax.conv_general_dilated(
        x, w_hwio,
        window_strides=(stride, stride),
        padding=((padding, padding), (padding, padding)),
        dimension_numbers=("NHWC", "HWIO", "NHWC"),
        preferred_element_type=jnp.float32)
    y = y + bias.reshape(1, 1, 1, -1)
    if relu:
        y = jnp.maximum(y, 0.0)
    return y.astype(x.dtype)


def maxpool3x3_s2(x):
    # nn.MaxPool2d(kernel_size=3, stride=2, padding=1), NHWC.
    init = jnp.asarray(-jnp.inf, dtype=x.dtype)
    return lax.reduce_window(x, init, lax.max,
                             window_dimensions=(1, 3, 3, 1),
                             window_strides=(1, 2, 2, 1),
                             padding=((0, 0), (1, 1), (1, 1), (0, 0)))


def instance_norm_relu(x, gamma, beta, *, relu=True):
    """InstanceNorm2d(affine=True) + optional ReLU.  x: NHWC (bf16)."""
    n, h, w, c = x.shape
    xr = x.reshape(n, h * w, c)
    g = gamma.reshape(1, 1, c).astype(jnp.float32)
    b = beta.reshape(1, 1, c).astype(jnp.float32)
    out = pl.pallas_call(
        functools.partial(_instnorm_relu_kernel, relu=relu),
        out_shape=jax.ShapeDtypeStruct((n, h * w, c), x.dtype),
        grid_spec=pltpu.PrefetchScalarGridSpec(
            num_scalar_prefetch=0,
            grid=(1,),
            in_specs=[pl.BlockSpec((n, h * w, c), lambda i: (0, 0, 0)),
                      pl.BlockSpec((1, 1, c), lambda i: (0, 0, 0)),
                      pl.BlockSpec((1, 1, c), lambda i: (0, 0, 0))],
            out_specs=pl.BlockSpec((n, h * w, c), lambda i: (0, 0, 0)),
        ),
        compiler_params=pltpu.CompilerParams(
            dimension_semantics=("arbitrary",),
            vmem_limit_bytes=VMEM_LIMIT),
    )(xr, g, b)
    return out.reshape(n, h, w, c)


def bilinear_align_corners(x, out_h, out_w):
    # F.interpolate(mode='bilinear', align_corners=True) as two small interpolation
    # matmuls; x stays bf16 (f32 accumulation via preferred_element_type).
    n, h, w, c = x.shape
    if h == out_h and w == out_w:
        return x

    def interp_matrix(osz, isz):
        if isz == 1 or osz == 1:
            src = jnp.zeros((osz,), jnp.float32)
        else:
            src = jnp.arange(osz, dtype=jnp.float32) * ((isz - 1) / (osz - 1))
        i0 = jnp.floor(src).astype(jnp.int32)
        i1 = jnp.minimum(i0 + 1, isz - 1)
        w1 = src - i0.astype(jnp.float32)
        w0 = 1.0 - w1
        return (w0[:, None] * jax.nn.one_hot(i0, isz, dtype=jnp.float32)
                + w1[:, None] * jax.nn.one_hot(i1, isz, dtype=jnp.float32))

    ry = interp_matrix(out_h, h)
    rx = interp_matrix(out_w, w)
    y = jnp.einsum('oh,nhwc->nowc', ry, x, preferred_element_type=jnp.float32)
    y = jnp.einsum('pw,nowc->nopc', rx, y, preferred_element_type=jnp.float32)
    return y.astype(x.dtype)


# --------------------------- parameter construction -------------------------
def make_conv(key, cout, cin, kh, kw):
    fan_in = cin * kh * kw
    std = (2.0 / fan_in) ** 0.5          # kaiming normal, fan_in, relu
    return jax.random.normal(key, (cout, cin, kh, kw), jnp.float32) * std


def bottleneck_params(key, cin, planes, stride):
    ks = jax.random.split(key, 4)
    p = {'conv1': make_conv(ks[0], planes, cin, 1, 1),
         'conv2': make_conv(ks[1], planes, planes, 3, 3),
         'conv3': make_conv(ks[2], planes * 4, planes, 1, 1)}
    if stride != 1 or cin != planes * 4:
        p['down'] = make_conv(ks[3], planes * 4, cin, 1, 1)
    return p


def decoder_params(key, cin, cout):
    k1, k2 = jax.random.split(key)
    return {'conv1': make_conv(k1, cin // 2, cin, 1, 1),
            'conv2': make_conv(k2, cout, cin // 2, 1, 1)}


def init_raw_params(key):
    keys = iter(jax.random.split(key, 64))
    p = {'conv1': make_conv(next(keys), 64, 3, 7, 7),
         'in1_gamma': jnp.ones((64,), jnp.float32),
         'in1_beta': jnp.zeros((64,), jnp.float32)}
    cin = 64
    for si in range(4):
        blocks = []
        for bi in range(STAGE_BLOCKS[si]):
            stride = STAGE_STRIDES[si] if bi == 0 else 1
            blocks.append(bottleneck_params(next(keys), cin, STAGE_PLANES[si], stride))
            cin = STAGE_PLANES[si] * 4
        p[f'layer{si + 1}'] = blocks
    p['decoder_4'] = decoder_params(next(keys), BACKBONE_CHANNELS[3] * 2, BACKBONE_CHANNELS[2])
    p['decoder_3'] = decoder_params(next(keys), BACKBONE_CHANNELS[2] * 3, BACKBONE_CHANNELS[1])
    p['decoder_2'] = decoder_params(next(keys), BACKBONE_CHANNELS[1] * 3, BACKBONE_CHANNELS[0])
    p['decoder_1'] = decoder_params(next(keys), BACKBONE_CHANNELS[0] * 3, BACKBONE_CHANNELS[0])
    p['out_conv'] = make_conv(next(keys), BACKBONE_CHANNELS[0], BACKBONE_CHANNELS[0], 3, 3)
    return p


def _bn_scale_bias(c):
    # Inference-mode BN with default running stats (mean=0, var=1) and default init
    # (gamma=1, beta=0), folded into per-channel scale/bias.
    # TODO(synk): trained checkpoints would need the real running stats here;
    # training-mode (batch-statistics) BatchNorm not modeled.
    scale = jnp.full((c,), (1.0 + EPS_BN) ** -0.5, jnp.float32)
    return scale, jnp.zeros((c,), jnp.float32)


def _prep_1x1(w_oihw, fold_bn=True):
    cout, cin = w_oihw.shape[:2]
    if fold_bn:
        scale, bias = _bn_scale_bias(cout)
        w = w_oihw * scale.reshape(cout, 1, 1, 1)
    else:
        bias = jnp.zeros((cout,), jnp.float32)
        w = w_oihw
    return w.reshape(cout, cin).T.astype(ACT_DTYPE), bias        # (K, N), bf16


def _prep_3x3(w_oihw, fold_bn=True):
    cout, cin = w_oihw.shape[:2]
    if fold_bn:
        scale, bias = _bn_scale_bias(cout)
        w = w_oihw * scale.reshape(cout, 1, 1, 1)
    else:
        bias = jnp.zeros((cout,), jnp.float32)
        w = w_oihw
    w = jnp.transpose(w, (2, 3, 1, 0)).reshape(9 * cin, cout)    # (dy,dx,cin) major
    return w.astype(ACT_DTYPE), bias


def _prep_kxk(w_oihw, fold_bn=True):
    cout = w_oihw.shape[0]
    if fold_bn:
        scale, bias = _bn_scale_bias(cout)
        w = w_oihw * scale.reshape(cout, 1, 1, 1)
    else:
        bias = jnp.zeros((cout,), jnp.float32)
        w = w_oihw
    return jnp.transpose(w, (2, 3, 1, 0)).astype(ACT_DTYPE), bias   # HWIO, bf16


def prepare_params(raw):
    """One-time preprocessing: BN fold, (K,N)/HWIO layout, bf16 cast."""
    p = {'stem': _prep_kxk(raw['conv1'], fold_bn=False),           # IN follows, no BN
         'in1_gamma': raw['in1_gamma'], 'in1_beta': raw['in1_beta']}
    for si in range(4):
        blocks = []
        for blk in raw[f'layer{si + 1}']:
            b = {'conv1': _prep_1x1(blk['conv1']),
                 'conv2': _prep_3x3(blk['conv2']),
                 'conv3': _prep_1x1(blk['conv3'])}
            if 'down' in blk:
                b['down'] = _prep_1x1(blk['down'])
            blocks.append(b)
        p[f'layer{si + 1}'] = blocks
    for name in ('decoder_4', 'decoder_3', 'decoder_2', 'decoder_1'):
        p[name] = {'conv1': _prep_1x1(raw[name]['conv1']),
                   'conv2': _prep_1x1(raw[name]['conv2'])}
    p['out_conv'] = _prep_3x3(raw['out_conv'])
    return p


# ------------------------------- forward pass --------------------------------
def bottleneck_forward(p, x, stride):
    if 'down' in p:
        wd, bd = p['down']
        identity = conv1x1(x, wd, bd, stride=stride, relu=False)
    else:
        identity = x
    w1, b1 = p['conv1']
    w2, b2 = p['conv2']
    w3, b3 = p['conv3']
    out = conv1x1(x, w1, b1, relu=True)
    out = conv3x3(out, w2, b2, stride=stride, relu=True)
    out = conv1x1(out, w3, b3, relu=True, residual=identity)
    return out


def forward_embedding(params, x):
    # layer0: conv7x7/s2 -> InstanceNorm2d(affine) -> ReLU -> MaxPool3x3/s2
    ws, bs = params['stem']
    x = conv_kxk(x, ws, bs, stride=2, padding=3, relu=False)
    x = instance_norm_relu(x, params['in1_gamma'], params['in1_beta'], relu=True)
    x = maxpool3x3_s2(x)
    feats = []
    for si in range(4):
        for bi, blk in enumerate(params[f'layer{si + 1}']):
            x = bottleneck_forward(blk, x, STAGE_STRIDES[si] if bi == 0 else 1)
        feats.append(x)
    return feats


def decoder_forward(p, x):
    # TODO(synk): could avoid materializing the channel concat by splitting the K
    # grid axis across the concat members (minor win, skipped for simplicity).
    w1, b1 = p['conv1']
    w2, b2 = p['conv2']
    x = conv1x1(x, w1, b1, relu=True)
    x = conv1x1(x, w2, b2, relu=True)
    return x


def siam_conc_r50_forward(params, x1_nchw, x2_nchw):
    x1 = jnp.transpose(x1_nchw, (0, 2, 3, 1)).astype(ACT_DTYPE)   # NCHW -> NHWC
    x2 = jnp.transpose(x2_nchw, (0, 2, 3, 1)).astype(ACT_DTYPE)
    b = x1.shape[0]

    # Siamese weight-sharing: run the backbone once on the fused batch.
    feats = forward_embedding(params, jnp.concatenate([x1, x2], axis=0))
    t1 = [f[:b] for f in feats]
    t2 = [f[b:] for f in feats]

    f4 = decoder_forward(params['decoder_4'], jnp.concatenate([t1[3], t2[3]], axis=-1))
    f4 = bilinear_align_corners(f4, t1[2].shape[1], t1[2].shape[2])

    f3 = decoder_forward(params['decoder_3'], jnp.concatenate([t1[2], t2[2], f4], axis=-1))
    f3 = bilinear_align_corners(f3, t1[1].shape[1], t1[1].shape[2])

    f2 = decoder_forward(params['decoder_2'], jnp.concatenate([t1[1], t2[1], f3], axis=-1))
    f2 = bilinear_align_corners(f2, t1[0].shape[1], t1[0].shape[2])

    f1 = decoder_forward(params['decoder_1'], jnp.concatenate([t1[0], t2[0], f2], axis=-1))
    f1 = bilinear_align_corners(f1, x1.shape[1], x1.shape[2])

    # self.out: Conv3x3(bias=False) -> BN -> ReLU -> Dropout2d(0.1)
    wo, bo = params['out_conv']
    out = conv3x3(f1, wo, bo, stride=1, relu=True)
    # TODO(synk): Dropout2d(0.1) treated as eval-mode identity (no channel dropping).
    out = jnp.transpose(out, (0, 3, 1, 2)).astype(jnp.float32)     # bf16 transpose
    return [out]                                                   # back to NCHW


# ----------------------------------- main ------------------------------------
if __name__ == "__main__":
    key = jax.random.PRNGKey(0)
    kp, kx1, kx2, kc1, kc2 = jax.random.split(key, 5)

    # ---- quick correctness check of the Pallas 3x3 conv paths (shift + im2col) ----
    def _conv3x3_ref(x, w9, bias, stride):
        n, h, w_, c = x.shape
        ho = (h - 1) // stride + 1
        wo = (w_ - 1) // stride + 1
        xp = jnp.pad(x.astype(jnp.float32), ((0, 0), (1, 1), (1, 1), (0, 0)))
        cols = []
        for dy in range(3):
            for dx in range(3):
                cols.append(lax.slice(
                    xp, (0, dy, dx, 0),
                    (n, dy + (ho - 1) * stride + 1, dx + (wo - 1) * stride + 1, c),
                    (1, stride, stride, 1)))
        p = jnp.concatenate(cols, axis=-1).reshape(n * ho * wo, 9 * c)
        y = p @ w9.astype(jnp.float32) + bias.reshape(1, -1)
        return jnp.maximum(y, 0.0).reshape(n, ho, wo, -1)

    xc = jax.random.normal(kc1, (2, 16, 16, 64), jnp.float32).astype(ACT_DTYPE)
    wc, bc = _prep_3x3(make_conv(kc2, 64, 64, 3, 3))
    for s in (1, 2):
        got = jax.jit(functools.partial(conv3x3, stride=s, relu=True))(xc, wc, bc)
        want = _conv3x3_ref(xc, wc, bc, s)
        err = float(jnp.max(jnp.abs(got.astype(jnp.float32) - want)))
        assert err < 0.1, f"conv3x3 stride={s} max abs err {err}"

    # ---- full forward ----
    params = prepare_params(init_raw_params(kp))

    B, C, H, W = 2, 3, 64, 64
    x1 = jax.random.normal(kx1, (B, C, H, W), jnp.float32)
    x2 = jax.random.normal(kx2, (B, C, H, W), jnp.float32)

    fwd = jax.jit(siam_conc_r50_forward)
    outs = jax.block_until_ready(fwd(params, x1, x2))

    out = outs[0]
    assert out.shape == (B, BACKBONE_CHANNELS[0], H, W), out.shape
    assert jnp.all(jnp.isfinite(out))
    print("KERNEL_OK")
</pallas_src>

<mosaic_0001>
module attributes {stable_mosaic.version = 11 : i64} {
  func.func @_conv3x3_kernel(%arg0: i32, %arg1: i32, %arg2: memref<1x18x18x64xbf16, #tpu.memory_space<vmem>>, %arg3: memref<576x64xbf16, #tpu.memory_space<vmem>>, %arg4: memref<1x64xf32, #tpu.memory_space<vmem>>, %arg5: memref<1x256x64xbf16, #tpu.memory_space<vmem>>, %arg6: memref<256x64xf32, #tpu.memory_space<vmem>>) attributes {dimension_semantics = [#tpu.dimension_semantics<parallel>, #tpu.dimension_semantics<parallel>], iteration_bounds = array<i64: 2, 1>, scalar_prefetch = 0 : i64, scratch_operands = 1 : i64, tpu.core_type = #tpu.core_type<tc>, window_params = [{transform_indices = @transform_0, window_bounds = array<i64: 1, 18, 18, 64>}, {transform_indices = @transform_1, window_bounds = array<i64: 576, 64>}, {transform_indices = @transform_2, window_bounds = array<i64: 1, 64>}, {transform_indices = @transform_3, window_bounds = array<i64: 1, 256, 64>}]} {
    %cst = arith.constant 0.000000e+00 : f32
    %0 = vector.broadcast %cst : f32 to vector<256x64xf32>
    %c0 = arith.constant 0 : index
    %c0_0 = arith.constant 0 : index
    %1 = vector.load %arg6[%c0, %c0_0] : memref<256x64xf32, #tpu.memory_space<vmem>>, vector<256x64xf32>
    tpu.vector_store %arg6[%c0, %c0_0], %0 {strides = array<i32>} : memref<256x64xf32, #tpu.memory_space<vmem>>, vector<256x64xf32>,
    %c0_1 = arith.constant 0 : index
    %c0_2 = arith.constant 0 : index
    %c0_3 = arith.constant 0 : index
    %c0_4 = arith.constant 0 : index
    %2 = vector.load %arg2[%c0_1, %c0_2, %c0_3, %c0_4] : memref<1x18x18x64xbf16, #tpu.memory_space<vmem>>, vector<1x16x16x64xbf16>
    %3 = vector.shape_cast %2 : vector<1x16x16x64xbf16> to vector<16x16x64xbf16>
    %4 = vector.shape_cast %3 : vector<16x16x64xbf16> to vector<256x64xbf16>
    %c0_5 = arith.constant 0 : index
    %c0_6 = arith.constant 0 : index
    %5 = vector.load %arg6[%c0_5, %c0_6] : memref<256x64xf32, #tpu.memory_space<vmem>>, vector<256x64xf32>
    %c0_7 = arith.constant 0 : index
    %c0_8 = arith.constant 0 : index
    %6 = vector.load %arg3[%c0_7, %c0_8] : memref<576x64xbf16, #tpu.memory_space<vmem>>, vector<64x64xbf16>
    %cst_9 = arith.constant dense<0.000000e+00> : vector<256x64xf32>
    %7 = tpu.matmul %4, %6, %cst_9 {dimension_numbers = #tpu.dot_dimension_numbers<[1], [0], [0], [1], [0, 0, 1, 1], [], []>} : vector<256x64xbf16>, vector<64x64xbf16>, vector<256x64xf32> -> vector<256x64xf32>
    %8 = arith.addf %5, %7 : vector<256x64xf32>
    %c0_10 = arith.constant 0 : index
    %c0_11 = arith.constant 0 : index
    %9 = vector.load %arg6[%c0_10, %c0_11] : memref<256x64xf32, #tpu.memory_space<vmem>>, vector<256x64xf32>
    tpu.vector_store %arg6[%c0_10, %c0_11], %8 {strides = array<i32>} : memref<256x64xf32, #tpu.memory_space<vmem>>, vector<256x64xf32>,
    %c0_12 = arith.constant 0 : index
    %c0_13 = arith.constant 0 : index
    %c1 = arith.constant 1 : index
    %c0_14 = arith.constant 0 : index
    %10 = vector.load %arg2[%c0_12, %c0_13, %c1, %c0_14] : memref<1x18x18x64xbf16, #tpu.memory_space<vmem>>, vector<1x16x16x64xbf16>
    %11 = vector.shape_cast %10 : vector<1x16x16x64xbf16> to vector<16x16x64xbf16>
    %12 = vector.shape_cast %11 : vector<16x16x64xbf16> to vector<256x64xbf16>
    %c0_15 = arith.constant 0 : index
    %c0_16 = arith.constant 0 : index
    %13 = vector.load %arg6[%c0_15, %c0_16] : memref<256x64xf32, #tpu.memory_space<vmem>>, vector<256x64xf32>
    %c64 = arith.constant 64 : index
    %c0_17 = arith.constant 0 : index
    %14 = vector.load %arg3[%c64, %c0_17] : memref<576x64xbf16, #tpu.memory_space<vmem>>, vector<64x64xbf16>
    %cst_18 = arith.constant dense<0.000000e+00> : vector<256x64xf32>
    %15 = tpu.matmul %12, %14, %cst_18 {dimension_numbers = #tpu.dot_dimension_numbers<[1], [0], [0], [1], [0, 0, 1, 1], [], []>} : vector<256x64xbf16>, vector<64x64xbf16>, vector<256x64xf32> -> vector<256x64xf32>
    %16 = arith.addf %13, %15 : vector<256x64xf32>
    %c0_19 = arith.constant 0 : index
    %c0_20 = arith.constant 0 : index
    %17 = vector.load %arg6[%c0_19, %c0_20] : memref<256x64xf32, #tpu.memory_space<vmem>>, vector<256x64xf32>
    tpu.vector_store %arg6[%c0_19, %c0_20], %16 {strides = array<i32>} : memref<256x64xf32, #tpu.memory_space<vmem>>, vector<256x64xf32>,
    %c0_21 = arith.constant 0 : index
    %c0_22 = arith.constant 0 : index
    %c2 = arith.constant 2 : index
    %c0_23 = arith.constant 0 : index
    %18 = vector.load %arg2[%c0_21, %c0_22, %c2, %c0_23] : memref<1x18x18x64xbf16, #tpu.memory_space<vmem>>, vector<1x16x16x64xbf16>
    %19 = vector.shape_cast %18 : vector<1x16x16x64xbf16> to vector<16x16x64xbf16>
    %20 = vector.shape_cast %19 : vector<16x16x64xbf16> to vector<256x64xbf16>
    %c0_24 = arith.constant 0 : index
    %c0_25 = arith.constant 0 : index
    %21 = vector.load %arg6[%c0_24, %c0_25] : memref<256x64xf32, #tpu.memory_space<vmem>>, vector<256x64xf32>
    %c128 = arith.constant 128 : index
    %c0_26 = arith.constant 0 : index
    %22 = vector.load %arg3[%c128, %c0_26] : memref<576x64xbf16, #tpu.memory_space<vmem>>, vector<64x64xbf16>
    %cst_27 = arith.constant dense<0.000000e+00> : vector<256x64xf32>
    %23 = tpu.matmul %20, %22, %cst_27 {dimension_numbers = #tpu.dot_dimension_numbers<[1], [0], [0], [1], [0, 0, 1, 1], [], []>} : vector<256x64xbf16>, vector<64x64xbf16>, vector<256x64xf32> -> vector<256x64xf32>
    %24 = arith.addf %21, %23 : vector<256x64xf32>
    %c0_28 = arith.constant 0 : index
    %c0_29 = arith.constant 0 : index
    %25 = vector.load %arg6[%c0_28, %c0_29] : memref<256x64xf32, #tpu.memory_space<vmem>>, vector<256x64xf32>
    tpu.vector_store %arg6[%c0_28, %c0_29], %24 {strides = array<i32>} : memref<256x64xf32, #tpu.memory_space<vmem>>, vector<256x64xf32>,
    %c0_30 = arith.constant 0 : index
    %c1_31 = arith.constant 1 : index
    %c0_32 = arith.constant 0 : index
    %c0_33 = arith.constant 0 : index
    %26 = vector.load %arg2[%c0_30, %c1_31, %c0_32, %c0_33] : memref<1x18x18x64xbf16, #tpu.memory_space<vmem>>, vector<1x16x16x64xbf16>
    %27 = vector.shape_cast %26 : vector<1x16x16x64xbf16> to vector<16x16x64xbf16>
    %28 = vector.shape_cast %27 : vector<16x16x64xbf16> to vector<256x64xbf16>
    %c0_34 = arith.constant 0 : index
    %c0_35 = arith.constant 0 : index
    %29 = vector.load %arg6[%c0_34, %c0_35] : memref<256x64xf32, #tpu.memory_space<vmem>>, vector<256x64xf32>
    %c192 = arith.constant 192 : index
    %c0_36 = arith.constant 0 : index
    %30 = vector.load %arg3[%c192, %c0_36] : memref<576x64xbf16, #tpu.memory_space<vmem>>, vector<64x64xbf16>
    %cst_37 = arith.constant dense<0.000000e+00> : vector<256x64xf32>
    %31 = tpu.matmul %28, %30, %cst_37 {dimension_numbers = #tpu.dot_dimension_numbers<[1], [0], [0], [1], [0, 0, 1, 1], [], []>} : vector<256x64xbf16>, vector<64x64xbf16>, vector<256x64xf32> -> vector<256x64xf32>
    %32 = arith.addf %29, %31 : vector<256x64xf32>
    %c0_38 = arith.constant 0 : index
    %c0_39 = arith.constant 0 : index
    %33 = vector.load %arg6[%c0_38, %c0_39] : memref<256x64xf32, #tpu.memory_space<vmem>>, vector<256x64xf32>
    tpu.vector_store %arg6[%c0_38, %c0_39], %32 {strides = array<i32>} : memref<256x64xf32, #tpu.memory_space<vmem>>, vector<256x64xf32>,
    %c0_40 = arith.constant 0 : index
    %c1_41 = arith.constant 1 : index
    %c1_42 = arith.constant 1 : index
    %c0_43 = arith.constant 0 : index
    %34 = vector.load %arg2[%c0_40, %c1_41, %c1_42, %c0_43] : memref<1x18x18x64xbf16, #tpu.memory_space<vmem>>, vector<1x16x16x64xbf16>
    %35 = vector.shape_cast %34 : vector<1x16x16x64xbf16> to vector<16x16x64xbf16>
    %36 = vector.shape_cast %35 : vector<16x16x64xbf16> to vector<256x64xbf16>
    %c0_44 = arith.constant 0 : index
    %c0_45 = arith.constant 0 : index
    %37 = vector.load %arg6[%c0_44, %c0_45] : memref<256x64xf32, #tpu.memory_space<vmem>>, vector<256x64xf32>
    %c256 = arith.constant 256 : index
    %c0_46 = arith.constant 0 : index
    %38 = vector.load %arg3[%c256, %c0_46] : memref<576x64xbf16, #tpu.memory_space<vmem>>, vector<64x64xbf16>
    %cst_47 = arith.constant dense<0.000000e+00> : vector<256x64xf32>
    %39 = tpu.matmul %36, %38, %cst_47 {dimension_numbers = #tpu.dot_dimension_numbers<[1], [0], [0], [1], [0, 0, 1, 1], [], []>} : vector<256x64xbf16>, vector<64x64xbf16>, vector<256x64xf32> -> vector<256x64xf32>
    %40 = arith.addf %37, %39 : vector<256x64xf32>
    %c0_48 = arith.constant 0 : index
    %c0_49 = arith.constant 0 : index
    %41 = vector.load %arg6[%c0_48, %c0_49] : memref<256x64xf32, #tpu.memory_space<vmem>>, vector<256x64xf32>
    tpu.vector_store %arg6[%c0_48, %c0_49], %40 {strides = array<i32>} : memref<256x64xf32, #tpu.memory_space<vmem>>, vector<256x64xf32>,
    %c0_50 = arith.constant 0 : index
    %c1_51 = arith.constant 1 : index
    %c2_52 = arith.constant 2 : index
    %c0_53 = arith.constant 0 : index
    %42 = vector.load %arg2[%c0_50, %c1_51, %c2_52, %c0_53] : memref<1x18x18x64xbf16, #tpu.memory_space<vmem>>, vector<1x16x16x64xbf16>
    %43 = vector.shape_cast %42 : vector<1x16x16x64xbf16> to vector<16x16x64xbf16>
    %44 = vector.shape_cast %43 : vector<16x16x64xbf16> to vector<256x64xbf16>
    %c0_54 = arith.constant 0 : index
    %c0_55 = arith.constant 0 : index
    %45 = vector.load %arg6[%c0_54, %c0_55] : memref<256x64xf32, #tpu.memory_space<vmem>>, vector<256x64xf32>
    %c320 = arith.constant 320 : index
    %c0_56 = arith.constant 0 : index
    %46 = vector.load %arg3[%c320, %c0_56] : memref<576x64xbf16, #tpu.memory_space<vmem>>, vector<64x64xbf16>
    %cst_57 = arith.constant dense<0.000000e+00> : vector<256x64xf32>
    %47 = tpu.matmul %44, %46, %cst_57 {dimension_numbers = #tpu.dot_dimension_numbers<[1], [0], [0], [1], [0, 0, 1, 1], [], []>} : vector<256x64xbf16>, vector<64x64xbf16>, vector<256x64xf32> -> vector<256x64xf32>
    %48 = arith.addf %45, %47 : vector<256x64xf32>
    %c0_58 = arith.constant 0 : index
    %c0_59 = arith.constant 0 : index
    %49 = vector.load %arg6[%c0_58, %c0_59] : memref<256x64xf32, #tpu.memory_space<vmem>>, vector<256x64xf32>
    tpu.vector_store %arg6[%c0_58, %c0_59], %48 {strides = array<i32>} : memref<256x64xf32, #tpu.memory_space<vmem>>, vector<256x64xf32>,
    %c0_60 = arith.constant 0 : index
    %c2_61 = arith.constant 2 : index
    %c0_62 = arith.constant 0 : index
    %c0_63 = arith.constant 0 : index
    %50 = vector.load %arg2[%c0_60, %c2_61, %c0_62, %c0_63] : memref<1x18x18x64xbf16, #tpu.memory_space<vmem>>, vector<1x16x16x64xbf16>
    %51 = vector.shape_cast %50 : vector<1x16x16x64xbf16> to vector<16x16x64xbf16>
    %52 = vector.shape_cast %51 : vector<16x16x64xbf16> to vector<256x64xbf16>
    %c0_64 = arith.constant 0 : index
    %c0_65 = arith.constant 0 : index
    %53 = vector.load %arg6[%c0_64, %c0_65] : memref<256x64xf32, #tpu.memory_space<vmem>>, vector<256x64xf32>
    %c384 = arith.constant 384 : index
    %c0_66 = arith.constant 0 : index
    %54 = vector.load %arg3[%c384, %c0_66] : memref<576x64xbf16, #tpu.memory_space<vmem>>, vector<64x64xbf16>
    %cst_67 = arith.constant dense<0.000000e+00> : vector<256x64xf32>
    %55 = tpu.matmul %52, %54, %cst_67 {dimension_numbers = #tpu.dot_dimension_numbers<[1], [0], [0], [1], [0, 0, 1, 1], [], []>} : vector<256x64xbf16>, vector<64x64xbf16>, vector<256x64xf32> -> vector<256x64xf32>
    %56 = arith.addf %53, %55 : vector<256x64xf32>
    %c0_68 = arith.constant 0 : index
    %c0_69 = arith.constant 0 : index
    %57 = vector.load %arg6[%c0_68, %c0_69] : memref<256x64xf32, #tpu.memory_space<vmem>>, vector<256x64xf32>
    tpu.vector_store %arg6[%c0_68, %c0_69], %56 {strides = array<i32>} : memref<256x64xf32, #tpu.memory_space<vmem>>, vector<256x64xf32>,
    %c0_70 = arith.constant 0 : index
    %c2_71 = arith.constant 2 : index
    %c1_72 = arith.constant 1 : index
    %c0_73 = arith.constant 0 : index
    %58 = vector.load %arg2[%c0_70, %c2_71, %c1_72, %c0_73] : memref<1x18x18x64xbf16, #tpu.memory_space<vmem>>, vector<1x16x16x64xbf16>
    %59 = vector.shape_cast %58 : vector<1x16x16x64xbf16> to vector<16x16x64xbf16>
    %60 = vector.shape_cast %59 : vector<16x16x64xbf16> to vector<256x64xbf16>
    %c0_74 = arith.constant 0 : index
    %c0_75 = arith.constant 0 : index
    %61 = vector.load %arg6[%c0_74, %c0_75] : memref<256x64xf32, #tpu.memory_space<vmem>>, vector<256x64xf32>
    %c448 = arith.constant 448 : index
    %c0_76 = arith.constant 0 : index
    %62 = vector.load %arg3[%c448, %c0_76] : memref<576x64xbf16, #tpu.memory_space<vmem>>, vector<64x64xbf16>
    %cst_77 = arith.constant dense<0.000000e+00> : vector<256x64xf32>
    %63 = tpu.matmul %60, %62, %cst_77 {dimension_numbers = #tpu.dot_dimension_numbers<[1], [0], [0], [1], [0, 0, 1, 1], [], []>} : vector<256x64xbf16>, vector<64x64xbf16>, vector<256x64xf32> -> vector<256x64xf32>
    %64 = arith.addf %61, %63 : vector<256x64xf32>
    %c0_78 = arith.constant 0 : index
    %c0_79 = arith.constant 0 : index
    %65 = vector.load %arg6[%c0_78, %c0_79] : memref<256x64xf32, #tpu.memory_space<vmem>>, vector<256x64xf32>
    tpu.vector_store %arg6[%c0_78, %c0_79], %64 {strides = array<i32>} : memref<256x64xf32, #tpu.memory_space<vmem>>, vector<256x64xf32>,
    %c0_80 = arith.constant 0 : index
    %c2_81 = arith.constant 2 : index
    %c2_82 = arith.constant 2 : index
    %c0_83 = arith.constant 0 : index
    %66 = vector.load %arg2[%c0_80, %c2_81, %c2_82, %c0_83] : memref<1x18x18x64xbf16, #tpu.memory_space<vmem>>, vector<1x16x16x64xbf16>
    %67 = vector.shape_cast %66 : vector<1x16x16x64xbf16> to vector<16x16x64xbf16>
    %68 = vector.shape_cast %67 : vector<16x16x64xbf16> to vector<256x64xbf16>
    %c0_84 = arith.constant 0 : index
    %c0_85 = arith.constant 0 : index
    %69 = vector.load %arg6[%c0_84, %c0_85] : memref<256x64xf32, #tpu.memory_space<vmem>>, vector<256x64xf32>
    %c512 = arith.constant 512 : index
    %c0_86 = arith.constant 0 : index
    %70 = vector.load %arg3[%c512, %c0_86] : memref<576x64xbf16, #tpu.memory_space<vmem>>, vector<64x64xbf16>
    %cst_87 = arith.constant dense<0.000000e+00> : vector<256x64xf32>
    %71 = tpu.matmul %68, %70, %cst_87 {dimension_numbers = #tpu.dot_dimension_numbers<[1], [0], [0], [1], [0, 0, 1, 1], [], []>} : vector<256x64xbf16>, vector<64x64xbf16>, vector<256x64xf32> -> vector<256x64xf32>
    %72 = arith.addf %69, %71 : vector<256x64xf32>
    %c0_88 = arith.constant 0 : index
    %c0_89 = arith.constant 0 : index
    %73 = vector.load %arg6[%c0_88, %c0_89] : memref<256x64xf32, #tpu.memory_space<vmem>>, vector<256x64xf32>
    tpu.vector_store %arg6[%c0_88, %c0_89], %72 {strides = array<i32>} : memref<256x64xf32, #tpu.memory_space<vmem>>, vector<256x64xf32>,
    %c0_90 = arith.constant 0 : index
    %c0_91 = arith.constant 0 : index
    %74 = vector.load %arg6[%c0_90, %c0_91] : memref<256x64xf32, #tpu.memory_space<vmem>>, vector<256x64xf32>
    %c0_92 = arith.constant 0 : index
    %c0_93 = arith.constant 0 : index
    %75 = vector.load %arg4[%c0_92, %c0_93] : memref<1x64xf32, #tpu.memory_space<vmem>>, vector<1x64xf32>
    %76 = vector.broadcast %75 : vector<1x64xf32> to vector<256x64xf32>
    %77 = arith.addf %74, %76 : vector<256x64xf32>
    %cst_94 = arith.constant 0.000000e+00 : f32
    %78 = vector.broadcast %cst_94 : f32 to vector<256x64xf32>
    %79 = arith.maximumf %77, %78 : vector<256x64xf32>
    %80 = arith.truncf %79 : vector<256x64xf32> to vector<256x64xbf16>
    %c0_95 = arith.constant 0 : index
    %c0_96 = arith.constant 0 : index
    %c0_97 = arith.constant 0 : index
    %81 = vector.load %arg5[%c0_95, %c0_96, %c0_97] : memref<1x256x64xbf16, #tpu.memory_space<vmem>>, vector<1x256x64xbf16>
    %82 = vector.shape_cast %81 : vector<1x256x64xbf16> to vector<256x64xbf16>
    %83 = vector.shape_cast %80 : vector<256x64xbf16> to vector<1x256x64xbf16>
    tpu.vector_store %arg5[%c0_95, %c0_96, %c0_97], %83 {strides = array<i32>} : memref<1x256x64xbf16, #tpu.memory_space<vmem>>, vector<1x256x64xbf16>,
    return
  }
  func.func @transform_0(%arg0: i32, %arg1: i32) -> (i32, i32, i32, i32) {
    %c0_i32 = arith.constant 0 : i32
    %c0_i32_0 = arith.constant 0 : i32
    %c0_i32_1 = arith.constant 0 : i32
    %c0_i32_2 = arith.constant 0 : i32
    return %arg0, %c0_i32, %c0_i32_0, %c0_i32_1 : i32, i32, i32, i32
  }
  func.func @transform_1(%arg0: i32, %arg1: i32) -> (i32, i32) {
    %c0_i32 = arith.constant 0 : i32
    %c0_i32_0 = arith.constant 0 : i32
    return %c0_i32, %arg1 : i32, i32
  }
  func.func @transform_2(%arg0: i32, %arg1: i32) -> (i32, i32) {
    %c0_i32 = arith.constant 0 : i32
    %c0_i32_0 = arith.constant 0 : i32
    return %c0_i32, %arg1 : i32, i32
  }
  func.func @transform_3(%arg0: i32, %arg1: i32) -> (i32, i32, i32) {
    %c0_i32 = arith.constant 0 : i32
    %c0_i32_0 = arith.constant 0 : i32
    return %arg0, %c0_i32, %arg1 : i32, i32, i32
  }
}

</mosaic_0001>

<llo_original>
// kernel: conv3x3.1
$region0: #{conv3x3.1}
  #allocation0 [shape = 'u32[]', space=smem, size = 0x4, offset = 0x4, fixed_abs, tag = 'smem constant byte address 0x4 - core index']
  #allocation1 [shape = 'u32[144,128]{1,0:T(1,128)}', space=vmem, size = 0x12000, scoped, tag = 'internal scratch']
  #allocation2 [shape = 'f32[256,64]{1,0:T(8,128)}', space=vmem, size = 0x20000, scoped, tag = 'scratch operand']
  %s0 = inlined_call_operand.vmem [shape: bf16[2,18,18,64], index: 0, kind: input, shape index: {}]
  %s1 = inlined_call_operand.vmem [shape: bf16[576,64], index: 1, kind: input, shape index: {}]
  %s2 = inlined_call_operand.vmem [shape: f32[1,64], index: 2, kind: input, shape index: {}]
  %s3 = inlined_call_operand.hbm [shape: bf16[2,256,64], index: 3, kind: output, shape index: {}]
  %s4 = sld [smem:[#allocation0]]
  $region45: #{conv3x3.1} parent=0
    _
  %s6 = ssub.s32 1, %s4
  %s7 = scalar_select 0, %s6, %s4
  $region1: #{conv3x3.1} parent=0
    #allocation3 [shape = 'u8[131072]{0}', space=vmem, size = 0x20000, scoped, tag = 'output window, operand 0']
    #allocation4 [shape = 's32[2]{0}', space=sflag, size = 0x8, scoped, tag = 'scoped memory for conv3x3.1']
    %8 = vsyncpa [#allocation4], 0
    %s9 = scalar_lea.sflag [#allocation4], 1
    %10 = vsyncpa %s9, 0
    loop: start=0, step=1, limit=4
    $region2: #{conv3x3.1} parent=1 // loop_pre_header
      _
    $region3: #{conv3x3.1} parent=1 // loop_header
      %s12 = sphi 0, %s16
      %p13 = scmp.ge.s32.totalorder %s12, 4
      %s19 = sphi 0, %s31
      %s20 = sphi 0, %s27
      %s21 = sphi 0, %s19
      %s22 = sphi 0, %s20
      %s23 = sphi 0, %s21
      %s24 = sphi 0, %s22
      %s34 = sphi 0, %s36
      %s37 = sphi 0, %s34
      %s38 = sphi 0, %s37
      %s54 = sphi 0, %s38
      %s60 = sphi 0, %s62
      %s63 = sphi 0, %s60
      %s64 = sphi 0, %s63
      %s80 = sphi 0, %s64
      %s86 = sphi 0, %s88
      %s89 = sphi 0, %s86
      %s90 = sphi 0, %s89
      %s106 = sphi 0, %s90
      %s114 = sphi 0, %s116
      %s117 = sphi 0, %s114
      %s118 = sphi 0, %s117
      %s134 = sphi 0, %s118
    $region4: #{conv3x3.1} parent=1 // loop_header_branch
      %15 = sbr.rel (%p13) target = $region8
    $region5: #{conv3x3.1} parent=1 // loop_body
      %s17 = ssub.s32 %s12, 1
      %s18 = ssub.s32 %s12, 2
      %s25 = sadd.s32 1, %s20
      %p26 = scmp.ge.s32.totalorder %s25, 1
      %s27 = scalar_select %p26, 0, %s25
      %s28 = sadd.s32 1, %s19
      %s29 = scalar_select %p26, %s28, %s19
      %p30 = scmp.ge.s32.totalorder %s29, 2
      %s31 = scalar_select %p30, 0, %s29
      %s32 = ssub.s32 %s19, %s31
      %p33 = scmp.eq.s32.totalorder %s32, 0
      %s35 = sadd.s32 %s34, 1
      %s36 = scalar_select %p33, %s34, %s35
      %p39 = pneg %p33
      %p40 = scmp.eq.s32.totalorder %s12, 1
      %p41 = por %p39, %p40
      %p42 = scmp.ne.s32.totalorder %s34, %s37
      %p43 = scmp.eq.s32.totalorder %s12, 0
      %p44 = por %p42, %p43
      %p45 = scmp.ne.s32.totalorder %s34, %s37
      %p46 = scmp.eq.s32.totalorder %s17, 1
      %p47 = por %p45, %p46
      %p48 = scmp.ne.s32.totalorder %s37, %s38
      %p49 = scmp.eq.s32.totalorder %s17, 0
      %p50 = por %p48, %p49
      %p51 = scmp.ne.s32.totalorder %s37, %s38
      %p52 = scmp.eq.s32.totalorder %s18, 1
      %p53 = por %p51, %p52
      %p55 = scmp.ne.s32.totalorder %s38, %s54
      %p56 = scmp.eq.s32.totalorder %s18, 0
      %p57 = por %p55, %p56
      %s58 = ssub.s32 %s20, %s27
      %p59 = scmp.eq.s32.totalorder %s58, 0
      %s61 = sadd.s32 %s60, 1
      %s62 = scalar_select %p59, %s60, %s61
      %p65 = pneg %p59
      %p66 = scmp.eq.s32.totalorder %s12, 1
      %p67 = por %p65, %p66
      %p68 = scmp.ne.s32.totalorder %s60, %s63
      %p69 = scmp.eq.s32.totalorder %s12, 0
      %p70 = por %p68, %p69
      %p71 = scmp.ne.s32.totalorder %s60, %s63
      %p72 = scmp.eq.s32.totalorder %s17, 1
      %p73 = por %p71, %p72
      %p74 = scmp.ne.s32.totalorder %s63, %s64
      %p75 = scmp.eq.s32.totalorder %s17, 0
      %p76 = por %p74, %p75
      %p77 = scmp.ne.s32.totalorder %s63, %s64
      %p78 = scmp.eq.s32.totalorder %s18, 1
      %p79 = por %p77, %p78
      %p81 = scmp.ne.s32.totalorder %s64, %s80
      %p82 = scmp.eq.s32.totalorder %s18, 0
      %p83 = por %p81, %p82
      %s84 = ssub.s32 %s20, %s27
      %p85 = scmp.eq.s32.totalorder %s84, 0
      %s87 = sadd.s32 %s86, 1
      %s88 = scalar_select %p85, %s86, %s87
      %p91 = pneg %p85
      %p92 = scmp.eq.s32.totalorder %s12, 1
      %p93 = por %p91, %p92
      %p94 = scmp.ne.s32.totalorder %s86, %s89
      %p95 = scmp.eq.s32.totalorder %s12, 0
      %p96 = por %p94, %p95
      %p97 = scmp.ne.s32.totalorder %s86, %s89
      %p98 = scmp.eq.s32.totalorder %s17, 1
      %p99 = por %p97, %p98
      %p100 = scmp.ne.s32.totalorder %s89, %s90
      %p101 = scmp.eq.s32.totalorder %s17, 0
      %p102 = por %p100, %p101
      %p103 = scmp.ne.s32.totalorder %s89, %s90
      %p104 = scmp.eq.s32.totalorder %s18, 1
      %p105 = por %p103, %p104
      %p107 = scmp.ne.s32.totalorder %s90, %s106
      %p108 = scmp.eq.s32.totalorder %s18, 0
      %p109 = por %p107, %p108
      %s110 = ssub.s32 %s19, %s31
      %s111 = ssub.s32 %s20, %s27
      %s112 = sor.u32 %s110, %s111
      %p113 = scmp.eq.s32.totalorder %s112, 0
      %s115 = sadd.s32 %s114, 1
      %s116 = scalar_select %p113, %s114, %s115
      %p119 = pneg %p113
      %p120 = scmp.eq.s32.totalorder %s12, 1
      %p121 = por %p119, %p120
      %p122 = scmp.ne.s32.totalorder %s114, %s117
      %p123 = scmp.eq.s32.totalorder %s12, 0
      %p124 = por %p122, %p123
      %p125 = scmp.ne.s32.totalorder %s114, %s117
      %p126 = scmp.eq.s32.totalorder %s17, 1
      %p127 = por %p125, %p126
      %p128 = scmp.ne.s32.totalorder %s117, %s118
      %p129 = scmp.eq.s32.totalorder %s17, 0
      %p130 = por %p128, %p129
      %p131 = scmp.ne.s32.totalorder %s117, %s118
      %p132 = scmp.eq.s32.totalorder %s18, 1
      %p133 = por %p131, %p132
      %p135 = scmp.ne.s32.totalorder %s118, %s134
      %p136 = scmp.eq.s32.totalorder %s18, 0
      %p137 = por %p135, %p136
      %p138 = scmp.le.s32.totalorder 1, %s12
      %p139 = scmp.lt.s32.totalorder %s12, 3
      %p140 = pnand %p138, %p139
      %p141 = pneg %p140
      // Predicated region
      $region9: #{conv3x3.1} parent=5 // pred_check
        _
      $region10: #{conv3x3.1} parent=5 // pred_check_branch
        %143 = sbr.rel (%p140) target = $region12
      $region11: #{conv3x3.1} parent=5 // pred_region
        %s144 = ssub.s32 %s12, 1
        // Predicated region
        $region13: #{conv3x3.1} parent=11 // pred_check
          %p145 = pneg %p76
        $region14: #{conv3x3.1} parent=11 // pred_check_branch
          %147 = sbr.rel (%p145) target = $region16
        $region15: #{conv3x3.1} parent=11 // pred_region
          %p148 = scmp.lt.s32.totalorder %s22, 0
          %s149 = scalar_select %p148, %s22, 0
          %s150 = smul.addr %s149, 4
          %s151 = scalar_lea.vmem %s1, %s150
        $region16: #{conv3x3.1} parent=11 // pred_fallthru
          _
        // Predicated region
        $region17: #{conv3x3.1} parent=11 // pred_check
          %p152 = pneg %p102
        $region18: #{conv3x3.1} parent=11 // pred_check_branch
          %154 = sbr.rel (%p152) target = $region20
        $region19: #{conv3x3.1} parent=11 // pred_region
          %p155 = scmp.lt.s32.totalorder %s22, 0
          %s156 = scalar_select %p155, %s22, 0
          %s157 = scalar_lea.vmem %s2, %s156
        $region20: #{conv3x3.1} parent=11 // pred_fallthru
          _
      $region12: #{conv3x3.1} parent=5 // pred_fallthru
        _
      %p158 = scmp.lt.s32.totalorder %s12, 2
      // Predicated region
      $region21: #{conv3x3.1} parent=5 // pred_check
        %p159 = pneg %p158
      $region22: #{conv3x3.1} parent=5 // pred_check_branch
        %161 = sbr.rel (%p159) target = $region24
      $region23: #{conv3x3.1} parent=5 // pred_region
        // Predicated region
        $region25: #{conv3x3.1} parent=23 // pred_check
          %p162 = pneg %p44
        $region26: #{conv3x3.1} parent=23 // pred_check_branch
          %164 = sbr.rel (%p162) target = $region28
        $region27: #{conv3x3.1} parent=23 // pred_region
          %p165 = scmp.lt.s32.totalorder %s19, 1
          %s166 = scalar_select %p165, %s19, 1
          %s167 = smul.addr %s166, 54
          %s168 = smul.addr %s167, 4
          %s169 = scalar_lea.vmem %s0, %s168
        $region28: #{conv3x3.1} parent=23 // pred_fallthru
          _
      $region24: #{conv3x3.1} parent=5 // pred_fallthru
        _
      %p170 = scmp.le.s32.totalorder 1, %s12
      %p171 = scmp.lt.s32.totalorder %s12, 3
      %p172 = pnand %p170, %p171
      %p173 = pneg %p172
      // Predicated region
      $region29: #{conv3x3.1} parent=5 // pred_check
        _
      $region30: #{conv3x3.1} parent=5 // pred_check_branch
        %175 = sbr.rel (%p172) target = $region32
      $region31: #{conv3x3.1} parent=5 // pred_region
        %s176 = ssub.s32 %s12, 1
        %p177 = scmp.lt.s32.totalorder %s21, 1
        %s178 = scalar_select %p177, %s21, 1
        %s179 = smul.addr %s178, 54
        %s180 = smul.addr %s179, 4
        %s181 = scalar_lea.vmem %s0, %s180
        %p182 = pneg %p50
        %p183 = pneg %p47
        %p184 = scmp.lt.s32.totalorder %s22, 0
        %s185 = scalar_select %p184, %s22, 0
        %s186 = smul.addr %s185, 4
        %s187 = scalar_lea.vmem %s1, %s186
        %p188 = pneg %p76
        %p189 = pneg %p73
        %p190 = scmp.lt.s32.totalorder %s22, 0
        %s191 = scalar_select %p190, %s22, 0
        %s192 = scalar_lea.vmem %s2, %s191
        %p193 = pneg %p102
        %p194 = pneg %p99
        %p195 = pneg %p130
        %p196 = pneg %p127
        %s197 = sand.u32 %s117, 1
        %s198 = scalar_lea.sflag [#allocation4], %s197
        %s199 = sand.u32 %s117, 1
        %s200 = smul.addr %s199, 128
        %s201 = scalar_lea.vmem [#allocation3], %s200
        %p202 = scmp.lt.s32.totalorder %s21, 1
        %s203 = scalar_select %p202, %s21, 1
        %s204 = smul.addr %s203, 54
        %s205 = smul.addr %s204, 4
        %s206 = scalar_lea.vmem %s0, %s205
        %p207 = scmp.lt.s32.totalorder %s22, 0
        %s208 = scalar_select %p207, %s22, 0
        %s209 = smul.addr %s208, 4
        %s210 = scalar_lea.vmem %s1, %s209
        %p211 = scmp.lt.s32.totalorder %s22, 0
        %s212 = scalar_select %p211, %s22, 0
        %s213 = scalar_lea.vmem %s2, %s212
        %vm215 = vcmask 523264
        %216 = vst.msk [vmem:[#allocation2] sm:$0xff] %vm215, 0.0
        %217 = vst.msk [vmem:[#allocation2 + $0x8] sm:$0xff] %vm215, 0.0
        %218 = vst.msk [vmem:[#allocation2 + $0x10] sm:$0xff] %vm215, 0.0
        %219 = vst.msk [vmem:[#allocation2 + $0x18] sm:$0xff] %vm215, 0.0
        %220 = vst.msk [vmem:[#allocation2 + $0x20] sm:$0xff] %vm215, 0.0
        %221 = vst.msk [vmem:[#allocation2 + $0x28] sm:$0xff] %vm215, 0.0
        %222 = vst.msk [vmem:[#allocation2 + $0x30] sm:$0xff] %vm215, 0.0
        %223 = vst.msk [vmem:[#allocation2 + $0x38] sm:$0xff] %vm215, 0.0
        %224 = vst.msk [vmem:[#allocation2 + $0x40] sm:$0xff] %vm215, 0.0
        %225 = vst.msk [vmem:[#allocation2 + $0x48] sm:$0xff] %vm215, 0.0
        %226 = vst.msk [vmem:[#allocation2 + $0x50] sm:$0xff] %vm215, 0.0
        %227 = vst.msk [vmem:[#allocation2 + $0x58] sm:$0xff] %vm215, 0.0
        %228 = vst.msk [vmem:[#allocation2 + $0x60] sm:$0xff] %vm215, 0.0
        %229 = vst.msk [vmem:[#allocation2 + $0x68] sm:$0xff] %vm215, 0.0
        %230 = vst.msk [vmem:[#allocation2 + $0x70] sm:$0xff] %vm215, 0.0
        %231 = vst.msk [vmem:[#allocation2 + $0x78] sm:$0xff] %vm215, 0.0
        %232 = vst.msk [vmem:[#allocation2 + $0x80] sm:$0xff] %vm215, 0.0
        %233 = vst.msk [vmem:[#allocation2 + $0x88] sm:$0xff] %vm215, 0.0
        %234 = vst.msk [vmem:[#allocation2 + $0x90] sm:$0xff] %vm215, 0.0
        %235 = vst.msk [vmem:[#allocation2 + $0x98] sm:$0xff] %vm215, 0.0
        %236 = vst.msk [vmem:[#allocation2 + $0xa0] sm:$0xff] %vm215, 0.0
        %237 = vst.msk [vmem:[#allocation2 + $0xa8] sm:$0xff] %vm215, 0.0
        %238 = vst.msk [vmem:[#allocation2 + $0xb0] sm:$0xff] %vm215, 0.0
        %239 = vst.msk [vmem:[#allocation2 + $0xb8] sm:$0xff] %vm215, 0.0
        %240 = vst.msk [vmem:[#allocation2 + $0xc0] sm:$0xff] %vm215, 0.0
        %241 = vst.msk [vmem:[#allocation2 + $0xc8] sm:$0xff] %vm215, 0.0
        %242 = vst.msk [vmem:[#allocation2 + $0xd0] sm:$0xff] %vm215, 0.0
        %243 = vst.msk [vmem:[#allocation2 + $0xd8] sm:$0xff] %vm215, 0.0
        %244 = vst.msk [vmem:[#allocation2 + $0xe0] sm:$0xff] %vm215, 0.0
        %245 = vst.msk [vmem:[#allocation2 + $0xe8] sm:$0xff] %vm215, 0.0
        %246 = vst.msk [vmem:[#allocation2 + $0xf0] sm:$0xff] %vm215, 0.0
        %247 = vst.msk [vmem:[#allocation2 + $0xf8] sm:$0xff] %vm215, 0.0
        %v248 = vld [vmem:[%s206] sm:$0xf]
        %v249 = vld [vmem:[%s206 + $0x4] sm:$0xf]
        %v250 = vld [vmem:[%s206 + $0xc] sm:$0xf]
        %v251 = vld [vmem:[%s206 + $0x10] sm:$0xf]
        %v252 = vld [vmem:[%s206 + $0x18] sm:$0xf]
        %v253 = vld [vmem:[%s206 + $0x1c] sm:$0xf]
        %v254 = vld [vmem:[%s206 + $0x24] sm:$0xf]
        %v255 = vld [vmem:[%s206 + $0x28] sm:$0xf]
        %v256 = vld [vmem:[%s206 + $0x30] sm:$0xf]
        %v257 = vld [vmem:[%s206 + $0x34] sm:$0xf]
        %v258 = vld [vmem:[%s206 + $0x3c] sm:$0xf]
        %v259 = vld [vmem:[%s206 + $0x40] sm:$0xf]
        %v260 = vld [vmem:[%s206 + $0x48] sm:$0xf]
        %v261 = vld [vmem:[%s206 + $0x4c] sm:$0xf]
        %v262 = vld [vmem:[%s206 + $0x54] sm:$0xf]
        %v263 = vld [vmem:[%s206 + $0x58] sm:$0xf]
        %v264 = vld [vmem:[%s206 + $0x60] sm:$0xf]
        %v265 = vld [vmem:[%s206 + $0x64] sm:$0xf]
        %v266 = vld [vmem:[%s206 + $0x6c] sm:$0xf]
        %v267 = vld [vmem:[%s206 + $0x70] sm:$0xf]
        %v268 = vld [vmem:[%s206 + $0x78] sm:$0xf]
        %v269 = vld [vmem:[%s206 + $0x7c] sm:$0xf]
        %v270 = vld [vmem:[%s206 + $0x84] sm:$0xf]
        %v271 = vld [vmem:[%s206 + $0x88] sm:$0xf]
        %v272 = vld [vmem:[%s206 + $0x90] sm:$0xf]
        %v273 = vld [vmem:[%s206 + $0x94] sm:$0xf]
        %v274 = vld [vmem:[%s206 + $0x9c] sm:$0xf]
        %v275 = vld [vmem:[%s206 + $0xa0] sm:$0xf]
        %v276 = vld [vmem:[%s206 + $0xa8] sm:$0xf]
        %v277 = vld [vmem:[%s206 + $0xac] sm:$0xf]
        %v278 = vld [vmem:[%s206 + $0xb4] sm:$0xf]
        %v279 = vld [vmem:[%s206 + $0xb8] sm:$0xf]
        %v280 = vld [vmem:[#allocation2] sm:$0xff]
        %v281 = vld [vmem:[#allocation2 + $0x8] sm:$0xff]
        %v282 = vld [vmem:[#allocation2 + $0x10] sm:$0xff]
        %v283 = vld [vmem:[#allocation2 + $0x18] sm:$0xff]
        %v284 = vld [vmem:[#allocation2 + $0x20] sm:$0xff]
        %v285 = vld [vmem:[#allocation2 + $0x28] sm:$0xff]
        %v286 = vld [vmem:[#allocation2 + $0x30] sm:$0xff]
        %v287 = vld [vmem:[#allocation2 + $0x38] sm:$0xff]
        %v288 = vld [vmem:[#allocation2 + $0x40] sm:$0xff]
        %v289 = vld [vmem:[#allocation2 + $0x48] sm:$0xff]
        %v290 = vld [vmem:[#allocation2 + $0x50] sm:$0xff]
        %v291 = vld [vmem:[#allocation2 + $0x58] sm:$0xff]
        %v292 = vld [vmem:[#allocation2 + $0x60] sm:$0xff]
        %v293 = vld [vmem:[#allocation2 + $0x68] sm:$0xff]
        %v294 = vld [vmem:[#allocation2 + $0x70] sm:$0xff]
        %v295 = vld [vmem:[#allocation2 + $0x78] sm:$0xff]
        %v296 = vld [vmem:[#allocation2 + $0x80] sm:$0xff]
        %v297 = vld [vmem:[#allocation2 + $0x88] sm:$0xff]
        %v298 = vld [vmem:[#allocation2 + $0x90] sm:$0xff]
        %v299 = vld [vmem:[#allocation2 + $0x98] sm:$0xff]
        %v300 = vld [vmem:[#allocation2 + $0xa0] sm:$0xff]
        %v301 = vld [vmem:[#allocation2 + $0xa8] sm:$0xff]
        %v302 = vld [vmem:[#allocation2 + $0xb0] sm:$0xff]
        %v303 = vld [vmem:[#allocation2 + $0xb8] sm:$0xff]
        %v304 = vld [vmem:[#allocation2 + $0xc0] sm:$0xff]
        %v305 = vld [vmem:[#allocation2 + $0xc8] sm:$0xff]
        %v306 = vld [vmem:[#allocation2 + $0xd0] sm:$0xff]
        %v307 = vld [vmem:[#allocation2 + $0xd8] sm:$0xff]
        %v308 = vld [vmem:[#allocation2 + $0xe0] sm:$0xff]
        %v309 = vld [vmem:[#allocation2 + $0xe8] sm:$0xff]
        %v310 = vld [vmem:[#allocation2 + $0xf0] sm:$0xff]
        %v311 = vld [vmem:[#allocation2 + $0xf8] sm:$0xff]
        %v312 = vld [vmem:[%s210] sm:$0xf]
        %v313 = vld [vmem:[%s210 + $0x4] sm:$0xf]
        %v314 = vld [vmem:[%s210 + $0x8] sm:$0xf]
        %v315 = vld [vmem:[%s210 + $0xc] sm:$0xf]
        %v316 = vld [vmem:[%s210 + $0x10] sm:$0xf]
        %v317 = vld [vmem:[%s210 + $0x14] sm:$0xf]
        %v318 = vld [vmem:[%s210 + $0x18] sm:$0xf]
        %v319 = vld [vmem:[%s210 + $0x1c] sm:$0xf]
        %v352 = vunpack.c.l.b16 %v248
        %v353 = vunpack.c.l.b16 %v249
        %v354 = vunpack.c.l.b16 %v250
        %v355 = vunpack.c.l.b16 %v251
        %v356 = vunpack.c.l.b16 %v252
        %v357 = vunpack.c.l.b16 %v253
        %v358 = vunpack.c.l.b16 %v254
        %v359 = vunpack.c.l.b16 %v255
        %v360 = vunpack.c.l.b16 %v256
        %v361 = vunpack.c.l.b16 %v257
        %v362 = vunpack.c.l.b16 %v258
        %v363 = vunpack.c.l.b16 %v259
        %v364 = vunpack.c.l.b16 %v260
        %v365 = vunpack.c.l.b16 %v261
        %v366 = vunpack.c.l.b16 %v262
        %v367 = vunpack.c.l.b16 %v263
        %v368 = vunpack.c.l.b16 %v264
        %v369 = vunpack.c.l.b16 %v265
        %v370 = vunpack.c.l.b16 %v266
        %v371 = vunpack.c.l.b16 %v267
        %v372 = vunpack.c.l.b16 %v268
        %v373 = vunpack.c.l.b16 %v269
        %v374 = vunpack.c.l.b16 %v270
        %v375 = vunpack.c.l.b16 %v271
        %v376 = vunpack.c.l.b16 %v272
        %v377 = vunpack.c.l.b16 %v273
        %v378 = vunpack.c.l.b16 %v274
        %v379 = vunpack.c.l.b16 %v275
        %v380 = vunpack.c.l.b16 %v276
        %v381 = vunpack.c.l.b16 %v277
        %v382 = vunpack.c.l.b16 %v278
        %v383 = vunpack.c.l.b16 %v279
        %v384 = vpack.c.b16 %v353, %v352
        %v385 = vpack.c.b16 %v355, %v354
        %v386 = vpack.c.b16 %v357, %v356
        %v387 = vpack.c.b16 %v359, %v358
        %v388 = vpack.c.b16 %v361, %v360
        %v389 = vpack.c.b16 %v363, %v362
        %v390 = vpack.c.b16 %v365, %v364
        %v391 = vpack.c.b16 %v367, %v366
        %v392 = vpack.c.b16 %v369, %v368
        %v393 = vpack.c.b16 %v371, %v370
        %v394 = vpack.c.b16 %v373, %v372
        %v395 = vpack.c.b16 %v375, %v374
        %v396 = vpack.c.b16 %v377, %v376
        %v397 = vpack.c.b16 %v379, %v378
        %v398 = vpack.c.b16 %v381, %v380
        %v399 = vpack.c.b16 %v383, %v382
        %v408 = vunpack.c.l.b16 %v312
        %v409 = vunpack.c.l.b16 %v313
        %v410 = vunpack.c.l.b16 %v314
        %v411 = vunpack.c.l.b16 %v315
        %v412 = vunpack.c.l.b16 %v316
        %v413 = vunpack.c.l.b16 %v317
        %v414 = vunpack.c.l.b16 %v318
        %v415 = vunpack.c.l.b16 %v319
        %v416 = vpack.c.b16 %v409, %v408
        %v417 = vpack.c.b16 %v411, %v410
        %v418 = vpack.c.b16 %v413, %v412
        %v419 = vpack.c.b16 %v415, %v414
        %v425 = vsel %vm215, %v384, 0
        %v428 = vsel %vm215, %v385, 0
        %v431 = vsel %vm215, %v386, 0
        %v434 = vsel %vm215, %v387, 0
        %v437 = vsel %vm215, %v388, 0
        %v440 = vsel %vm215, %v389, 0
        %v443 = vsel %vm215, %v390, 0
        %v446 = vsel %vm215, %v391, 0
        %v449 = vsel %vm215, %v392, 0
        %v452 = vsel %vm215, %v393, 0
        %v455 = vsel %vm215, %v394, 0
        %v458 = vsel %vm215, %v395, 0
        %v461 = vsel %vm215, %v396, 0
        %v464 = vsel %vm215, %v397, 0
        %v467 = vsel %vm215, %v398, 0
        %v470 = vsel %vm215, %v399, 0
        %472 = vmatprep.subr.bf16.mxu0 0
        %473 = vmatpush1.bf16.msra.mxu0 %v416
        %474 = vmatprep.subr.bf16.mxu0 0
        %475 = vmatpush1.bf16.msra.mxu0 %v417
        %476 = vmatprep.subr.bf16.mxu0 0
        %477 = vmatpush1.bf16.msra.mxu0 %v418
        %478 = vmatprep.subr.bf16.mxu0 0
        %479 = vmatpush1.bf16.msra.mxu0 %v419
        %480 = vmatprep.subr.bf16.mxu0 0
        %481 = vmatpush1.bf16.msra.mxu0 0
        %482 = vmatprep.subr.bf16.mxu0 0
        %483 = vmatpush1.bf16.msra.mxu0 0
        %484 = vmatprep.subr.bf16.mxu0 0
        %485 = vmatpush1.bf16.msra.mxu0 0
        %486 = vmatprep.subr.bf16.mxu0 0
        %487 = vmatpush1.bf16.msra.mxu0 0
        %488 = vmatprep.subr.bf16.mxu0 0
        %489 = vmatpush1.bf16.msra.mxu0 0
        %490 = vmatprep.subr.bf16.mxu0 0
        %491 = vmatpush1.bf16.msra.mxu0 0
        %492 = vmatprep.subr.bf16.mxu0 0
        %493 = vmatpush1.bf16.msra.mxu0 0
        %494 = vmatprep.subr.bf16.mxu0 0
        %495 = vmatpush1.bf16.msra.mxu0 0
        %496 = vmatprep.subr.bf16.mxu0 0
        %497 = vmatpush1.bf16.msra.mxu0 0
        %498 = vmatprep.subr.bf16.mxu0 0
        %499 = vmatpush1.bf16.msra.mxu0 0
        %500 = vmatprep.subr.bf16.mxu0 0
        %501 = vmatpush1.bf16.msra.mxu0 0
        %502 = vmatprep.subr.bf16.mxu0 0
        %503 = vmatpush1.bf16.msra.mxu0 0
        %504 = vmatprep.mubr.bf16.mxu0 0
        %505 = vmatmul.mubr.bf16.gmra.mrb[0].mxu0 %v425
        %v506 = vpop.f32.mrb[0].mxu0
        %v507 = vadd.f32 0.0, %v506
        %v508 = vpop.f32.mrb[0].mxu0
        %v509 = vpop.f32.mrb[0].mxu0
        %v510 = vadd.f32 0.0, %v509
        %v511 = vpop.f32.mrb[0].mxu0
        %512 = vmatprep.mubr.bf16.mxu0 0
        %513 = vmatmul.mubr.bf16.gmra.mrb[0].mxu0 %v428
        %v514 = vpop.f32.mrb[0].mxu0
        %v515 = vadd.f32 0.0, %v514
        %v516 = vpop.f32.mrb[0].mxu0
        %v517 = vpop.f32.mrb[0].mxu0
        %v518 = vadd.f32 0.0, %v517
        %v519 = vpop.f32.mrb[0].mxu0
        %520 = vmatprep.mubr.bf16.mxu0 0
        %521 = vmatmul.mubr.bf16.gmra.mrb[0].mxu0 %v431
        %v522 = vpop.f32.mrb[0].mxu0
        %v523 = vadd.f32 0.0, %v522
        %v524 = vpop.f32.mrb[0].mxu0
        %v525 = vpop.f32.mrb[0].mxu0
        %v526 = vadd.f32 0.0, %v525
        %v527 = vpop.f32.mrb[0].mxu0
        %528 = vmatprep.mubr.bf16.mxu0 0
        %529 = vmatmul.mubr.bf16.gmra.mrb[0].mxu0 %v434
        %v530 = vpop.f32.mrb[0].mxu0
        %v531 = vadd.f32 0.0, %v530
        %v532 = vpop.f32.mrb[0].mxu0
        %v533 = vpop.f32.mrb[0].mxu0
        %v534 = vadd.f32 0.0, %v533
        %v535 = vpop.f32.mrb[0].mxu0
        %536 = vmatprep.mubr.bf16.mxu0 0
        %537 = vmatmul.mubr.bf16.gmra.mrb[0].mxu0 %v437
        %v538 = vpop.f32.mrb[0].mxu0
        %v539 = vadd.f32 0.0, %v538
        %v540 = vpop.f32.mrb[0].mxu0
        %v541 = vpop.f32.mrb[0].mxu0
        %v542 = vadd.f32 0.0, %v541
        %v543 = vpop.f32.mrb[0].mxu0
        %544 = vmatprep.mubr.bf16.mxu0 0
        %545 = vmatmul.mubr.bf16.gmra.mrb[0].mxu0 %v440
        %v546 = vpop.f32.mrb[0].mxu0
        %v547 = vadd.f32 0.0, %v546
        %v548 = vpop.f32.mrb[0].mxu0
        %v549 = vpop.f32.mrb[0].mxu0
        %v550 = vadd.f32 0.0, %v549
        %v551 = vpop.f32.mrb[0].mxu0
        %552 = vmatprep.mubr.bf16.mxu0 0
        %553 = vmatmul.mubr.bf16.gmra.mrb[0].mxu0 %v443
        %v554 = vpop.f32.mrb[0].mxu0
        %v555 = vadd.f32 0.0, %v554
        %v556 = vpop.f32.mrb[0].mxu0
        %v557 = vpop.f32.mrb[0].mxu0
        %v558 = vadd.f32 0.0, %v557
        %v559 = vpop.f32.mrb[0].mxu0
        %560 = vmatprep.mubr.bf16.mxu0 0
        %561 = vmatmul.mubr.bf16.gmra.mrb[0].mxu0 %v446
        %v562 = vpop.f32.mrb[0].mxu0
        %v563 = vadd.f32 0.0, %v562
        %v564 = vpop.f32.mrb[0].mxu0
        %v565 = vpop.f32.mrb[0].mxu0
        %v566 = vadd.f32 0.0, %v565
        %v567 = vpop.f32.mrb[0].mxu0
        %568 = vmatprep.mubr.bf16.mxu0 0
        %569 = vmatmul.mubr.bf16.gmra.mrb[0].mxu0 %v449
        %v570 = vpop.f32.mrb[0].mxu0
        %v571 = vadd.f32 0.0, %v570
        %v572 = vpop.f32.mrb[0].mxu0
        %v573 = vpop.f32.mrb[0].mxu0
        %v574 = vadd.f32 0.0, %v573
        %v575 = vpop.f32.mrb[0].mxu0
        %576 = vmatprep.mubr.bf16.mxu0 0
        %577 = vmatmul.mubr.bf16.gmra.mrb[0].mxu0 %v452
        %v578 = vpop.f32.mrb[0].mxu0
        %v579 = vadd.f32 0.0, %v578
        %v580 = vpop.f32.mrb[0].mxu0
        %v581 = vpop.f32.mrb[0].mxu0
        %v582 = vadd.f32 0.0, %v581
        %v583 = vpop.f32.mrb[0].mxu0
        %584 = vmatprep.mubr.bf16.mxu0 0
        %585 = vmatmul.mubr.bf16.gmra.mrb[0].mxu0 %v455
        %v586 = vpop.f32.mrb[0].mxu0
        %v587 = vadd.f32 0.0, %v586
        %v588 = vpop.f32.mrb[0].mxu0
        %v589 = vpop.f32.mrb[0].mxu0
        %v590 = vadd.f32 0.0, %v589
        %v591 = vpop.f32.mrb[0].mxu0
        %592 = vmatprep.mubr.bf16.mxu0 0
        %593 = vmatmul.mubr.bf16.gmra.mrb[0].mxu0 %v458
        %v594 = vpop.f32.mrb[0].mxu0
        %v595 = vadd.f32 0.0, %v594
        %v596 = vpop.f32.mrb[0].mxu0
        %v597 = vpop.f32.mrb[0].mxu0
        %v598 = vadd.f32 0.0, %v597
        %v599 = vpop.f32.mrb[0].mxu0
        %600 = vmatprep.mubr.bf16.mxu0 0
        %601 = vmatmul.mubr.bf16.gmra.mrb[0].mxu0 %v461
        %v602 = vpop.f32.mrb[0].mxu0
        %v603 = vadd.f32 0.0, %v602
        %v604 = vpop.f32.mrb[0].mxu0
        %v605 = vpop.f32.mrb[0].mxu0
        %v606 = vadd.f32 0.0, %v605
        %v607 = vpop.f32.mrb[0].mxu0
        %608 = vmatprep.mubr.bf16.mxu0 0
        %609 = vmatmul.mubr.bf16.gmra.mrb[0].mxu0 %v464
        %v610 = vpop.f32.mrb[0].mxu0
        %v611 = vadd.f32 0.0, %v610
        %v612 = vpop.f32.mrb[0].mxu0
        %v613 = vpop.f32.mrb[0].mxu0
        %v614 = vadd.f32 0.0, %v613
        %v615 = vpop.f32.mrb[0].mxu0
        %616 = vmatprep.mubr.bf16.mxu0 0
        %617 = vmatmul.mubr.bf16.gmra.mrb[0].mxu0 %v467
        %v618 = vpop.f32.mrb[0].mxu0
        %v619 = vadd.f32 0.0, %v618
        %v620 = vpop.f32.mrb[0].mxu0
        %v621 = vpop.f32.mrb[0].mxu0
        %v622 = vadd.f32 0.0, %v621
        %v623 = vpop.f32.mrb[0].mxu0
        %624 = vmatprep.mubr.bf16.mxu0 0
        %625 = vmatmul.mubr.bf16.gmra.mrb[0].mxu0 %v470
        %v626 = vpop.f32.mrb[0].mxu0
        %v627 = vadd.f32 0.0, %v626
        %v628 = vpop.f32.mrb[0].mxu0
        %v629 = vpop.f32.mrb[0].mxu0
        %v630 = vadd.f32 0.0, %v629
        %v631 = vpop.f32.mrb[0].mxu0
        %632 = vdwg.mxu0
        %v633 = vadd.f32 %v280, %v507
        %v634 = vadd.f32 %v281, %v510
        %v635 = vadd.f32 %v282, %v515
        %v636 = vadd.f32 %v283, %v518
        %v637 = vadd.f32 %v284, %v523
        %v638 = vadd.f32 %v285, %v526
        %v639 = vadd.f32 %v286, %v531
        %v640 = vadd.f32 %v287, %v534
        %v641 = vadd.f32 %v288, %v539
        %v642 = vadd.f32 %v289, %v542
        %v643 = vadd.f32 %v290, %v547
        %v644 = vadd.f32 %v291, %v550
        %v645 = vadd.f32 %v292, %v555
        %v646 = vadd.f32 %v293, %v558
        %v647 = vadd.f32 %v294, %v563
        %v648 = vadd.f32 %v295, %v566
        %v649 = vadd.f32 %v296, %v571
        %v650 = vadd.f32 %v297, %v574
        %v651 = vadd.f32 %v298, %v579
        %v652 = vadd.f32 %v299, %v582
        %v653 = vadd.f32 %v300, %v587
        %v654 = vadd.f32 %v301, %v590
        %v655 = vadd.f32 %v302, %v595
        %v656 = vadd.f32 %v303, %v598
        %v657 = vadd.f32 %v304, %v603
        %v658 = vadd.f32 %v305, %v606
        %v659 = vadd.f32 %v306, %v611
        %v660 = vadd.f32 %v307, %v614
        %v661 = vadd.f32 %v308, %v619
        %v662 = vadd.f32 %v309, %v622
        %v663 = vadd.f32 %v310, %v627
        %v664 = vadd.f32 %v311, %v630
        %665 = vst.msk [vmem:[#allocation2] sm:$0xff] %vm215, %v633
        %666 = vst.msk [vmem:[#allocation2 + $0x8] sm:$0xff] %vm215, %v634
        %667 = vst.msk [vmem:[#allocation2 + $0x10] sm:$0xff] %vm215, %v635
        %668 = vst.msk [vmem:[#allocation2 + $0x18] sm:$0xff] %vm215, %v636
        %669 = vst.msk [vmem:[#allocation2 + $0x20] sm:$0xff] %vm215, %v637
        %670 = vst.msk [vmem:[#allocation2 + $0x28] sm:$0xff] %vm215, %v638
        %671 = vst.msk [vmem:[#allocation2 + $0x30] sm:$0xff] %vm215, %v639
        %672 = vst.msk [vmem:[#allocation2 + $0x38] sm:$0xff] %vm215, %v640
        %673 = vst.msk [vmem:[#allocation2 + $0x40] sm:$0xff] %vm215, %v641
        %674 = vst.msk [vmem:[#allocation2 + $0x48] sm:$0xff] %vm215, %v642
        %675 = vst.msk [vmem:[#allocation2 + $0x50] sm:$0xff] %vm215, %v643
        %676 = vst.msk [vmem:[#allocation2 + $0x58] sm:$0xff] %vm215, %v644
        %677 = vst.msk [vmem:[#allocation2 + $0x60] sm:$0xff] %vm215, %v645
        %678 = vst.msk [vmem:[#allocation2 + $0x68] sm:$0xff] %vm215, %v646
        %679 = vst.msk [vmem:[#allocation2 + $0x70] sm:$0xff] %vm215, %v647
        %680 = vst.msk [vmem:[#allocation2 + $0x78] sm:$0xff] %vm215, %v648
        %681 = vst.msk [vmem:[#allocation2 + $0x80] sm:$0xff] %vm215, %v649
        %682 = vst.msk [vmem:[#allocation2 + $0x88] sm:$0xff] %vm215, %v650
        %683 = vst.msk [vmem:[#allocation2 + $0x90] sm:$0xff] %vm215, %v651
        %684 = vst.msk [vmem:[#allocation2 + $0x98] sm:$0xff] %vm215, %v652
        %685 = vst.msk [vmem:[#allocation2 + $0xa0] sm:$0xff] %vm215, %v653
        %686 = vst.msk [vmem:[#allocation2 + $0xa8] sm:$0xff] %vm215, %v654
        %687 = vst.msk [vmem:[#allocation2 + $0xb0] sm:$0xff] %vm215, %v655
        %688 = vst.msk [vmem:[#allocation2 + $0xb8] sm:$0xff] %vm215, %v656
        %689 = vst.msk [vmem:[#allocation2 + $0xc0] sm:$0xff] %vm215, %v657
        %690 = vst.msk [vmem:[#allocation2 + $0xc8] sm:$0xff] %vm215, %v658
        %691 = vst.msk [vmem:[#allocation2 + $0xd0] sm:$0xff] %vm215, %v659
        %692 = vst.msk [vmem:[#allocation2 + $0xd8] sm:$0xff] %vm215, %v660
        %693 = vst.msk [vmem:[#allocation2 + $0xe0] sm:$0xff] %vm215, %v661
        %694 = vst.msk [vmem:[#allocation2 + $0xe8] sm:$0xff] %vm215, %v662
        %695 = vst.msk [vmem:[#allocation2 + $0xf0] sm:$0xff] %vm215, %v663
        %696 = vst.msk [vmem:[#allocation2 + $0xf8] sm:$0xff] %vm215, %v664
        %v697 = vld [vmem:[%s206] sm:$0xf]
        %v698 = vld [vmem:[%s206 + $0x4] sm:$0xf]
        %v699 = vld [vmem:[%s206 + $0x8] sm:$0x1]
        %v700 = vld [vmem:[%s206 + $0xc] sm:$0xf]
        %v701 = vld [vmem:[%s206 + $0x10] sm:$0xf]
        %v702 = vld [vmem:[%s206 + $0x14] sm:$0x1]
        %v703 = vld [vmem:[%s206 + $0x18] sm:$0xf]
        %v704 = vld [vmem:[%s206 + $0x1c] sm:$0xf]
        %v705 = vld [vmem:[%s206 + $0x20] sm:$0x1]
        %v706 = vld [vmem:[%s206 + $0x24] sm:$0xf]
        %v707 = vld [vmem:[%s206 + $0x28] sm:$0xf]
        %v708 = vld [vmem:[%s206 + $0x2c] sm:$0x1]
        %v709 = vld [vmem:[%s206 + $0x30] sm:$0xf]
        %v710 = vld [vmem:[%s206 + $0x34] sm:$0xf]
        %v711 = vld [vmem:[%s206 + $0x38] sm:$0x1]
        %v712 = vld [vmem:[%s206 + $0x3c] sm:$0xf]
        %v713 = vld [vmem:[%s206 + $0x40] sm:$0xf]
        %v714 = vld [vmem:[%s206 + $0x44] sm:$0x1]
        %v715 = vld [vmem:[%s206 + $0x48] sm:$0xf]
        %v716 = vld [vmem:[%s206 + $0x4c] sm:$0xf]
        %v717 = vld [vmem:[%s206 + $0x50] sm:$0x1]
        %v718 = vld [vmem:[%s206 + $0x54] sm:$0xf]
        %v719 = vld [vmem:[%s206 + $0x58] sm:$0xf]
        %v720 = vld [vmem:[%s206 + $0x5c] sm:$0x1]
        %v721 = vld [vmem:[%s206 + $0x60] sm:$0xf]
        %v722 = vld [vmem:[%s206 + $0x64] sm:$0xf]
        %v723 = vld [vmem:[%s206 + $0x68] sm:$0x1]
        %v724 = vld [vmem:[%s206 + $0x6c] sm:$0xf]
        %v725 = vld [vmem:[%s206 + $0x70] sm:$0xf]
        %v726 = vld [vmem:[%s206 + $0x74] sm:$0x1]
        %v727 = vld [vmem:[%s206 + $0x78] sm:$0xf]
        %v728 = vld [vmem:[%s206 + $0x7c] sm:$0xf]
        %v729 = vld [vmem:[%s206 + $0x80] sm:$0x1]
        %v730 = vld [vmem:[%s206 + $0x84] sm:$0xf]
        %v731 = vld [vmem:[%s206 + $0x88] sm:$0xf]
        %v732 = vld [vmem:[%s206 + $0x8c] sm:$0x1]
        %v733 = vld [vmem:[%s206 + $0x90] sm:$0xf]
        %v734 = vld [vmem:[%s206 + $0x94] sm:$0xf]
        %v735 = vld [vmem:[%s206 + $0x98] sm:$0x1]
        %v736 = vld [vmem:[%s206 + $0x9c] sm:$0xf]
        %v737 = vld [vmem:[%s206 + $0xa0] sm:$0xf]
        %v738 = vld [vmem:[%s206 + $0xa4] sm:$0x1]
        %v739 = vld [vmem:[%s206 + $0xa8] sm:$0xf]
        %v740 = vld [vmem:[%s206 + $0xac] sm:$0xf]
        %v741 = vld [vmem:[%s206 + $0xb0] sm:$0x1]
        %v742 = vld [vmem:[%s206 + $0xb4] sm:$0xf]
        %v743 = vld [vmem:[%s206 + $0xb8] sm:$0xf]
        %v744 = vld [vmem:[%s206 + $0xbc] sm:$0x1]
        %vm745 = vsmask.f32 3328
        %vm746 = vsmask.f32 7440
        %vm747 = vmor %vm745, %vm746
        %v749 = vshrl.u32 %v697, 16
        %v751 = vrot.slane %v749, 4
        %v752 = vshll.u32 %v697, 16
        %v754 = vrot.slane %v752, 5
        %v755 = vor.u32 %v751, %v754
        %v756 = vrot.slane %v755, 4
        %v758 = vshll.u32 %v698, 16
        %v760 = vrot.slane %v758, 5
        %v761 = vsel %vm747, %v756, %v760
        %v762 = vshrl.u32 %v698, 16
        %v764 = vrot.slane %v762, 4
        %v765 = vor.u32 %v764, %v760
        %v766 = vrot.slane %v765, 4
        %v768 = vshll.u32 %v699, 16
        %v770 = vrot.slane %v768, 5
        %v771 = vsel %vm747, %v766, %v770
        %v773 = vshrl.u32 %v700, 16
        %v775 = vrot.slane %v773, 4
        %v776 = vshll.u32 %v700, 16
        %v778 = vrot.slane %v776, 5
        %v779 = vor.u32 %v775, %v778
        %v780 = vrot.slane %v779, 4
        %v782 = vshll.u32 %v701, 16
        %v784 = vrot.slane %v782, 5
        %v785 = vsel %vm747, %v780, %v784
        %v786 = vshrl.u32 %v701, 16
        %v788 = vrot.slane %v786, 4
        %v789 = vor.u32 %v788, %v784
        %v790 = vrot.slane %v789, 4
        %v792 = vshll.u32 %v702, 16
        %v794 = vrot.slane %v792, 5
        %v795 = vsel %vm747, %v790, %v794
        %v797 = vshrl.u32 %v703, 16
        %v799 = vrot.slane %v797, 4
        %v800 = vshll.u32 %v703, 16
        %v802 = vrot.slane %v800, 5
        %v803 = vor.u32 %v799, %v802
        %v804 = vrot.slane %v803, 4
        %v806 = vshll.u32 %v704, 16
        %v808 = vrot.slane %v806, 5
        %v809 = vsel %vm747, %v804, %v808
        %v810 = vshrl.u32 %v704, 16
        %v812 = vrot.slane %v810, 4
        %v813 = vor.u32 %v812, %v808
        %v814 = vrot.slane %v813, 4
        %v816 = vshll.u32 %v705, 16
        %v818 = vrot.slane %v816, 5
        %v819 = vsel %vm747, %v814, %v818
        %v821 = vshrl.u32 %v706, 16
        %v823 = vrot.slane %v821, 4
        %v824 = vshll.u32 %v706, 16
        %v826 = vrot.slane %v824, 5
        %v827 = vor.u32 %v823, %v826
        %v828 = vrot.slane %v827, 4
        %v830 = vshll.u32 %v707, 16
        %v832 = vrot.slane %v830, 5
        %v833 = vsel %vm747, %v828, %v832
        %v834 = vshrl.u32 %v707, 16
        %v836 = vrot.slane %v834, 4
        %v837 = vor.u32 %v836, %v832
        %v838 = vrot.slane %v837, 4
        %v840 = vshll.u32 %v708, 16
        %v842 = vrot.slane %v840, 5
        %v843 = vsel %vm747, %v838, %v842
        %v845 = vshrl.u32 %v709, 16
        %v847 = vrot.slane %v845, 4
        %v848 = vshll.u32 %v709, 16
        %v850 = vrot.slane %v848, 5
        %v851 = vor.u32 %v847, %v850
        %v852 = vrot.slane %v851, 4
        %v854 = vshll.u32 %v710, 16
        %v856 = vrot.slane %v854, 5
        %v857 = vsel %vm747, %v852, %v856
        %v858 = vshrl.u32 %v710, 16
        %v860 = vrot.slane %v858, 4
        %v861 = vor.u32 %v860, %v856
        %v862 = vrot.slane %v861, 4
        %v864 = vshll.u32 %v711, 16
        %v866 = vrot.slane %v864, 5
        %v867 = vsel %vm747, %v862, %v866
        %v869 = vshrl.u32 %v712, 16
        %v871 = vrot.slane %v869, 4
        %v872 = vshll.u32 %v712, 16
        %v874 = vrot.slane %v872, 5
        %v875 = vor.u32 %v871, %v874
        %v876 = vrot.slane %v875, 4
        %v878 = vshll.u32 %v713, 16
        %v880 = vrot.slane %v878, 5
        %v881 = vsel %vm747, %v876, %v880
        %v882 = vshrl.u32 %v713, 16
        %v884 = vrot.slane %v882, 4
        %v885 = vor.u32 %v884, %v880
        %v886 = vrot.slane %v885, 4
        %v888 = vshll.u32 %v714, 16
        %v890 = vrot.slane %v888, 5
        %v891 = vsel %vm747, %v886, %v890
        %v893 = vshrl.u32 %v715, 16
        %v895 = vrot.slane %v893, 4
        %v896 = vshll.u32 %v715, 16
        %v898 = vrot.slane %v896, 5
        %v899 = vor.u32 %v895, %v898
        %v900 = vrot.slane %v899, 4
        %v902 = vshll.u32 %v716, 16
        %v904 = vrot.slane %v902, 5
        %v905 = vsel %vm747, %v900, %v904
        %v906 = vshrl.u32 %v716, 16
        %v908 = vrot.slane %v906, 4
        %v909 = vor.u32 %v908, %v904
        %v910 = vrot.slane %v909, 4
        %v912 = vshll.u32 %v717, 16
        %v914 = vrot.slane %v912, 5
        %v915 = vsel %vm747, %v910, %v914
        %v917 = vshrl.u32 %v718, 16
        %v919 = vrot.slane %v917, 4
        %v920 = vshll.u32 %v718, 16
        %v922 = vrot.slane %v920, 5
        %v923 = vor.u32 %v919, %v922
        %v924 = vrot.slane %v923, 4
        %v926 = vshll.u32 %v719, 16
        %v928 = vrot.slane %v926, 5
        %v929 = vsel %vm747, %v924, %v928
        %v930 = vshrl.u32 %v719, 16
        %v932 = vrot.slane %v930, 4
        %v933 = vor.u32 %v932, %v928
        %v934 = vrot.slane %v933, 4
        %v936 = vshll.u32 %v720, 16
        %v938 = vrot.slane %v936, 5
        %v939 = vsel %vm747, %v934, %v938
        %v941 = vshrl.u32 %v721, 16
        %v943 = vrot.slane %v941, 4
        %v944 = vshll.u32 %v721, 16
        %v946 = vrot.slane %v944, 5
        %v947 = vor.u32 %v943, %v946
        %v948 = vrot.slane %v947, 4
        %v950 = vshll.u32 %v722, 16
        %v952 = vrot.slane %v950, 5
        %v953 = vsel %vm747, %v948, %v952
        %v954 = vshrl.u32 %v722, 16
        %v956 = vrot.slane %v954, 4
        %v957 = vor.u32 %v956, %v952
        %v958 = vrot.slane %v957, 4
        %v960 = vshll.u32 %v723, 16
        %v962 = vrot.slane %v960, 5
        %v963 = vsel %vm747, %v958, %v962
        %v965 = vshrl.u32 %v724, 16
        %v967 = vrot.slane %v965, 4
        %v968 = vshll.u32 %v724, 16
        %v970 = vrot.slane %v968, 5
        %v971 = vor.u32 %v967, %v970
        %v972 = vrot.slane %v971, 4
        %v974 = vshll.u32 %v725, 16
        %v976 = vrot.slane %v974, 5
        %v977 = vsel %vm747, %v972, %v976
        %v978 = vshrl.u32 %v725, 16
        %v980 = vrot.slane %v978, 4
        %v981 = vor.u32 %v980, %v976
        %v982 = vrot.slane %v981, 4
        %v984 = vshll.u32 %v726, 16
        %v986 = vrot.slane %v984, 5
        %v987 = vsel %vm747, %v982, %v986
        %v989 = vshrl.u32 %v727, 16
        %v991 = vrot.slane %v989, 4
        %v992 = vshll.u32 %v727, 16
        %v994 = vrot.slane %v992, 5
        %v995 = vor.u32 %v991, %v994
        %v996 = vrot.slane %v995, 4
        %v998 = vshll.u32 %v728, 16
        %v1000 = vrot.slane %v998, 5
        %v1001 = vsel %vm747, %v996, %v1000
        %v1002 = vshrl.u32 %v728, 16
        %v1004 = vrot.slane %v1002, 4
        %v1005 = vor.u32 %v1004, %v1000
        %v1006 = vrot.slane %v1005, 4
        %v1008 = vshll.u32 %v729, 16
        %v1010 = vrot.slane %v1008, 5
        %v1011 = vsel %vm747, %v1006, %v1010
        %v1013 = vshrl.u32 %v730, 16
        %v1015 = vrot.slane %v1013, 4
        %v1016 = vshll.u32 %v730, 16
        %v1018 = vrot.slane %v1016, 5
        %v1019 = vor.u32 %v1015, %v1018
        %v1020 = vrot.slane %v1019, 4
        %v1022 = vshll.u32 %v731, 16
        %v1024 = vrot.slane %v1022, 5
        %v1025 = vsel %vm747, %v1020, %v1024
        %v1026 = vshrl.u32 %v731, 16
        %v1028 = vrot.slane %v1026, 4
        %v1029 = vor.u32 %v1028, %v1024
        %v1030 = vrot.slane %v1029, 4
        %v1032 = vshll.u32 %v732, 16
        %v1034 = vrot.slane %v1032, 5
        %v1035 = vsel %vm747, %v1030, %v1034
        %v1037 = vshrl.u32 %v733, 16
        %v1039 = vrot.slane %v1037, 4
        %v1040 = vshll.u32 %v733, 16
        %v1042 = vrot.slane %v1040, 5
        %v1043 = vor.u32 %v1039, %v1042
        %v1044 = vrot.slane %v1043, 4
        %v1046 = vshll.u32 %v734, 16
        %v1048 = vrot.slane %v1046, 5
        %v1049 = vsel %vm747, %v1044, %v1048
        %v1050 = vshrl.u32 %v734, 16
        %v1052 = vrot.slane %v1050, 4
        %v1053 = vor.u32 %v1052, %v1048
        %v1054 = vrot.slane %v1053, 4
        %v1056 = vshll.u32 %v735, 16
        %v1058 = vrot.slane %v1056, 5
        %v1059 = vsel %vm747, %v1054, %v1058
        %v1061 = vshrl.u32 %v736, 16
        %v1063 = vrot.slane %v1061, 4
        %v1064 = vshll.u32 %v736, 16
        %v1066 = vrot.slane %v1064, 5
        %v1067 = vor.u32 %v1063, %v1066
        %v1068 = vrot.slane %v1067, 4
        %v1070 = vshll.u32 %v737, 16
        %v1072 = vrot.slane %v1070, 5
        %v1073 = vsel %vm747, %v1068, %v1072
        %v1074 = vshrl.u32 %v737, 16
        %v1076 = vrot.slane %v1074, 4
        %v1077 = vor.u32 %v1076, %v1072
        %v1078 = vrot.slane %v1077, 4
        %v1080 = vshll.u32 %v738, 16
        %v1082 = vrot.slane %v1080, 5
        %v1083 = vsel %vm747, %v1078, %v1082
        %v1085 = vshrl.u32 %v739, 16
        %v1087 = vrot.slane %v1085, 4
        %v1088 = vshll.u32 %v739, 16
        %v1090 = vrot.slane %v1088, 5
        %v1091 = vor.u32 %v1087, %v1090
        %v1092 = vrot.slane %v1091, 4
        %v1094 = vshll.u32 %v740, 16
        %v1096 = vrot.slane %v1094, 5
        %v1097 = vsel %vm747, %v1092, %v1096
        %v1098 = vshrl.u32 %v740, 16
        %v1100 = vrot.slane %v1098, 4
        %v1101 = vor.u32 %v1100, %v1096
        %v1102 = vrot.slane %v1101, 4
        %v1104 = vshll.u32 %v741, 16
        %v1106 = vrot.slane %v1104, 5
        %v1107 = vsel %vm747, %v1102, %v1106
        %v1109 = vshrl.u32 %v742, 16
        %v1111 = vrot.slane %v1109, 4
        %v1112 = vshll.u32 %v742, 16
        %v1114 = vrot.slane %v1112, 5
        %v1115 = vor.u32 %v1111, %v1114
        %v1116 = vrot.slane %v1115, 4
        %v1118 = vshll.u32 %v743, 16
        %v1120 = vrot.slane %v1118, 5
        %v1121 = vsel %vm747, %v1116, %v1120
        %v1122 = vshrl.u32 %v743, 16
        %v1124 = vrot.slane %v1122, 4
        %v1125 = vor.u32 %v1124, %v1120
        %v1126 = vrot.slane %v1125, 4
        %v1128 = vshll.u32 %v744, 16
        %v1130 = vrot.slane %v1128, 5
        %v1131 = vsel %vm747, %v1126, %v1130
        %v1132 = vld [vmem:[#allocation2] sm:$0xff]
        %v1133 = vld [vmem:[#allocation2 + $0x8] sm:$0xff]
        %v1134 = vld [vmem:[#allocation2 + $0x10] sm:$0xff]
        %v1135 = vld [vmem:[#allocation2 + $0x18] sm:$0xff]
        %v1136 = vld [vmem:[#allocation2 + $0x20] sm:$0xff]
        %v1137 = vld [vmem:[#allocation2 + $0x28] sm:$0xff]
        %v1138 = vld [vmem:[#allocation2 + $0x30] sm:$0xff]
        %v1139 = vld [vmem:[#allocation2 + $0x38] sm:$0xff]
        %v1140 = vld [vmem:[#allocation2 + $0x40] sm:$0xff]
        %v1141 = vld [vmem:[#allocation2 + $0x48] sm:$0xff]
        %v1142 = vld [vmem:[#allocation2 + $0x50] sm:$0xff]
        %v1143 = vld [vmem:[#allocation2 + $0x58] sm:$0xff]
        %v1144 = vld [vmem:[#allocation2 + $0x60] sm:$0xff]
        %v1145 = vld [vmem:[#allocation2 + $0x68] sm:$0xff]
        %v1146 = vld [vmem:[#allocation2 + $0x70] sm:$0xff]
        %v1147 = vld [vmem:[#allocation2 + $0x78] sm:$0xff]
        %v1148 = vld [vmem:[#allocation2 + $0x80] sm:$0xff]
        %v1149 = vld [vmem:[#allocation2 + $0x88] sm:$0xff]
        %v1150 = vld [vmem:[#allocation2 + $0x90] sm:$0xff]
        %v1151 = vld [vmem:[#allocation2 + $0x98] sm:$0xff]
        %v1152 = vld [vmem:[#allocation2 + $0xa0] sm:$0xff]
        %v1153 = vld [vmem:[#allocation2 + $0xa8] sm:$0xff]
        %v1154 = vld [vmem:[#allocation2 + $0xb0] sm:$0xff]
        %v1155 = vld [vmem:[#allocation2 + $0xb8] sm:$0xff]
        %v1156 = vld [vmem:[#allocation2 + $0xc0] sm:$0xff]
        %v1157 = vld [vmem:[#allocation2 + $0xc8] sm:$0xff]
        %v1158 = vld [vmem:[#allocation2 + $0xd0] sm:$0xff]
        %v1159 = vld [vmem:[#allocation2 + $0xd8] sm:$0xff]
        %v1160 = vld [vmem:[#allocation2 + $0xe0] sm:$0xff]
        %v1161 = vld [vmem:[#allocation2 + $0xe8] sm:$0xff]
        %v1162 = vld [vmem:[#allocation2 + $0xf0] sm:$0xff]
        %v1163 = vld [vmem:[#allocation2 + $0xf8] sm:$0xff]
        %v1164 = vld [vmem:[%s210 + $0x20] sm:$0xf]
        %v1165 = vld [vmem:[%s210 + $0x24] sm:$0xf]
        %v1166 = vld [vmem:[%s210 + $0x28] sm:$0xf]
        %v1167 = vld [vmem:[%s210 + $0x2c] sm:$0xf]
        %v1168 = vld [vmem:[%s210 + $0x30] sm:$0xf]
        %v1169 = vld [vmem:[%s210 + $0x34] sm:$0xf]
        %v1170 = vld [vmem:[%s210 + $0x38] sm:$0xf]
        %v1171 = vld [vmem:[%s210 + $0x3c] sm:$0xf]
        %v1172 = vunpack.c.l.b16 %v761
        %v1173 = vunpack.c.l.b16 %v771
        %v1174 = vunpack.c.l.b16 %v785
        %v1175 = vunpack.c.l.b16 %v795
        %v1176 = vunpack.c.l.b16 %v809
        %v1177 = vunpack.c.l.b16 %v819
        %v1178 = vunpack.c.l.b16 %v833
        %v1179 = vunpack.c.l.b16 %v843
        %v1180 = vunpack.c.l.b16 %v857
        %v1181 = vunpack.c.l.b16 %v867
        %v1182 = vunpack.c.l.b16 %v881
        %v1183 = vunpack.c.l.b16 %v891
        %v1184 = vunpack.c.l.b16 %v905
        %v1185 = vunpack.c.l.b16 %v915
        %v1186 = vunpack.c.l.b16 %v929
        %v1187 = vunpack.c.l.b16 %v939
        %v1188 = vunpack.c.l.b16 %v953
        %v1189 = vunpack.c.l.b16 %v963
        %v1190 = vunpack.c.l.b16 %v977
        %v1191 = vunpack.c.l.b16 %v987
        %v1192 = vunpack.c.l.b16 %v1001
        %v1193 = vunpack.c.l.b16 %v1011
        %v1194 = vunpack.c.l.b16 %v1025
        %v1195 = vunpack.c.l.b16 %v1035
        %v1196 = vunpack.c.l.b16 %v1049
        %v1197 = vunpack.c.l.b16 %v1059
        %v1198 = vunpack.c.l.b16 %v1073
        %v1199 = vunpack.c.l.b16 %v1083
        %v1200 = vunpack.c.l.b16 %v1097
        %v1201 = vunpack.c.l.b16 %v1107
        %v1202 = vunpack.c.l.b16 %v1121
        %v1203 = vunpack.c.l.b16 %v1131
        %v1204 = vpack.c.b16 %v1173, %v1172
        %v1205 = vpack.c.b16 %v1175, %v1174
        %v1206 = vpack.c.b16 %v1177, %v1176
        %v1207 = vpack.c.b16 %v1179, %v1178
        %v1208 = vpack.c.b16 %v1181, %v1180
        %v1209 = vpack.c.b16 %v1183, %v1182
        %v1210 = vpack.c.b16 %v1185, %v1184
        %v1211 = vpack.c.b16 %v1187, %v1186
        %v1212 = vpack.c.b16 %v1189, %v1188
        %v1213 = vpack.c.b16 %v1191, %v1190
        %v1214 = vpack.c.b16 %v1193, %v1192
        %v1215 = vpack.c.b16 %v1195, %v1194
        %v1216 = vpack.c.b16 %v1197, %v1196
        %v1217 = vpack.c.b16 %v1199, %v1198
        %v1218 = vpack.c.b16 %v1201, %v1200
        %v1219 = vpack.c.b16 %v1203, %v1202
        %v1228 = vunpack.c.l.b16 %v1164
        %v1229 = vunpack.c.l.b16 %v1165
        %v1230 = vunpack.c.l.b16 %v1166
        %v1231 = vunpack.c.l.b16 %v1167
        %v1232 = vunpack.c.l.b16 %v1168
        %v1233 = vunpack.c.l.b16 %v1169
        %v1234 = vunpack.c.l.b16 %v1170
        %v1235 = vunpack.c.l.b16 %v1171
        %v1236 = vpack.c.b16 %v1229, %v1228
        %v1237 = vpack.c.b16 %v1231, %v1230
        %v1238 = vpack.c.b16 %v1233, %v1232
        %v1239 = vpack.c.b16 %v1235, %v1234
        %v1245 = vsel %vm215, %v1204, 0
        %v1248 = vsel %vm215, %v1205, 0
        %v1251 = vsel %vm215, %v1206, 0
        %v1254 = vsel %vm215, %v1207, 0
        %v1257 = vsel %vm215, %v1208, 0
        %v1260 = vsel %vm215, %v1209, 0
        %v1263 = vsel %vm215, %v1210, 0
        %v1266 = vsel %vm215, %v1211, 0
        %v1269 = vsel %vm215, %v1212, 0
        %v1272 = vsel %vm215, %v1213, 0
        %v1275 = vsel %vm215, %v1214, 0
        %v1278 = vsel %vm215, %v1215, 0
        %v1281 = vsel %vm215, %v1216, 0
        %v1284 = vsel %vm215, %v1217, 0
        %v1287 = vsel %vm215, %v1218, 0
        %v1290 = vsel %vm215, %v1219, 0
        %1292 = vmatprep.subr.bf16.mxu0 0
        %1293 = vmatpush1.bf16.msra.mxu0 %v1236
        %1294 = vmatprep.subr.bf16.mxu0 0
        %1295 = vmatpush1.bf16.msra.mxu0 %v1237
        %1296 = vmatprep.subr.bf16.mxu0 0
        %1297 = vmatpush1.bf16.msra.mxu0 %v1238
        %1298 = vmatprep.subr.bf16.mxu0 0
        %1299 = vmatpush1.bf16.msra.mxu0 %v1239
        %1300 = vmatprep.subr.bf16.mxu0 0
        %1301 = vmatpush1.bf16.msra.mxu0 0
        %1302 = vmatprep.subr.bf16.mxu0 0
        %1303 = vmatpush1.bf16.msra.mxu0 0
        %1304 = vmatprep.subr.bf16.mxu0 0
        %1305 = vmatpush1.bf16.msra.mxu0 0
        %1306 = vmatprep.subr.bf16.mxu0 0
        %1307 = vmatpush1.bf16.msra.mxu0 0
        %1308 = vmatprep.subr.bf16.mxu0 0
        %1309 = vmatpush1.bf16.msra.mxu0 0
        %1310 = vmatprep.subr.bf16.mxu0 0
        %1311 = vmatpush1.bf16.msra.mxu0 0
        %1312 = vmatprep.subr.bf16.mxu0 0
        %1313 = vmatpush1.bf16.msra.mxu0 0
        %1314 = vmatprep.subr.bf16.mxu0 0
        %1315 = vmatpush1.bf16.msra.mxu0 0
        %1316 = vmatprep.subr.bf16.mxu0 0
        %1317 = vmatpush1.bf16.msra.mxu0 0
        %1318 = vmatprep.subr.bf16.mxu0 0
        %1319 = vmatpush1.bf16.msra.mxu0 0
        %1320 = vmatprep.subr.bf16.mxu0 0
        %1321 = vmatpush1.bf16.msra.mxu0 0
        %1322 = vmatprep.subr.bf16.mxu0 0
        %1323 = vmatpush1.bf16.msra.mxu0 0
        %1324 = vmatprep.mubr.bf16.mxu0 0
        %1325 = vmatmul.mubr.bf16.gmra.mrb[0].mxu0 %v1245
        %v1326 = vpop.f32.mrb[0].mxu0
        %v1327 = vadd.f32 0.0, %v1326
        %v1328 = vpop.f32.mrb[0].mxu0
        %v1329 = vpop.f32.mrb[0].mxu0
        %v1330 = vadd.f32 0.0, %v1329
        %v1331 = vpop.f32.mrb[0].mxu0
        %1332 = vmatprep.mubr.bf16.mxu0 0
        %1333 = vmatmul.mubr.bf16.gmra.mrb[0].mxu0 %v1248
        %v1334 = vpop.f32.mrb[0].mxu0
        %v1335 = vadd.f32 0.0, %v1334
        %v1336 = vpop.f32.mrb[0].mxu0
        %v1337 = vpop.f32.mrb[0].mxu0
        %v1338 = vadd.f32 0.0, %v1337
        %v1339 = vpop.f32.mrb[0].mxu0
        %1340 = vmatprep.mubr.bf16.mxu0 0
        %1341 = vmatmul.mubr.bf16.gmra.mrb[0].mxu0 %v1251
        %v1342 = vpop.f32.mrb[0].mxu0
        %v1343 = vadd.f32 0.0, %v1342
        %v1344 = vpop.f32.mrb[0].mxu0
        %v1345 = vpop.f32.mrb[0].mxu0
        %v1346 = vadd.f32 0.0, %v1345
        %v1347 = vpop.f32.mrb[0].mxu0
        %1348 = vmatprep.mubr.bf16.mxu0 0
        %1349 = vmatmul.mubr.bf16.gmra.mrb[0].mxu0 %v1254
        %v1350 = vpop.f32.mrb[0].mxu0
        %v1351 = vadd.f32 0.0, %v1350
        %v1352 = vpop.f32.mrb[0].mxu0
        %v1353 = vpop.f32.mrb[0].mxu0
        %v1354 = vadd.f32 0.0, %v1353
        %v1355 = vpop.f32.mrb[0].mxu0
        %1356 = vmatprep.mubr.bf16.mxu0 0
        %1357 = vmatmul.mubr.bf16.gmra.mrb[0].mxu0 %v1257
        %v1358 = vpop.f32.mrb[0].mxu0
        %v1359 = vadd.f32 0.0, %v1358
        %v1360 = vpop.f32.mrb[0].mxu0
        %v1361 = vpop.f32.mrb[0].mxu0
        %v1362 = vadd.f32 0.0, %v1361
        %v1363 = vpop.f32.mrb[0].mxu0
        %1364 = vmatprep.mubr.bf16.mxu0 0
        %1365 = vmatmul.mubr.bf16.gmra.mrb[0].mxu0 %v1260
        %v1366 = vpop.f32.mrb[0].mxu0
        %v1367 = vadd.f32 0.0, %v1366
        %v1368 = vpop.f32.mrb[0].mxu0
        %v1369 = vpop.f32.mrb[0].mxu0
        %v1370 = vadd.f32 0.0, %v1369
        %v1371 = vpop.f32.mrb[0].mxu0
        %1372 = vmatprep.mubr.bf16.mxu0 0
        %1373 = vmatmul.mubr.bf16.gmra.mrb[0].mxu0 %v1263
        %v1374 = vpop.f32.mrb[0].mxu0
        %v1375 = vadd.f32 0.0, %v1374
        %v1376 = vpop.f32.mrb[0].mxu0
        %v1377 = vpop.f32.mrb[0].mxu0
        %v1378 = vadd.f32 0.0, %v1377
        %v1379 = vpop.f32.mrb[0].mxu0
        %1380 = vmatprep.mubr.bf16.mxu0 0
        %1381 = vmatmul.mubr.bf16.gmra.mrb[0].mxu0 %v1266
        %v1382 = vpop.f32.mrb[0].mxu0
        %v1383 = vadd.f32 0.0, %v1382
        %v1384 = vpop.f32.mrb[0].mxu0
        %v1385 = vpop.f32.mrb[0].mxu0
        %v1386 = vadd.f32 0.0, %v1385
        %v1387 = vpop.f32.mrb[0].mxu0
        %1388 = vmatprep.mubr.bf16.mxu0 0
        %1389 = vmatmul.mubr.bf16.gmra.mrb[0].mxu0 %v1269
        %v1390 = vpop.f32.mrb[0].mxu0
        %v1391 = vadd.f32 0.0, %v1390
        %v1392 = vpop.f32.mrb[0].mxu0
        %v1393 = vpop.f32.mrb[0].mxu0
        %v1394 = vadd.f32 0.0, %v1393
        %v1395 = vpop.f32.mrb[0].mxu0
        %1396 = vmatprep.mubr.bf16.mxu0 0
        %1397 = vmatmul.mubr.bf16.gmra.mrb[0].mxu0 %v1272
        %v1398 = vpop.f32.mrb[0].mxu0
        %v1399 = vadd.f32 0.0, %v1398
        %v1400 = vpop.f32.mrb[0].mxu0
        %v1401 = vpop.f32.mrb[0].mxu0
        %v1402 = vadd.f32 0.0, %v1401
        %v1403 = vpop.f32.mrb[0].mxu0
        %1404 = vmatprep.mubr.bf16.mxu0 0
        %1405 = vmatmul.mubr.bf16.gmra.mrb[0].mxu0 %v1275
        %v1406 = vpop.f32.mrb[0].mxu0
        %v1407 = vadd.f32 0.0, %v1406
        %v1408 = vpop.f32.mrb[0].mxu0
        %v1409 = vpop.f32.mrb[0].mxu0
        %v1410 = vadd.f32 0.0, %v1409
        %v1411 = vpop.f32.mrb[0].mxu0
        %1412 = vmatprep.mubr.bf16.mxu0 0
        %1413 = vmatmul.mubr.bf16.gmra.mrb[0].mxu0 %v1278
        %v1414 = vpop.f32.mrb[0].mxu0
        %v1415 = vadd.f32 0.0, %v1414
        %v1416 = vpop.f32.mrb[0].mxu0
        %v1417 = vpop.f32.mrb[0].mxu0
        %v1418 = vadd.f32 0.0, %v1417
        %v1419 = vpop.f32.mrb[0].mxu0
        %1420 = vmatprep.mubr.bf16.mxu0 0
        %1421 = vmatmul.mubr.bf16.gmra.mrb[0].mxu0 %v1281
        %v1422 = vpop.f32.mrb[0].mxu0
        %v1423 = vadd.f32 0.0, %v1422
        %v1424 = vpop.f32.mrb[0].mxu0
        %v1425 = vpop.f32.mrb[0].mxu0
        %v1426 = vadd.f32 0.0, %v1425
        %v1427 = vpop.f32.mrb[0].mxu0
        %1428 = vmatprep.mubr.bf16.mxu0 0
        %1429 = vmatmul.mubr.bf16.gmra.mrb[0].mxu0 %v1284
        %v1430 = vpop.f32.mrb[0].mxu0
        %v1431 = vadd.f32 0.0, %v1430
        %v1432 = vpop.f32.mrb[0].mxu0
        %v1433 = vpop.f32.mrb[0].mxu0
        %v1434 = vadd.f32 0.0, %v1433
        %v1435 = vpop.f32.mrb[0].mxu0
        %1436 = vmatprep.mubr.bf16.mxu0 0
        %1437 = vmatmul.mubr.bf16.gmra.mrb[0].mxu0 %v1287
        %v1438 = vpop.f32.mrb[0].mxu0
        %v1439 = vadd.f32 0.0, %v1438
        %v1440 = vpop.f32.mrb[0].mxu0
        %v1441 = vpop.f32.mrb[0].mxu0
        %v1442 = vadd.f32 0.0, %v1441
        %v1443 = vpop.f32.mrb[0].mxu0
        %1444 = vmatprep.mubr.bf16.mxu0 0
        %1445 = vmatmul.mubr.bf16.gmra.mrb[0].mxu0 %v1290
        %v1446 = vpop.f32.mrb[0].mxu0
        %v1447 = vadd.f32 0.0, %v1446
        %v1448 = vpop.f32.mrb[0].mxu0
        %v1449 = vpop.f32.mrb[0].mxu0
        %v1450 = vadd.f32 0.0, %v1449
        %v1451 = vpop.f32.mrb[0].mxu0
        %1452 = vdwg.mxu0
        %v1453 = vadd.f32 %v1132, %v1327
        %v1454 = vadd.f32 %v1133, %v1330
        %v1455 = vadd.f32 %v1134, %v1335
        %v1456 = vadd.f32 %v1135, %v1338
        %v1457 = vadd.f32 %v1136, %v1343
        %v1458 = vadd.f32 %v1137, %v1346
        %v1459 = vadd.f32 %v1138, %v1351
        %v1460 = vadd.f32 %v1139, %v1354
        %v1461 = vadd.f32 %v1140, %v1359
        %v1462 = vadd.f32 %v1141, %v1362
        %v1463 = vadd.f32 %v1142, %v1367
        %v1464 = vadd.f32 %v1143, %v1370
        %v1465 = vadd.f32 %v1144, %v1375
        %v1466 = vadd.f32 %v1145, %v1378
        %v1467 = vadd.f32 %v1146, %v1383
        %v1468 = vadd.f32 %v1147, %v1386
        %v1469 = vadd.f32 %v1148, %v1391
        %v1470 = vadd.f32 %v1149, %v1394
        %v1471 = vadd.f32 %v1150, %v1399
        %v1472 = vadd.f32 %v1151, %v1402
        %v1473 = vadd.f32 %v1152, %v1407
        %v1474 = vadd.f32 %v1153, %v1410
        %v1475 = vadd.f32 %v1154, %v1415
        %v1476 = vadd.f32 %v1155, %v1418
        %v1477 = vadd.f32 %v1156, %v1423
        %v1478 = vadd.f32 %v1157, %v1426
        %v1479 = vadd.f32 %v1158, %v1431
        %v1480 = vadd.f32 %v1159, %v1434
        %v1481 = vadd.f32 %v1160, %v1439
        %v1482 = vadd.f32 %v1161, %v1442
        %v1483 = vadd.f32 %v1162, %v1447
        %v1484 = vadd.f32 %v1163, %v1450
        %1485 = vst.msk [vmem:[#allocation2] sm:$0xff] %vm215, %v1453
        %1486 = vst.msk [vmem:[#allocation2 + $0x8] sm:$0xff] %vm215, %v1454
        %1487 = vst.msk [vmem:[#allocation2 + $0x10] sm:$0xff] %vm215, %v1455
        %1488 = vst.msk [vmem:[#allocation2 + $0x18] sm:$0xff] %vm215, %v1456
        %1489 = vst.msk [vmem:[#allocation2 + $0x20] sm:$0xff] %vm215, %v1457
        %1490 = vst.msk [vmem:[#allocation2 + $0x28] sm:$0xff] %vm215, %v1458
        %1491 = vst.msk [vmem:[#allocation2 + $0x30] sm:$0xff] %vm215, %v1459
        %1492 = vst.msk [vmem:[#allocation2 + $0x38] sm:$0xff] %vm215, %v1460
        %1493 = vst.msk [vmem:[#allocation2 + $0x40] sm:$0xff] %vm215, %v1461
        %1494 = vst.msk [vmem:[#allocation2 + $0x48] sm:$0xff] %vm215, %v1462
        %1495 = vst.msk [vmem:[#allocation2 + $0x50] sm:$0xff] %vm215, %v1463
        %1496 = vst.msk [vmem:[#allocation2 + $0x58] sm:$0xff] %vm215, %v1464
        %1497 = vst.msk [vmem:[#allocation2 + $0x60] sm:$0xff] %vm215, %v1465
        %1498 = vst.msk [vmem:[#allocation2 + $0x68] sm:$0xff] %vm215, %v1466
        %1499 = vst.msk [vmem:[#allocation2 + $0x70] sm:$0xff] %vm215, %v1467
        %1500 = vst.msk [vmem:[#allocation2 + $0x78] sm:$0xff] %vm215, %v1468
        %1501 = vst.msk [vmem:[#allocation2 + $0x80] sm:$0xff] %vm215, %v1469
        %1502 = vst.msk [vmem:[#allocation2 + $0x88] sm:$0xff] %vm215, %v1470
        %1503 = vst.msk [vmem:[#allocation2 + $0x90] sm:$0xff] %vm215, %v1471
        %1504 = vst.msk [vmem:[#allocation2 + $0x98] sm:$0xff] %vm215, %v1472
        %1505 = vst.msk [vmem:[#allocation2 + $0xa0] sm:$0xff] %vm215, %v1473
        %1506 = vst.msk [vmem:[#allocation2 + $0xa8] sm:$0xff] %vm215, %v1474
        %1507 = vst.msk [vmem:[#allocation2 + $0xb0] sm:$0xff] %vm215, %v1475
        %1508 = vst.msk [vmem:[#allocation2 + $0xb8] sm:$0xff] %vm215, %v1476
        %1509 = vst.msk [vmem:[#allocation2 + $0xc0] sm:$0xff] %vm215, %v1477
        %1510 = vst.msk [vmem:[#allocation2 + $0xc8] sm:$0xff] %vm215, %v1478
        %1511 = vst.msk [vmem:[#allocation2 + $0xd0] sm:$0xff] %vm215, %v1479
        %1512 = vst.msk [vmem:[#allocation2 + $0xd8] sm:$0xff] %vm215, %v1480
        %1513 = vst.msk [vmem:[#allocation2 + $0xe0] sm:$0xff] %vm215, %v1481
        %1514 = vst.msk [vmem:[#allocation2 + $0xe8] sm:$0xff] %vm215, %v1482
        %1515 = vst.msk [vmem:[#allocation2 + $0xf0] sm:$0xff] %vm215, %v1483
        %1516 = vst.msk [vmem:[#allocation2 + $0xf8] sm:$0xff] %vm215, %v1484
        %v1517 = vld [vmem:[%s206] sm:$0xe]
        %v1518 = vld [vmem:[%s206 + $0x4] sm:$0xf]
        %v1519 = vld [vmem:[%s206 + $0x8] sm:$0x1]
        %v1520 = vld [vmem:[%s206 + $0xc] sm:$0xe]
        %v1521 = vld [vmem:[%s206 + $0x10] sm:$0xf]
        %v1522 = vld [vmem:[%s206 + $0x14] sm:$0x1]
        %v1523 = vld [vmem:[%s206 + $0x18] sm:$0xe]
        %v1524 = vld [vmem:[%s206 + $0x1c] sm:$0xf]
        %v1525 = vld [vmem:[%s206 + $0x20] sm:$0x1]
        %v1526 = vld [vmem:[%s206 + $0x24] sm:$0xe]
        %v1527 = vld [vmem:[%s206 + $0x28] sm:$0xf]
        %v1528 = vld [vmem:[%s206 + $0x2c] sm:$0x1]
        %v1529 = vld [vmem:[%s206 + $0x30] sm:$0xe]
        %v1530 = vld [vmem:[%s206 + $0x34] sm:$0xf]
        %v1531 = vld [vmem:[%s206 + $0x38] sm:$0x1]
        %v1532 = vld [vmem:[%s206 + $0x3c] sm:$0xe]
        %v1533 = vld [vmem:[%s206 + $0x40] sm:$0xf]
        %v1534 = vld [vmem:[%s206 + $0x44] sm:$0x1]
        %v1535 = vld [vmem:[%s206 + $0x48] sm:$0xe]
        %v1536 = vld [vmem:[%s206 + $0x4c] sm:$0xf]
        %v1537 = vld [vmem:[%s206 + $0x50] sm:$0x1]
        %v1538 = vld [vmem:[%s206 + $0x54] sm:$0xe]
        %v1539 = vld [vmem:[%s206 + $0x58] sm:$0xf]
        %v1540 = vld [vmem:[%s206 + $0x5c] sm:$0x1]
        %v1541 = vld [vmem:[%s206 + $0x60] sm:$0xe]
        %v1542 = vld [vmem:[%s206 + $0x64] sm:$0xf]
        %v1543 = vld [vmem:[%s206 + $0x68] sm:$0x1]
        %v1544 = vld [vmem:[%s206 + $0x6c] sm:$0xe]
        %v1545 = vld [vmem:[%s206 + $0x70] sm:$0xf]
        %v1546 = vld [vmem:[%s206 + $0x74] sm:$0x1]
        %v1547 = vld [vmem:[%s206 + $0x78] sm:$0xe]
        %v1548 = vld [vmem:[%s206 + $0x7c] sm:$0xf]
        %v1549 = vld [vmem:[%s206 + $0x80] sm:$0x1]
        %v1550 = vld [vmem:[%s206 + $0x84] sm:$0xe]
        %v1551 = vld [vmem:[%s206 + $0x88] sm:$0xf]
        %v1552 = vld [vmem:[%s206 + $0x8c] sm:$0x1]
        %v1553 = vld [vmem:[%s206 + $0x90] sm:$0xe]
        %v1554 = vld [vmem:[%s206 + $0x94] sm:$0xf]
        %v1555 = vld [vmem:[%s206 + $0x98] sm:$0x1]
        %v1556 = vld [vmem:[%s206 + $0x9c] sm:$0xe]
        %v1557 = vld [vmem:[%s206 + $0xa0] sm:$0xf]
        %v1558 = vld [vmem:[%s206 + $0xa4] sm:$0x1]
        %v1559 = vld [vmem:[%s206 + $0xa8] sm:$0xe]
        %v1560 = vld [vmem:[%s206 + $0xac] sm:$0xf]
        %v1561 = vld [vmem:[%s206 + $0xb0] sm:$0x1]
        %v1562 = vld [vmem:[%s206 + $0xb4] sm:$0xe]
        %v1563 = vld [vmem:[%s206 + $0xb8] sm:$0xf]
        %v1564 = vld [vmem:[%s206 + $0xbc] sm:$0x1]
        %vm1613 = vcmask 1042432
        %vm1614 = vcmask 1046532
        %vm1615 = vmor %vm1613, %vm1614
        %v1616 = vrot.slane %v1517, 5
        %v1617 = vrot.slane %v1616, 4
        %v1618 = vrot.slane %v1518, 5
        %v1619 = vsel %vm1615, %v1617, %v1618
        %v1620 = vrot.slane %v1618, 4
        %v1621 = vrot.slane %v1519, 5
        %v1622 = vsel %vm1615, %v1620, %v1621
        %v1623 = vrot.slane %v1520, 5
        %v1624 = vrot.slane %v1623, 4
        %v1625 = vrot.slane %v1521, 5
        %v1626 = vsel %vm1615, %v1624, %v1625
        %v1627 = vrot.slane %v1625, 4
        %v1628 = vrot.slane %v1522, 5
        %v1629 = vsel %vm1615, %v1627, %v1628
        %v1630 = vrot.slane %v1523, 5
        %v1631 = vrot.slane %v1630, 4
        %v1632 = vrot.slane %v1524, 5
        %v1633 = vsel %vm1615, %v1631, %v1632
        %v1634 = vrot.slane %v1632, 4
        %v1635 = vrot.slane %v1525, 5
        %v1636 = vsel %vm1615, %v1634, %v1635
        %v1637 = vrot.slane %v1526, 5
        %v1638 = vrot.slane %v1637, 4
        %v1639 = vrot.slane %v1527, 5
        %v1640 = vsel %vm1615, %v1638, %v1639
        %v1641 = vrot.slane %v1639, 4
        %v1642 = vrot.slane %v1528, 5
        %v1643 = vsel %vm1615, %v1641, %v1642
        %v1644 = vrot.slane %v1529, 5
        %v1645 = vrot.slane %v1644, 4
        %v1646 = vrot.slane %v1530, 5
        %v1647 = vsel %vm1615, %v1645, %v1646
        %v1648 = vrot.slane %v1646, 4
        %v1649 = vrot.slane %v1531, 5
        %v1650 = vsel %vm1615, %v1648, %v1649
        %v1651 = vrot.slane %v1532, 5
        %v1652 = vrot.slane %v1651, 4
        %v1653 = vrot.slane %v1533, 5
        %v1654 = vsel %vm1615, %v1652, %v1653
        %v1655 = vrot.slane %v1653, 4
        %v1656 = vrot.slane %v1534, 5
        %v1657 = vsel %vm1615, %v1655, %v1656
        %v1658 = vrot.slane %v1535, 5
        %v1659 = vrot.slane %v1658, 4
        %v1660 = vrot.slane %v1536, 5
        %v1661 = vsel %vm1615, %v1659, %v1660
        %v1662 = vrot.slane %v1660, 4
        %v1663 = vrot.slane %v1537, 5
        %v1664 = vsel %vm1615, %v1662, %v1663
        %v1665 = vrot.slane %v1538, 5
        %v1666 = vrot.slane %v1665, 4
        %v1667 = vrot.slane %v1539, 5
        %v1668 = vsel %vm1615, %v1666, %v1667
        %v1669 = vrot.slane %v1667, 4
        %v1670 = vrot.slane %v1540, 5
        %v1671 = vsel %vm1615, %v1669, %v1670
        %v1672 = vrot.slane %v1541, 5
        %v1673 = vrot.slane %v1672, 4
        %v1674 = vrot.slane %v1542, 5
        %v1675 = vsel %vm1615, %v1673, %v1674
        %v1676 = vrot.slane %v1674, 4
        %v1677 = vrot.slane %v1543, 5
        %v1678 = vsel %vm1615, %v1676, %v1677
        %v1679 = vrot.slane %v1544, 5
        %v1680 = vrot.slane %v1679, 4
        %v1681 = vrot.slane %v1545, 5
        %v1682 = vsel %vm1615, %v1680, %v1681
        %v1683 = vrot.slane %v1681, 4
        %v1684 = vrot.slane %v1546, 5
        %v1685 = vsel %vm1615, %v1683, %v1684
        %v1686 = vrot.slane %v1547, 5
        %v1687 = vrot.slane %v1686, 4
        %v1688 = vrot.slane %v1548, 5
        %v1689 = vsel %vm1615, %v1687, %v1688
        %v1690 = vrot.slane %v1688, 4
        %v1691 = vrot.slane %v1549, 5
        %v1692 = vsel %vm1615, %v1690, %v1691
        %v1693 = vrot.slane %v1550, 5
        %v1694 = vrot.slane %v1693, 4
        %v1695 = vrot.slane %v1551, 5
        %v1696 = vsel %vm1615, %v1694, %v1695
        %v1697 = vrot.slane %v1695, 4
        %v1698 = vrot.slane %v1552, 5
        %v1699 = vsel %vm1615, %v1697, %v1698
        %v1700 = vrot.slane %v1553, 5
        %v1701 = vrot.slane %v1700, 4
        %v1702 = vrot.slane %v1554, 5
        %v1703 = vsel %vm1615, %v1701, %v1702
        %v1704 = vrot.slane %v1702, 4
        %v1705 = vrot.slane %v1555, 5
        %v1706 = vsel %vm1615, %v1704, %v1705
        %v1707 = vrot.slane %v1556, 5
        %v1708 = vrot.slane %v1707, 4
        %v1709 = vrot.slane %v1557, 5
        %v1710 = vsel %vm1615, %v1708, %v1709
        %v1711 = vrot.slane %v1709, 4
        %v1712 = vrot.slane %v1558, 5
        %v1713 = vsel %vm1615, %v1711, %v1712
        %v1714 = vrot.slane %v1559, 5
        %v1715 = vrot.slane %v1714, 4
        %v1716 = vrot.slane %v1560, 5
        %v1717 = vsel %vm1615, %v1715, %v1716
        %v1718 = vrot.slane %v1716, 4
        %v1719 = vrot.slane %v1561, 5
        %v1720 = vsel %vm1615, %v1718, %v1719
        %v1721 = vrot.slane %v1562, 5
        %v1722 = vrot.slane %v1721, 4
        %v1723 = vrot.slane %v1563, 5
        %v1724 = vsel %vm1615, %v1722, %v1723
        %v1725 = vrot.slane %v1723, 4
        %v1726 = vrot.slane %v1564, 5
        %v1727 = vsel %vm1615, %v1725, %v1726
        %v1728 = vld [vmem:[#allocation2] sm:$0xff]
        %v1729 = vld [vmem:[#allocation2 + $0x8] sm:$0xff]
        %v1730 = vld [vmem:[#allocation2 + $0x10] sm:$0xff]
        %v1731 = vld [vmem:[#allocation2 + $0x18] sm:$0xff]
        %v1732 = vld [vmem:[#allocation2 + $0x20] sm:$0xff]
        %v1733 = vld [vmem:[#allocation2 + $0x28] sm:$0xff]
        %v1734 = vld [vmem:[#allocation2 + $0x30] sm:$0xff]
        %v1735 = vld [vmem:[#allocation2 + $0x38] sm:$0xff]
        %v1736 = vld [vmem:[#allocation2 + $0x40] sm:$0xff]
        %v1737 = vld [vmem:[#allocation2 + $0x48] sm:$0xff]
        %v1738 = vld [vmem:[#allocation2 + $0x50] sm:$0xff]
        %v1739 = vld [vmem:[#allocation2 + $0x58] sm:$0xff]
        %v1740 = vld [vmem:[#allocation2 + $0x60] sm:$0xff]
        %v1741 = vld [vmem:[#allocation2 + $0x68] sm:$0xff]
        %v1742 = vld [vmem:[#allocation2 + $0x70] sm:$0xff]
        %v1743 = vld [vmem:[#allocation2 + $0x78] sm:$0xff]
        %v1744 = vld [vmem:[#allocation2 + $0x80] sm:$0xff]
        %v1745 = vld [vmem:[#allocation2 + $0x88] sm:$0xff]
        %v1746 = vld [vmem:[#allocation2 + $0x90] sm:$0xff]
        %v1747 = vld [vmem:[#allocation2 + $0x98] sm:$0xff]
        %v1748 = vld [vmem:[#allocation2 + $0xa0] sm:$0xff]
        %v1749 = vld [vmem:[#allocation2 + $0xa8] sm:$0xff]
        %v1750 = vld [vmem:[#allocation2 + $0xb0] sm:$0xff]
        %v1751 = vld [vmem:[#allocation2 + $0xb8] sm:$0xff]
        %v1752 = vld [vmem:[#allocation2 + $0xc0] sm:$0xff]
        %v1753 = vld [vmem:[#allocation2 + $0xc8] sm:$0xff]
        %v1754 = vld [vmem:[#allocation2 + $0xd0] sm:$0xff]
        %v1755 = vld [vmem:[#allocation2 + $0xd8] sm:$0xff]
        %v1756 = vld [vmem:[#allocation2 + $0xe0] sm:$0xff]
        %v1757 = vld [vmem:[#allocation2 + $0xe8] sm:$0xff]
        %v1758 = vld [vmem:[#allocation2 + $0xf0] sm:$0xff]
        %v1759 = vld [vmem:[#allocation2 + $0xf8] sm:$0xff]
        %v1760 = vld [vmem:[%s210 + $0x40] sm:$0xf]
        %v1761 = vld [vmem:[%s210 + $0x44] sm:$0xf]
        %v1762 = vld [vmem:[%s210 + $0x48] sm:$0xf]
        %v1763 = vld [vmem:[%s210 + $0x4c] sm:$0xf]
        %v1764 = vld [vmem:[%s210 + $0x50] sm:$0xf]
        %v1765 = vld [vmem:[%s210 + $0x54] sm:$0xf]
        %v1766 = vld [vmem:[%s210 + $0x58] sm:$0xf]
        %v1767 = vld [vmem:[%s210 + $0x5c] sm:$0xf]
        %v1768 = vunpack.c.l.b16 %v1619
        %v1769 = vunpack.c.l.b16 %v1622
        %v1770 = vunpack.c.l.b16 %v1626
        %v1771 = vunpack.c.l.b16 %v1629
        %v1772 = vunpack.c.l.b16 %v1633
        %v1773 = vunpack.c.l.b16 %v1636
        %v1774 = vunpack.c.l.b16 %v1640
        %v1775 = vunpack.c.l.b16 %v1643
        %v1776 = vunpack.c.l.b16 %v1647
        %v1777 = vunpack.c.l.b16 %v1650
        %v1778 = vunpack.c.l.b16 %v1654
        %v1779 = vunpack.c.l.b16 %v1657
        %v1780 = vunpack.c.l.b16 %v1661
        %v1781 = vunpack.c.l.b16 %v1664
        %v1782 = vunpack.c.l.b16 %v1668
        %v1783 = vunpack.c.l.b16 %v1671
        %v1784 = vunpack.c.l.b16 %v1675
        %v1785 = vunpack.c.l.b16 %v1678
        %v1786 = vunpack.c.l.b16 %v1682
        %v1787 = vunpack.c.l.b16 %v1685
        %v1788 = vunpack.c.l.b16 %v1689
        %v1789 = vunpack.c.l.b16 %v1692
        %v1790 = vunpack.c.l.b16 %v1696
        %v1791 = vunpack.c.l.b16 %v1699
        %v1792 = vunpack.c.l.b16 %v1703
        %v1793 = vunpack.c.l.b16 %v1706
        %v1794 = vunpack.c.l.b16 %v1710
        %v1795 = vunpack.c.l.b16 %v1713
        %v1796 = vunpack.c.l.b16 %v1717
        %v1797 = vunpack.c.l.b16 %v1720
        %v1798 = vunpack.c.l.b16 %v1724
        %v1799 = vunpack.c.l.b16 %v1727
        %v1800 = vpack.c.b16 %v1769, %v1768
        %v1801 = vpack.c.b16 %v1771, %v1770
        %v1802 = vpack.c.b16 %v1773, %v1772
        %v1803 = vpack.c.b16 %v1775, %v1774
        %v1804 = vpack.c.b16 %v1777, %v1776
        %v1805 = vpack.c.b16 %v1779, %v1778
        %v1806 = vpack.c.b16 %v1781, %v1780
        %v1807 = vpack.c.b16 %v1783, %v1782
        %v1808 = vpack.c.b16 %v1785, %v1784
        %v1809 = vpack.c.b16 %v1787, %v1786
        %v1810 = vpack.c.b16 %v1789, %v1788
        %v1811 = vpack.c.b16 %v1791, %v1790
        %v1812 = vpack.c.b16 %v1793, %v1792
        %v1813 = vpack.c.b16 %v1795, %v1794
        %v1814 = vpack.c.b16 %v1797, %v1796
        %v1815 = vpack.c.b16 %v1799, %v1798
        %v1824 = vunpack.c.l.b16 %v1760
        %v1825 = vunpack.c.l.b16 %v1761
        %v1826 = vunpack.c.l.b16 %v1762
        %v1827 = vunpack.c.l.b16 %v1763
        %v1828 = vunpack.c.l.b16 %v1764
        %v1829 = vunpack.c.l.b16 %v1765
        %v1830 = vunpack.c.l.b16 %v1766
        %v1831 = vunpack.c.l.b16 %v1767
        %v1832 = vpack.c.b16 %v1825, %v1824
        %v1833 = vpack.c.b16 %v1827, %v1826
        %v1834 = vpack.c.b16 %v1829, %v1828
        %v1835 = vpack.c.b16 %v1831, %v1830
        %v1841 = vsel %vm215, %v1800, 0
        %v1844 = vsel %vm215, %v1801, 0
        %v1847 = vsel %vm215, %v1802, 0
        %v1850 = vsel %vm215, %v1803, 0
        %v1853 = vsel %vm215, %v1804, 0
        %v1856 = vsel %vm215, %v1805, 0
        %v1859 = vsel %vm215, %v1806, 0
        %v1862 = vsel %vm215, %v1807, 0
        %v1865 = vsel %vm215, %v1808, 0
        %v1868 = vsel %vm215, %v1809, 0
        %v1871 = vsel %vm215, %v1810, 0
        %v1874 = vsel %vm215, %v1811, 0
        %v1877 = vsel %vm215, %v1812, 0
        %v1880 = vsel %vm215, %v1813, 0
        %v1883 = vsel %vm215, %v1814, 0
        %v1886 = vsel %vm215, %v1815, 0
        %1888 = vmatprep.subr.bf16.mxu0 0
        %1889 = vmatpush1.bf16.msra.mxu0 %v1832
        %1890 = vmatprep.subr.bf16.mxu0 0
        %1891 = vmatpush1.bf16.msra.mxu0 %v1833
        %1892 = vmatprep.subr.bf16.mxu0 0
        %1893 = vmatpush1.bf16.msra.mxu0 %v1834
        %1894 = vmatprep.subr.bf16.mxu0 0
        %1895 = vmatpush1.bf16.msra.mxu0 %v1835
        %1896 = vmatprep.subr.bf16.mxu0 0
        %1897 = vmatpush1.bf16.msra.mxu0 0
        %1898 = vmatprep.subr.bf16.mxu0 0
        %1899 = vmatpush1.bf16.msra.mxu0 0
        %1900 = vmatprep.subr.bf16.mxu0 0
        %1901 = vmatpush1.bf16.msra.mxu0 0
        %1902 = vmatprep.subr.bf16.mxu0 0
        %1903 = vmatpush1.bf16.msra.mxu0 0
        %1904 = vmatprep.subr.bf16.mxu0 0
        %1905 = vmatpush1.bf16.msra.mxu0 0
        %1906 = vmatprep.subr.bf16.mxu0 0
        %1907 = vmatpush1.bf16.msra.mxu0 0
        %1908 = vmatprep.subr.bf16.mxu0 0
        %1909 = vmatpush1.bf16.msra.mxu0 0
        %1910 = vmatprep.subr.bf16.mxu0 0
        %1911 = vmatpush1.bf16.msra.mxu0 0
        %1912 = vmatprep.subr.bf16.mxu0 0
        %1913 = vmatpush1.bf16.msra.mxu0 0
        %1914 = vmatprep.subr.bf16.mxu0 0
        %1915 = vmatpush1.bf16.msra.mxu0 0
        %1916 = vmatprep.subr.bf16.mxu0 0
        %1917 = vmatpush1.bf16.msra.mxu0 0
        %1918 = vmatprep.subr.bf16.mxu0 0
        %1919 = vmatpush1.bf16.msra.mxu0 0
        %1920 = vmatprep.mubr.bf16.mxu0 0
        %1921 = vmatmul.mubr.bf16.gmra.mrb[0].mxu0 %v1841
        %v1922 = vpop.f32.mrb[0].mxu0
        %v1923 = vadd.f32 0.0, %v1922
        %v1924 = vpop.f32.mrb[0].mxu0
        %v1925 = vpop.f32.mrb[0].mxu0
        %v1926 = vadd.f32 0.0, %v1925
        %v1927 = vpop.f32.mrb[0].mxu0
        %1928 = vmatprep.mubr.bf16.mxu0 0
        %1929 = vmatmul.mubr.bf16.gmra.mrb[0].mxu0 %v1844
        %v1930 = vpop.f32.mrb[0].mxu0
        %v1931 = vadd.f32 0.0, %v1930
        %v1932 = vpop.f32.mrb[0].mxu0
        %v1933 = vpop.f32.mrb[0].mxu0
        %v1934 = vadd.f32 0.0, %v1933
        %v1935 = vpop.f32.mrb[0].mxu0
        %1936 = vmatprep.mubr.bf16.mxu0 0
        %1937 = vmatmul.mubr.bf16.gmra.mrb[0].mxu0 %v1847
        %v1938 = vpop.f32.mrb[0].mxu0
        %v1939 = vadd.f32 0.0, %v1938
        %v1940 = vpop.f32.mrb[0].mxu0
        %v1941 = vpop.f32.mrb[0].mxu0
        %v1942 = vadd.f32 0.0, %v1941
        %v1943 = vpop.f32.mrb[0].mxu0
        %1944 = vmatprep.mubr.bf16.mxu0 0
        %1945 = vmatmul.mubr.bf16.gmra.mrb[0].mxu0 %v1850
        %v1946 = vpop.f32.mrb[0].mxu0
        %v1947 = vadd.f32 0.0, %v1946
        %v1948 = vpop.f32.mrb[0].mxu0
        %v1949 = vpop.f32.mrb[0].mxu0
        %v1950 = vadd.f32 0.0, %v1949
        %v1951 = vpop.f32.mrb[0].mxu0
        %1952 = vmatprep.mubr.bf16.mxu0 0
        %1953 = vmatmul.mubr.bf16.gmra.mrb[0].mxu0 %v1853
        %v1954 = vpop.f32.mrb[0].mxu0
        %v1955 = vadd.f32 0.0, %v1954
        %v1956 = vpop.f32.mrb[0].mxu0
        %v1957 = vpop.f32.mrb[0].mxu0
        %v1958 = vadd.f32 0.0, %v1957
        %v1959 = vpop.f32.mrb[0].mxu0
        %1960 = vmatprep.mubr.bf16.mxu0 0
        %1961 = vmatmul.mubr.bf16.gmra.mrb[0].mxu0 %v1856
        %v1962 = vpop.f32.mrb[0].mxu0
        %v1963 = vadd.f32 0.0, %v1962
        %v1964 = vpop.f32.mrb[0].mxu0
        %v1965 = vpop.f32.mrb[0].mxu0
        %v1966 = vadd.f32 0.0, %v1965
        %v1967 = vpop.f32.mrb[0].mxu0
        %1968 = vmatprep.mubr.bf16.mxu0 0
        %1969 = vmatmul.mubr.bf16.gmra.mrb[0].mxu0 %v1859
        %v1970 = vpop.f32.mrb[0].mxu0
        %v1971 = vadd.f32 0.0, %v1970
        %v1972 = vpop.f32.mrb[0].mxu0
        %v1973 = vpop.f32.mrb[0].mxu0
        %v1974 = vadd.f32 0.0, %v1973
        %v1975 = vpop.f32.mrb[0].mxu0
        %1976 = vmatprep.mubr.bf16.mxu0 0
        %1977 = vmatmul.mubr.bf16.gmra.mrb[0].mxu0 %v1862
        %v1978 = vpop.f32.mrb[0].mxu0
        %v1979 = vadd.f32 0.0, %v1978
        %v1980 = vpop.f32.mrb[0].mxu0
        %v1981 = vpop.f32.mrb[0].mxu0
        %v1982 = vadd.f32 0.0, %v1981
        %v1983 = vpop.f32.mrb[0].mxu0
        %1984 = vmatprep.mubr.bf16.mxu0 0
        %1985 = vmatmul.mubr.bf16.gmra.mrb[0].mxu0 %v1865
        %v1986 = vpop.f32.mrb[0].mxu0
        %v1987 = vadd.f32 0.0, %v1986
        %v1988 = vpop.f32.mrb[0].mxu0
        %v1989 = vpop.f32.mrb[0].mxu0
        %v1990 = vadd.f32 0.0, %v1989
        %v1991 = vpop.f32.mrb[0].mxu0
        %1992 = vmatprep.mubr.bf16.mxu0 0
        %1993 = vmatmul.mubr.bf16.gmra.mrb[0].mxu0 %v1868
        %v1994 = vpop.f32.mrb[0].mxu0
        %v1995 = vadd.f32 0.0, %v1994
        %v1996 = vpop.f32.mrb[0].mxu0
        %v1997 = vpop.f32.mrb[0].mxu0
        %v1998 = vadd.f32 0.0, %v1997
        %v1999 = vpop.f32.mrb[0].mxu0
        %2000 = vmatprep.mubr.bf16.mxu0 0
        %2001 = vmatmul.mubr.bf16.gmra.mrb[0].mxu0 %v1871
        %v2002 = vpop.f32.mrb[0].mxu0
        %v2003 = vadd.f32 0.0, %v2002
        %v2004 = vpop.f32.mrb[0].mxu0
        %v2005 = vpop.f32.mrb[0].mxu0
        %v2006 = vadd.f32 0.0, %v2005
        %v2007 = vpop.f32.mrb[0].mxu0
        %2008 = vmatprep.mubr.bf16.mxu0 0
        %2009 = vmatmul.mubr.bf16.gmra.mrb[0].mxu0 %v1874
        %v2010 = vpop.f32.mrb[0].mxu0
        %v2011 = vadd.f32 0.0, %v2010
        %v2012 = vpop.f32.mrb[0].mxu0
        %v2013 = vpop.f32.mrb[0].mxu0
        %v2014 = vadd.f32 0.0, %v2013
        %v2015 = vpop.f32.mrb[0].mxu0
        %2016 = vmatprep.mubr.bf16.mxu0 0
        %2017 = vmatmul.mubr.bf16.gmra.mrb[0].mxu0 %v1877
        %v2018 = vpop.f32.mrb[0].mxu0
        %v2019 = vadd.f32 0.0, %v2018
        %v2020 = vpop.f32.mrb[0].mxu0
        %v2021 = vpop.f32.mrb[0].mxu0
        %v2022 = vadd.f32 0.0, %v2021
        %v2023 = vpop.f32.mrb[0].mxu0
        %2024 = vmatprep.mubr.bf16.mxu0 0
        %2025 = vmatmul.mubr.bf16.gmra.mrb[0].mxu0 %v1880
        %v2026 = vpop.f32.mrb[0].mxu0
        %v2027 = vadd.f32 0.0, %v2026
        %v2028 = vpop.f32.mrb[0].mxu0
        %v2029 = vpop.f32.mrb[0].mxu0
        %v2030 = vadd.f32 0.0, %v2029
        %v2031 = vpop.f32.mrb[0].mxu0
        %2032 = vmatprep.mubr.bf16.mxu0 0
        %2033 = vmatmul.mubr.bf16.gmra.mrb[0].mxu0 %v1883
        %v2034 = vpop.f32.mrb[0].mxu0
        %v2035 = vadd.f32 0.0, %v2034
        %v2036 = vpop.f32.mrb[0].mxu0
        %v2037 = vpop.f32.mrb[0].mxu0
        %v2038 = vadd.f32 0.0, %v2037
        %v2039 = vpop.f32.mrb[0].mxu0
        %2040 = vmatprep.mubr.bf16.mxu0 0
        %2041 = vmatmul.mubr.bf16.gmra.mrb[0].mxu0 %v1886
        %v2042 = vpop.f32.mrb[0].mxu0
        %v2043 = vadd.f32 0.0, %v2042
        %v2044 = vpop.f32.mrb[0].mxu0
        %v2045 = vpop.f32.mrb[0].mxu0
        %v2046 = vadd.f32 0.0, %v2045
        %v2047 = vpop.f32.mrb[0].mxu0
        %2048 = vdwg.mxu0
        %v2049 = vadd.f32 %v1728, %v1923
        %v2050 = vadd.f32 %v1729, %v1926
        %v2051 = vadd.f32 %v1730, %v1931
        %v2052 = vadd.f32 %v1731, %v1934
        %v2053 = vadd.f32 %v1732, %v1939
        %v2054 = vadd.f32 %v1733, %v1942
        %v2055 = vadd.f32 %v1734, %v1947
        %v2056 = vadd.f32 %v1735, %v1950
        %v2057 = vadd.f32 %v1736, %v1955
        %v2058 = vadd.f32 %v1737, %v1958
        %v2059 = vadd.f32 %v1738, %v1963
        %v2060 = vadd.f32 %v1739, %v1966
        %v2061 = vadd.f32 %v1740, %v1971
        %v2062 = vadd.f32 %v1741, %v1974
        %v2063 = vadd.f32 %v1742, %v1979
        %v2064 = vadd.f32 %v1743, %v1982
        %v2065 = vadd.f32 %v1744, %v1987
        %v2066 = vadd.f32 %v1745, %v1990
        %v2067 = vadd.f32 %v1746, %v1995
        %v2068 = vadd.f32 %v1747, %v1998
        %v2069 = vadd.f32 %v1748, %v2003
        %v2070 = vadd.f32 %v1749, %v2006
        %v2071 = vadd.f32 %v1750, %v2011
        %v2072 = vadd.f32 %v1751, %v2014
        %v2073 = vadd.f32 %v1752, %v2019
        %v2074 = vadd.f32 %v1753, %v2022
        %v2075 = vadd.f32 %v1754, %v2027
        %v2076 = vadd.f32 %v1755, %v2030
        %v2077 = vadd.f32 %v1756, %v2035
        %v2078 = vadd.f32 %v1757, %v2038
        %v2079 = vadd.f32 %v1758, %v2043
        %v2080 = vadd.f32 %v1759, %v2046
        %2081 = vst.msk [vmem:[#allocation2] sm:$0xff] %vm215, %v2049
        %2082 = vst.msk [vmem:[#allocation2 + $0x8] sm:$0xff] %vm215, %v2050
        %2083 = vst.msk [vmem:[#allocation2 + $0x10] sm:$0xff] %vm215, %v2051
        %2084 = vst.msk [vmem:[#allocation2 + $0x18] sm:$0xff] %vm215, %v2052
        %2085 = vst.msk [vmem:[#allocation2 + $0x20] sm:$0xff] %vm215, %v2053
        %2086 = vst.msk [vmem:[#allocation2 + $0x28] sm:$0xff] %vm215, %v2054
        %2087 = vst.msk [vmem:[#allocation2 + $0x30] sm:$0xff] %vm215, %v2055
        %2088 = vst.msk [vmem:[#allocation2 + $0x38] sm:$0xff] %vm215, %v2056
        %2089 = vst.msk [vmem:[#allocation2 + $0x40] sm:$0xff] %vm215, %v2057
        %2090 = vst.msk [vmem:[#allocation2 + $0x48] sm:$0xff] %vm215, %v2058
        %2091 = vst.msk [vmem:[#allocation2 + $0x50] sm:$0xff] %vm215, %v2059
        %2092 = vst.msk [vmem:[#allocation2 + $0x58] sm:$0xff] %vm215, %v2060
        %2093 = vst.msk [vmem:[#allocation2 + $0x60] sm:$0xff] %vm215, %v2061
        %2094 = vst.msk [vmem:[#allocation2 + $0x68] sm:$0xff] %vm215, %v2062
        %2095 = vst.msk [vmem:[#allocation2 + $0x70] sm:$0xff] %vm215, %v2063
        %2096 = vst.msk [vmem:[#allocation2 + $0x78] sm:$0xff] %vm215, %v2064
        %2097 = vst.msk [vmem:[#allocation2 + $0x80] sm:$0xff] %vm215, %v2065
        %2098 = vst.msk [vmem:[#allocation2 + $0x88] sm:$0xff] %vm215, %v2066
        %2099 = vst.msk [vmem:[#allocation2 + $0x90] sm:$0xff] %vm215, %v2067
        %2100 = vst.msk [vmem:[#allocation2 + $0x98] sm:$0xff] %vm215, %v2068
        %2101 = vst.msk [vmem:[#allocation2 + $0xa0] sm:$0xff] %vm215, %v2069
        %2102 = vst.msk [vmem:[#allocation2 + $0xa8] sm:$0xff] %vm215, %v2070
        %2103 = vst.msk [vmem:[#allocation2 + $0xb0] sm:$0xff] %vm215, %v2071
        %2104 = vst.msk [vmem:[#allocation2 + $0xb8] sm:$0xff] %vm215, %v2072
        %2105 = vst.msk [vmem:[#allocation2 + $0xc0] sm:$0xff] %vm215, %v2073
        %2106 = vst.msk [vmem:[#allocation2 + $0xc8] sm:$0xff] %vm215, %v2074
        %2107 = vst.msk [vmem:[#allocation2 + $0xd0] sm:$0xff] %vm215, %v2075
        %2108 = vst.msk [vmem:[#allocation2 + $0xd8] sm:$0xff] %vm215, %v2076
        %2109 = vst.msk [vmem:[#allocation2 + $0xe0] sm:$0xff] %vm215, %v2077
        %2110 = vst.msk [vmem:[#allocation2 + $0xe8] sm:$0xff] %vm215, %v2078
        %2111 = vst.msk [vmem:[#allocation2 + $0xf0] sm:$0xff] %vm215, %v2079
        %2112 = vst.msk [vmem:[#allocation2 + $0xf8] sm:$0xff] %vm215, %v2080
        %s2113 = scalar_lea.vmem %s206, 12
        %v2114 = vld [vmem:[%s2113] sm:$0xf]
        %v2115 = vld [vmem:[%s2113 + $0x4] sm:$0xf]
        %v2116 = vld [vmem:[%s2113 + $0xc] sm:$0xf]
        %v2117 = vld [vmem:[%s2113 + $0x10] sm:$0xf]
        %v2118 = vld [vmem:[%s2113 + $0x18] sm:$0xf]
        %v2119 = vld [vmem:[%s2113 + $0x1c] sm:$0xf]
        %v2120 = vld [vmem:[%s2113 + $0x24] sm:$0xf]
        %v2121 = vld [vmem:[%s2113 + $0x28] sm:$0xf]
        %v2122 = vld [vmem:[%s2113 + $0x30] sm:$0xf]
        %v2123 = vld [vmem:[%s2113 + $0x34] sm:$0xf]
        %v2124 = vld [vmem:[%s2113 + $0x3c] sm:$0xf]
        %v2125 = vld [vmem:[%s2113 + $0x40] sm:$0xf]
        %v2126 = vld [vmem:[%s2113 + $0x48] sm:$0xf]
        %v2127 = vld [vmem:[%s2113 + $0x4c] sm:$0xf]
        %v2128 = vld [vmem:[%s2113 + $0x54] sm:$0xf]
        %v2129 = vld [vmem:[%s2113 + $0x58] sm:$0xf]
        %v2130 = vld [vmem:[%s2113 + $0x60] sm:$0xf]
        %v2131 = vld [vmem:[%s2113 + $0x64] sm:$0xf]
        %v2132 = vld [vmem:[%s2113 + $0x6c] sm:$0xf]
        %v2133 = vld [vmem:[%s2113 + $0x70] sm:$0xf]
        %v2134 = vld [vmem:[%s2113 + $0x78] sm:$0xf]
        %v2135 = vld [vmem:[%s2113 + $0x7c] sm:$0xf]
        %v2136 = vld [vmem:[%s2113 + $0x84] sm:$0xf]
        %v2137 = vld [vmem:[%s2113 + $0x88] sm:$0xf]
        %v2138 = vld [vmem:[%s2113 + $0x90] sm:$0xf]
        %v2139 = vld [vmem:[%s2113 + $0x94] sm:$0xf]
        %v2140 = vld [vmem:[%s2113 + $0x9c] sm:$0xf]
        %v2141 = vld [vmem:[%s2113 + $0xa0] sm:$0xf]
        %v2142 = vld [vmem:[%s2113 + $0xa8] sm:$0xf]
        %v2143 = vld [vmem:[%s2113 + $0xac] sm:$0xf]
        %v2144 = vld [vmem:[%s2113 + $0xb4] sm:$0xf]
        %v2145 = vld [vmem:[%s2113 + $0xb8] sm:$0xf]
        %v2146 = vld [vmem:[#allocation2] sm:$0xff]
        %v2147 = vld [vmem:[#allocation2 + $0x8] sm:$0xff]
        %v2148 = vld [vmem:[#allocation2 + $0x10] sm:$0xff]
        %v2149 = vld [vmem:[#allocation2 + $0x18] sm:$0xff]
        %v2150 = vld [vmem:[#allocation2 + $0x20] sm:$0xff]
        %v2151 = vld [vmem:[#allocation2 + $0x28] sm:$0xff]
        %v2152 = vld [vmem:[#allocation2 + $0x30] sm:$0xff]
        %v2153 = vld [vmem:[#allocation2 + $0x38] sm:$0xff]
        %v2154 = vld [vmem:[#allocation2 + $0x40] sm:$0xff]
        %v2155 = vld [vmem:[#allocation2 + $0x48] sm:$0xff]
        %v2156 = vld [vmem:[#allocation2 + $0x50] sm:$0xff]
        %v2157 = vld [vmem:[#allocation2 + $0x58] sm:$0xff]
        %v2158 = vld [vmem:[#allocation2 + $0x60] sm:$0xff]
        %v2159 = vld [vmem:[#allocation2 + $0x68] sm:$0xff]
        %v2160 = vld [vmem:[#allocation2 + $0x70] sm:$0xff]
        %v2161 = vld [vmem:[#allocation2 + $0x78] sm:$0xff]
        %v2162 = vld [vmem:[#allocation2 + $0x80] sm:$0xff]
        %v2163 = vld [vmem:[#allocation2 + $0x88] sm:$0xff]
        %v2164 = vld [vmem:[#allocation2 + $0x90] sm:$0xff]
        %v2165 = vld [vmem:[#allocation2 + $0x98] sm:$0xff]
        %v2166 = vld [vmem:[#allocation2 + $0xa0] sm:$0xff]
        %v2167 = vld [vmem:[#allocation2 + $0xa8] sm:$0xff]
        %v2168 = vld [vmem:[#allocation2 + $0xb0] sm:$0xff]
        %v2169 = vld [vmem:[#allocation2 + $0xb8] sm:$0xff]
        %v2170 = vld [vmem:[#allocation2 + $0xc0] sm:$0xff]
        %v2171 = vld [vmem:[#allocation2 + $0xc8] sm:$0xff]
        %v2172 = vld [vmem:[#allocation2 + $0xd0] sm:$0xff]
        %v2173 = vld [vmem:[#allocation2 + $0xd8] sm:$0xff]
        %v2174 = vld [vmem:[#allocation2 + $0xe0] sm:$0xff]
        %v2175 = vld [vmem:[#allocation2 + $0xe8] sm:$0xff]
        %v2176 = vld [vmem:[#allocation2 + $0xf0] sm:$0xff]
        %v2177 = vld [vmem:[#allocation2 + $0xf8] sm:$0xff]
        %v2178 = vld [vmem:[%s210 + $0x60] sm:$0xf]
        %v2179 = vld [vmem:[%s210 + $0x64] sm:$0xf]
        %v2180 = vld [vmem:[%s210 + $0x68] sm:$0xf]
        %v2181 = vld [vmem:[%s210 + $0x6c] sm:$0xf]
        %v2182 = vld [vmem:[%s210 + $0x70] sm:$0xf]
        %v2183 = vld [vmem:[%s210 + $0x74] sm:$0xf]
        %v2184 = vld [vmem:[%s210 + $0x78] sm:$0xf]
        %v2185 = vld [vmem:[%s210 + $0x7c] sm:$0xf]
        %v2218 = vunpack.c.l.b16 %v2114
        %v2219 = vunpack.c.l.b16 %v2115
        %v2220 = vunpack.c.l.b16 %v2116
        %v2221 = vunpack.c.l.b16 %v2117
        %v2222 = vunpack.c.l.b16 %v2118
        %v2223 = vunpack.c.l.b16 %v2119
        %v2224 = vunpack.c.l.b16 %v2120
        %v2225 = vunpack.c.l.b16 %v2121
        %v2226 = vunpack.c.l.b16 %v2122
        %v2227 = vunpack.c.l.b16 %v2123
        %v2228 = vunpack.c.l.b16 %v2124
        %v2229 = vunpack.c.l.b16 %v2125
        %v2230 = vunpack.c.l.b16 %v2126
        %v2231 = vunpack.c.l.b16 %v2127
        %v2232 = vunpack.c.l.b16 %v2128
        %v2233 = vunpack.c.l.b16 %v2129
        %v2234 = vunpack.c.l.b16 %v2130
        %v2235 = vunpack.c.l.b16 %v2131
        %v2236 = vunpack.c.l.b16 %v2132
        %v2237 = vunpack.c.l.b16 %v2133
        %v2238 = vunpack.c.l.b16 %v2134
        %v2239 = vunpack.c.l.b16 %v2135
        %v2240 = vunpack.c.l.b16 %v2136
        %v2241 = vunpack.c.l.b16 %v2137
        %v2242 = vunpack.c.l.b16 %v2138
        %v2243 = vunpack.c.l.b16 %v2139
        %v2244 = vunpack.c.l.b16 %v2140
        %v2245 = vunpack.c.l.b16 %v2141
        %v2246 = vunpack.c.l.b16 %v2142
        %v2247 = vunpack.c.l.b16 %v2143
        %v2248 = vunpack.c.l.b16 %v2144
        %v2249 = vunpack.c.l.b16 %v2145
        %v2250 = vpack.c.b16 %v2219, %v2218
        %v2251 = vpack.c.b16 %v2221, %v2220
        %v2252 = vpack.c.b16 %v2223, %v2222
        %v2253 = vpack.c.b16 %v2225, %v2224
        %v2254 = vpack.c.b16 %v2227, %v2226
        %v2255 = vpack.c.b16 %v2229, %v2228
        %v2256 = vpack.c.b16 %v2231, %v2230
        %v2257 = vpack.c.b16 %v2233, %v2232
        %v2258 = vpack.c.b16 %v2235, %v2234
        %v2259 = vpack.c.b16 %v2237, %v2236
        %v2260 = vpack.c.b16 %v2239, %v2238
        %v2261 = vpack.c.b16 %v2241, %v2240
        %v2262 = vpack.c.b16 %v2243, %v2242
        %v2263 = vpack.c.b16 %v2245, %v2244
        %v2264 = vpack.c.b16 %v2247, %v2246
        %v2265 = vpack.c.b16 %v2249, %v2248
        %v2274 = vunpack.c.l.b16 %v2178
        %v2275 = vunpack.c.l.b16 %v2179
        %v2276 = vunpack.c.l.b16 %v2180
        %v2277 = vunpack.c.l.b16 %v2181
        %v2278 = vunpack.c.l.b16 %v2182
        %v2279 = vunpack.c.l.b16 %v2183
        %v2280 = vunpack.c.l.b16 %v2184
        %v2281 = vunpack.c.l.b16 %v2185
        %v2282 = vpack.c.b16 %v2275, %v2274
        %v2283 = vpack.c.b16 %v2277, %v2276
        %v2284 = vpack.c.b16 %v2279, %v2278
        %v2285 = vpack.c.b16 %v2281, %v2280
        %v2291 = vsel %vm215, %v2250, 0
        %v2294 = vsel %vm215, %v2251, 0
        %v2297 = vsel %vm215, %v2252, 0
        %v2300 = vsel %vm215, %v2253, 0
        %v2303 = vsel %vm215, %v2254, 0
        %v2306 = vsel %vm215, %v2255, 0
        %v2309 = vsel %vm215, %v2256, 0
        %v2312 = vsel %vm215, %v2257, 0
        %v2315 = vsel %vm215, %v2258, 0
        %v2318 = vsel %vm215, %v2259, 0
        %v2321 = vsel %vm215, %v2260, 0
        %v2324 = vsel %vm215, %v2261, 0
        %v2327 = vsel %vm215, %v2262, 0
        %v2330 = vsel %vm215, %v2263, 0
        %v2333 = vsel %vm215, %v2264, 0
        %v2336 = vsel %vm215, %v2265, 0
        %2338 = vmatprep.subr.bf16.mxu0 0
        %2339 = vmatpush1.bf16.msra.mxu0 %v2282
        %2340 = vmatprep.subr.bf16.mxu0 0
        %2341 = vmatpush1.bf16.msra.mxu0 %v2283
        %2342 = vmatprep.subr.bf16.mxu0 0
        %2343 = vmatpush1.bf16.msra.mxu0 %v2284
        %2344 = vmatprep.subr.bf16.mxu0 0
        %2345 = vmatpush1.bf16.msra.mxu0 %v2285
        %2346 = vmatprep.subr.bf16.mxu0 0
        %2347 = vmatpush1.bf16.msra.mxu0 0
        %2348 = vmatprep.subr.bf16.mxu0 0
        %2349 = vmatpush1.bf16.msra.mxu0 0
        %2350 = vmatprep.subr.bf16.mxu0 0
        %2351 = vmatpush1.bf16.msra.mxu0 0
        %2352 = vmatprep.subr.bf16.mxu0 0
        %2353 = vmatpush1.bf16.msra.mxu0 0
        %2354 = vmatprep.subr.bf16.mxu0 0
        %2355 = vmatpush1.bf16.msra.mxu0 0
        %2356 = vmatprep.subr.bf16.mxu0 0
        %2357 = vmatpush1.bf16.msra.mxu0 0
        %2358 = vmatprep.subr.bf16.mxu0 0
        %2359 = vmatpush1.bf16.msra.mxu0 0
        %2360 = vmatprep.subr.bf16.mxu0 0
        %2361 = vmatpush1.bf16.msra.mxu0 0
        %2362 = vmatprep.subr.bf16.mxu0 0
        %2363 = vmatpush1.bf16.msra.mxu0 0
        %2364 = vmatprep.subr.bf16.mxu0 0
        %2365 = vmatpush1.bf16.msra.mxu0 0
        %2366 = vmatprep.subr.bf16.mxu0 0
        %2367 = vmatpush1.bf16.msra.mxu0 0
        %2368 = vmatprep.subr.bf16.mxu0 0
        %2369 = vmatpush1.bf16.msra.mxu0 0
        %2370 = vmatprep.mubr.bf16.mxu0 0
        %2371 = vmatmul.mubr.bf16.gmra.mrb[0].mxu0 %v2291
        %v2372 = vpop.f32.mrb[0].mxu0
        %v2373 = vadd.f32 0.0, %v2372
        %v2374 = vpop.f32.mrb[0].mxu0
        %v2375 = vpop.f32.mrb[0].mxu0
        %v2376 = vadd.f32 0.0, %v2375
        %v2377 = vpop.f32.mrb[0].mxu0
        %2378 = vmatprep.mubr.bf16.mxu0 0
        %2379 = vmatmul.mubr.bf16.gmra.mrb[0].mxu0 %v2294
        %v2380 = vpop.f32.mrb[0].mxu0
        %v2381 = vadd.f32 0.0, %v2380
        %v2382 = vpop.f32.mrb[0].mxu0
        %v2383 = vpop.f32.mrb[0].mxu0
        %v2384 = vadd.f32 0.0, %v2383
        %v2385 = vpop.f32.mrb[0].mxu0
        %2386 = vmatprep.mubr.bf16.mxu0 0
        %2387 = vmatmul.mubr.bf16.gmra.mrb[0].mxu0 %v2297
        %v2388 = vpop.f32.mrb[0].mxu0
        %v2389 = vadd.f32 0.0, %v2388
        %v2390 = vpop.f32.mrb[0].mxu0
        %v2391 = vpop.f32.mrb[0].mxu0
        %v2392 = vadd.f32 0.0, %v2391
        %v2393 = vpop.f32.mrb[0].mxu0
        %2394 = vmatprep.mubr.bf16.mxu0 0
        %2395 = vmatmul.mubr.bf16.gmra.mrb[0].mxu0 %v2300
        %v2396 = vpop.f32.mrb[0].mxu0
        %v2397 = vadd.f32 0.0, %v2396
        %v2398 = vpop.f32.mrb[0].mxu0
        %v2399 = vpop.f32.mrb[0].mxu0
        %v2400 = vadd.f32 0.0, %v2399
        %v2401 = vpop.f32.mrb[0].mxu0
        %2402 = vmatprep.mubr.bf16.mxu0 0
        %2403 = vmatmul.mubr.bf16.gmra.mrb[0].mxu0 %v2303
        %v2404 = vpop.f32.mrb[0].mxu0
        %v2405 = vadd.f32 0.0, %v2404
        %v2406 = vpop.f32.mrb[0].mxu0
        %v2407 = vpop.f32.mrb[0].mxu0
        %v2408 = vadd.f32 0.0, %v2407
        %v2409 = vpop.f32.mrb[0].mxu0
        %2410 = vmatprep.mubr.bf16.mxu0 0
        %2411 = vmatmul.mubr.bf16.gmra.mrb[0].mxu0 %v2306
        %v2412 = vpop.f32.mrb[0].mxu0
        %v2413 = vadd.f32 0.0, %v2412
        %v2414 = vpop.f32.mrb[0].mxu0
        %v2415 = vpop.f32.mrb[0].mxu0
        %v2416 = vadd.f32 0.0, %v2415
        %v2417 = vpop.f32.mrb[0].mxu0
        %2418 = vmatprep.mubr.bf16.mxu0 0
        %2419 = vmatmul.mubr.bf16.gmra.mrb[0].mxu0 %v2309
        %v2420 = vpop.f32.mrb[0].mxu0
        %v2421 = vadd.f32 0.0, %v2420
        %v2422 = vpop.f32.mrb[0].mxu0
        %v2423 = vpop.f32.mrb[0].mxu0
        %v2424 = vadd.f32 0.0, %v2423
        %v2425 = vpop.f32.mrb[0].mxu0
        %2426 = vmatprep.mubr.bf16.mxu0 0
        %2427 = vmatmul.mubr.bf16.gmra.mrb[0].mxu0 %v2312
        %v2428 = vpop.f32.mrb[0].mxu0
        %v2429 = vadd.f32 0.0, %v2428
        %v2430 = vpop.f32.mrb[0].mxu0
        %v2431 = vpop.f32.mrb[0].mxu0
        %v2432 = vadd.f32 0.0, %v2431
        %v2433 = vpop.f32.mrb[0].mxu0
        %2434 = vmatprep.mubr.bf16.mxu0 0
        %2435 = vmatmul.mubr.bf16.gmra.mrb[0].mxu0 %v2315
        %v2436 = vpop.f32.mrb[0].mxu0
        %v2437 = vadd.f32 0.0, %v2436
        %v2438 = vpop.f32.mrb[0].mxu0
        %v2439 = vpop.f32.mrb[0].mxu0
        %v2440 = vadd.f32 0.0, %v2439
        %v2441 = vpop.f32.mrb[0].mxu0
        %2442 = vmatprep.mubr.bf16.mxu0 0
        %2443 = vmatmul.mubr.bf16.gmra.mrb[0].mxu0 %v2318
        %v2444 = vpop.f32.mrb[0].mxu0
        %v2445 = vadd.f32 0.0, %v2444
        %v2446 = vpop.f32.mrb[0].mxu0
        %v2447 = vpop.f32.mrb[0].mxu0
        %v2448 = vadd.f32 0.0, %v2447
        %v2449 = vpop.f32.mrb[0].mxu0
        %2450 = vmatprep.mubr.bf16.mxu0 0
        %2451 = vmatmul.mubr.bf16.gmra.mrb[0].mxu0 %v2321
        %v2452 = vpop.f32.mrb[0].mxu0
        %v2453 = vadd.f32 0.0, %v2452
        %v2454 = vpop.f32.mrb[0].mxu0
        %v2455 = vpop.f32.mrb[0].mxu0
        %v2456 = vadd.f32 0.0, %v2455
        %v2457 = vpop.f32.mrb[0].mxu0
        %2458 = vmatprep.mubr.bf16.mxu0 0
        %2459 = vmatmul.mubr.bf16.gmra.mrb[0].mxu0 %v2324
        %v2460 = vpop.f32.mrb[0].mxu0
        %v2461 = vadd.f32 0.0, %v2460
        %v2462 = vpop.f32.mrb[0].mxu0
        %v2463 = vpop.f32.mrb[0].mxu0
        %v2464 = vadd.f32 0.0, %v2463
        %v2465 = vpop.f32.mrb[0].mxu0
        %2466 = vmatprep.mubr.bf16.mxu0 0
        %2467 = vmatmul.mubr.bf16.gmra.mrb[0].mxu0 %v2327
        %v2468 = vpop.f32.mrb[0].mxu0
        %v2469 = vadd.f32 0.0, %v2468
        %v2470 = vpop.f32.mrb[0].mxu0
        %v2471 = vpop.f32.mrb[0].mxu0
        %v2472 = vadd.f32 0.0, %v2471
        %v2473 = vpop.f32.mrb[0].mxu0
        %2474 = vmatprep.mubr.bf16.mxu0 0
        %2475 = vmatmul.mubr.bf16.gmra.mrb[0].mxu0 %v2330
        %v2476 = vpop.f32.mrb[0].mxu0
        %v2477 = vadd.f32 0.0, %v2476
        %v2478 = vpop.f32.mrb[0].mxu0
        %v2479 = vpop.f32.mrb[0].mxu0
        %v2480 = vadd.f32 0.0, %v2479
        %v2481 = vpop.f32.mrb[0].mxu0
        %2482 = vmatprep.mubr.bf16.mxu0 0
        %2483 = vmatmul.mubr.bf16.gmra.mrb[0].mxu0 %v2333
        %v2484 = vpop.f32.mrb[0].mxu0
        %v2485 = vadd.f32 0.0, %v2484
        %v2486 = vpop.f32.mrb[0].mxu0
        %v2487 = vpop.f32.mrb[0].mxu0
        %v2488 = vadd.f32 0.0, %v2487
        %v2489 = vpop.f32.mrb[0].mxu0
        %2490 = vmatprep.mubr.bf16.mxu0 0
        %2491 = vmatmul.mubr.bf16.gmra.mrb[0].mxu0 %v2336
        %v2492 = vpop.f32.mrb[0].mxu0
        %v2493 = vadd.f32 0.0, %v2492
        %v2494 = vpop.f32.mrb[0].mxu0
        %v2495 = vpop.f32.mrb[0].mxu0
        %v2496 = vadd.f32 0.0, %v2495
        %v2497 = vpop.f32.mrb[0].mxu0
        %2498 = vdwg.mxu0
        %v2499 = vadd.f32 %v2146, %v2373
        %v2500 = vadd.f32 %v2147, %v2376
        %v2501 = vadd.f32 %v2148, %v2381
        %v2502 = vadd.f32 %v2149, %v2384
        %v2503 = vadd.f32 %v2150, %v2389
        %v2504 = vadd.f32 %v2151, %v2392
        %v2505 = vadd.f32 %v2152, %v2397
        %v2506 = vadd.f32 %v2153, %v2400
        %v2507 = vadd.f32 %v2154, %v2405
        %v2508 = vadd.f32 %v2155, %v2408
        %v2509 = vadd.f32 %v2156, %v2413
        %v2510 = vadd.f32 %v2157, %v2416
        %v2511 = vadd.f32 %v2158, %v2421
        %v2512 = vadd.f32 %v2159, %v2424
        %v2513 = vadd.f32 %v2160, %v2429
        %v2514 = vadd.f32 %v2161, %v2432
        %v2515 = vadd.f32 %v2162, %v2437
        %v2516 = vadd.f32 %v2163, %v2440
        %v2517 = vadd.f32 %v2164, %v2445
        %v2518 = vadd.f32 %v2165, %v2448
        %v2519 = vadd.f32 %v2166, %v2453
        %v2520 = vadd.f32 %v2167, %v2456
        %v2521 = vadd.f32 %v2168, %v2461
        %v2522 = vadd.f32 %v2169, %v2464
        %v2523 = vadd.f32 %v2170, %v2469
        %v2524 = vadd.f32 %v2171, %v2472
        %v2525 = vadd.f32 %v2172, %v2477
        %v2526 = vadd.f32 %v2173, %v2480
        %v2527 = vadd.f32 %v2174, %v2485
        %v2528 = vadd.f32 %v2175, %v2488
        %v2529 = vadd.f32 %v2176, %v2493
        %v2530 = vadd.f32 %v2177, %v2496
        %2531 = vst.msk [vmem:[#allocation2] sm:$0xff] %vm215, %v2499
        %2532 = vst.msk [vmem:[#allocation2 + $0x8] sm:$0xff] %vm215, %v2500
        %2533 = vst.msk [vmem:[#allocation2 + $0x10] sm:$0xff] %vm215, %v2501
        %2534 = vst.msk [vmem:[#allocation2 + $0x18] sm:$0xff] %vm215, %v2502
        %2535 = vst.msk [vmem:[#allocation2 + $0x20] sm:$0xff] %vm215, %v2503
        %2536 = vst.msk [vmem:[#allocation2 + $0x28] sm:$0xff] %vm215, %v2504
        %2537 = vst.msk [vmem:[#allocation2 + $0x30] sm:$0xff] %vm215, %v2505
        %2538 = vst.msk [vmem:[#allocation2 + $0x38] sm:$0xff] %vm215, %v2506
        %2539 = vst.msk [vmem:[#allocation2 + $0x40] sm:$0xff] %vm215, %v2507
        %2540 = vst.msk [vmem:[#allocation2 + $0x48] sm:$0xff] %vm215, %v2508
        %2541 = vst.msk [vmem:[#allocation2 + $0x50] sm:$0xff] %vm215, %v2509
        %2542 = vst.msk [vmem:[#allocation2 + $0x58] sm:$0xff] %vm215, %v2510
        %2543 = vst.msk [vmem:[#allocation2 + $0x60] sm:$0xff] %vm215, %v2511
        %2544 = vst.msk [vmem:[#allocation2 + $0x68] sm:$0xff] %vm215, %v2512
        %2545 = vst.msk [vmem:[#allocation2 + $0x70] sm:$0xff] %vm215, %v2513
        %2546 = vst.msk [vmem:[#allocation2 + $0x78] sm:$0xff] %vm215, %v2514
        %2547 = vst.msk [vmem:[#allocation2 + $0x80] sm:$0xff] %vm215, %v2515
        %2548 = vst.msk [vmem:[#allocation2 + $0x88] sm:$0xff] %vm215, %v2516
        %2549 = vst.msk [vmem:[#allocation2 + $0x90] sm:$0xff] %vm215, %v2517
        %2550 = vst.msk [vmem:[#allocation2 + $0x98] sm:$0xff] %vm215, %v2518
        %2551 = vst.msk [vmem:[#allocation2 + $0xa0] sm:$0xff] %vm215, %v2519
        %2552 = vst.msk [vmem:[#allocation2 + $0xa8] sm:$0xff] %vm215, %v2520
        %2553 = vst.msk [vmem:[#allocation2 + $0xb0] sm:$0xff] %vm215, %v2521
        %2554 = vst.msk [vmem:[#allocation2 + $0xb8] sm:$0xff] %vm215, %v2522
        %2555 = vst.msk [vmem:[#allocation2 + $0xc0] sm:$0xff] %vm215, %v2523
        %2556 = vst.msk [vmem:[#allocation2 + $0xc8] sm:$0xff] %vm215, %v2524
        %2557 = vst.msk [vmem:[#allocation2 + $0xd0] sm:$0xff] %vm215, %v2525
        %2558 = vst.msk [vmem:[#allocation2 + $0xd8] sm:$0xff] %vm215, %v2526
        %2559 = vst.msk [vmem:[#allocation2 + $0xe0] sm:$0xff] %vm215, %v2527
        %2560 = vst.msk [vmem:[#allocation2 + $0xe8] sm:$0xff] %vm215, %v2528
        %2561 = vst.msk [vmem:[#allocation2 + $0xf0] sm:$0xff] %vm215, %v2529
        %2562 = vst.msk [vmem:[#allocation2 + $0xf8] sm:$0xff] %vm215, %v2530
        %v2563 = vld [vmem:[%s2113] sm:$0xf]
        %v2564 = vld [vmem:[%s2113 + $0x4] sm:$0xf]
        %v2565 = vld [vmem:[%s2113 + $0x8] sm:$0x1]
        %v2566 = vld [vmem:[%s2113 + $0xc] sm:$0xf]
        %v2567 = vld [vmem:[%s2113 + $0x10] sm:$0xf]
        %v2568 = vld [vmem:[%s2113 + $0x14] sm:$0x1]
        %v2569 = vld [vmem:[%s2113 + $0x18] sm:$0xf]
        %v2570 = vld [vmem:[%s2113 + $0x1c] sm:$0xf]
        %v2571 = vld [vmem:[%s2113 + $0x20] sm:$0x1]
        %v2572 = vld [vmem:[%s2113 + $0x24] sm:$0xf]
        %v2573 = vld [vmem:[%s2113 + $0x28] sm:$0xf]
        %v2574 = vld [vmem:[%s2113 + $0x2c] sm:$0x1]
        %v2575 = vld [vmem:[%s2113 + $0x30] sm:$0xf]
        %v2576 = vld [vmem:[%s2113 + $0x34] sm:$0xf]
        %v2577 = vld [vmem:[%s2113 + $0x38] sm:$0x1]
        %v2578 = vld [vmem:[%s2113 + $0x3c] sm:$0xf]
        %v2579 = vld [vmem:[%s2113 + $0x40] sm:$0xf]
        %v2580 = vld [vmem:[%s2113 + $0x44] sm:$0x1]
        %v2581 = vld [vmem:[%s2113 + $0x48] sm:$0xf]
        %v2582 = vld [vmem:[%s2113 + $0x4c] sm:$0xf]
        %v2583 = vld [vmem:[%s2113 + $0x50] sm:$0x1]
        %v2584 = vld [vmem:[%s2113 + $0x54] sm:$0xf]
        %v2585 = vld [vmem:[%s2113 + $0x58] sm:$0xf]
        %v2586 = vld [vmem:[%s2113 + $0x5c] sm:$0x1]
        %v2587 = vld [vmem:[%s2113 + $0x60] sm:$0xf]
        %v2588 = vld [vmem:[%s2113 + $0x64] sm:$0xf]
        %v2589 = vld [vmem:[%s2113 + $0x68] sm:$0x1]
        %v2590 = vld [vmem:[%s2113 + $0x6c] sm:$0xf]
        %v2591 = vld [vmem:[%s2113 + $0x70] sm:$0xf]
        %v2592 = vld [vmem:[%s2113 + $0x74] sm:$0x1]
        %v2593 = vld [vmem:[%s2113 + $0x78] sm:$0xf]
        %v2594 = vld [vmem:[%s2113 + $0x7c] sm:$0xf]
        %v2595 = vld [vmem:[%s2113 + $0x80] sm:$0x1]
        %v2596 = vld [vmem:[%s2113 + $0x84] sm:$0xf]
        %v2597 = vld [vmem:[%s2113 + $0x88] sm:$0xf]
        %v2598 = vld [vmem:[%s2113 + $0x8c] sm:$0x1]
        %v2599 = vld [vmem:[%s2113 + $0x90] sm:$0xf]
        %v2600 = vld [vmem:[%s2113 + $0x94] sm:$0xf]
        %v2601 = vld [vmem:[%s2113 + $0x98] sm:$0x1]
        %v2602 = vld [vmem:[%s2113 + $0x9c] sm:$0xf]
        %v2603 = vld [vmem:[%s2113 + $0xa0] sm:$0xf]
        %v2604 = vld [vmem:[%s2113 + $0xa4] sm:$0x1]
        %v2605 = vld [vmem:[%s2113 + $0xa8] sm:$0xf]
        %v2606 = vld [vmem:[%s2113 + $0xac] sm:$0xf]
        %v2607 = vld [vmem:[%s2113 + $0xb0] sm:$0x1]
        %v2608 = vld [vmem:[%s2113 + $0xb4] sm:$0xf]
        %v2609 = vld [vmem:[%s2113 + $0xb8] sm:$0xf]
        %v2610 = vld [vmem:[%s2113 + $0xbc] sm:$0x1]
        %v2612 = vshrl.u32 %v2563, 16
        %v2614 = vrot.slane %v2612, 4
        %v2615 = vshll.u32 %v2563, 16
        %v2617 = vrot.slane %v2615, 5
        %v2618 = vor.u32 %v2614, %v2617
        %v2619 = vrot.slane %v2618, 4
        %v2621 = vshll.u32 %v2564, 16
        %v2623 = vrot.slane %v2621, 5
        %v2624 = vsel %vm747, %v2619, %v2623
        %v2625 = vshrl.u32 %v2564, 16
        %v2627 = vrot.slane %v2625, 4
        %v2628 = vor.u32 %v2627, %v2623
        %v2629 = vrot.slane %v2628, 4
        %v2631 = vshll.u32 %v2565, 16
        %v2633 = vrot.slane %v2631, 5
        %v2634 = vsel %vm747, %v2629, %v2633
        %v2636 = vshrl.u32 %v2566, 16
        %v2638 = vrot.slane %v2636, 4
        %v2639 = vshll.u32 %v2566, 16
        %v2641 = vrot.slane %v2639, 5
        %v2642 = vor.u32 %v2638, %v2641
        %v2643 = vrot.slane %v2642, 4
        %v2645 = vshll.u32 %v2567, 16
        %v2647 = vrot.slane %v2645, 5
        %v2648 = vsel %vm747, %v2643, %v2647
        %v2649 = vshrl.u32 %v2567, 16
        %v2651 = vrot.slane %v2649, 4
        %v2652 = vor.u32 %v2651, %v2647
        %v2653 = vrot.slane %v2652, 4
        %v2655 = vshll.u32 %v2568, 16
        %v2657 = vrot.slane %v2655, 5
        %v2658 = vsel %vm747, %v2653, %v2657
        %v2660 = vshrl.u32 %v2569, 16
        %v2662 = vrot.slane %v2660, 4
        %v2663 = vshll.u32 %v2569, 16
        %v2665 = vrot.slane %v2663, 5
        %v2666 = vor.u32 %v2662, %v2665
        %v2667 = vrot.slane %v2666, 4
        %v2669 = vshll.u32 %v2570, 16
        %v2671 = vrot.slane %v2669, 5
        %v2672 = vsel %vm747, %v2667, %v2671
        %v2673 = vshrl.u32 %v2570, 16
        %v2675 = vrot.slane %v2673, 4
        %v2676 = vor.u32 %v2675, %v2671
        %v2677 = vrot.slane %v2676, 4
        %v2679 = vshll.u32 %v2571, 16
        %v2681 = vrot.slane %v2679, 5
        %v2682 = vsel %vm747, %v2677, %v2681
        %v2684 = vshrl.u32 %v2572, 16
        %v2686 = vrot.slane %v2684, 4
        %v2687 = vshll.u32 %v2572, 16
        %v2689 = vrot.slane %v2687, 5
        %v2690 = vor.u32 %v2686, %v2689
        %v2691 = vrot.slane %v2690, 4
        %v2693 = vshll.u32 %v2573, 16
        %v2695 = vrot.slane %v2693, 5
        %v2696 = vsel %vm747, %v2691, %v2695
        %v2697 = vshrl.u32 %v2573, 16
        %v2699 = vrot.slane %v2697, 4
        %v2700 = vor.u32 %v2699, %v2695
        %v2701 = vrot.slane %v2700, 4
        %v2703 = vshll.u32 %v2574, 16
        %v2705 = vrot.slane %v2703, 5
        %v2706 = vsel %vm747, %v2701, %v2705
        %v2708 = vshrl.u32 %v2575, 16
        %v2710 = vrot.slane %v2708, 4
        %v2711 = vshll.u32 %v2575, 16
        %v2713 = vrot.slane %v2711, 5
        %v2714 = vor.u32 %v2710, %v2713
        %v2715 = vrot.slane %v2714, 4
        %v2717 = vshll.u32 %v2576, 16
        %v2719 = vrot.slane %v2717, 5
        %v2720 = vsel %vm747, %v2715, %v2719
        %v2721 = vshrl.u32 %v2576, 16
        %v2723 = vrot.slane %v2721, 4
        %v2724 = vor.u32 %v2723, %v2719
        %v2725 = vrot.slane %v2724, 4
        %v2727 = vshll.u32 %v2577, 16
        %v2729 = vrot.slane %v2727, 5
        %v2730 = vsel %vm747, %v2725, %v2729
        %v2732 = vshrl.u32 %v2578, 16
        %v2734 = vrot.slane %v2732, 4
        %v2735 = vshll.u32 %v2578, 16
        %v2737 = vrot.slane %v2735, 5
        %v2738 = vor.u32 %v2734, %v2737
        %v2739 = vrot.slane %v2738, 4
        %v2741 = vshll.u32 %v2579, 16
        %v2743 = vrot.slane %v2741, 5
        %v2744 = vsel %vm747, %v2739, %v2743
        %v2745 = vshrl.u32 %v2579, 16
        %v2747 = vrot.slane %v2745, 4
        %v2748 = vor.u32 %v2747, %v2743
        %v2749 = vrot.slane %v2748, 4
        %v2751 = vshll.u32 %v2580, 16
        %v2753 = vrot.slane %v2751, 5
        %v2754 = vsel %vm747, %v2749, %v2753
        %v2756 = vshrl.u32 %v2581, 16
        %v2758 = vrot.slane %v2756, 4
        %v2759 = vshll.u32 %v2581, 16
        %v2761 = vrot.slane %v2759, 5
        %v2762 = vor.u32 %v2758, %v2761
        %v2763 = vrot.slane %v2762, 4
        %v2765 = vshll.u32 %v2582, 16
        %v2767 = vrot.slane %v2765, 5
        %v2768 = vsel %vm747, %v2763, %v2767
        %v2769 = vshrl.u32 %v2582, 16
        %v2771 = vrot.slane %v2769, 4
        %v2772 = vor.u32 %v2771, %v2767
        %v2773 = vrot.slane %v2772, 4
        %v2775 = vshll.u32 %v2583, 16
        %v2777 = vrot.slane %v2775, 5
        %v2778 = vsel %vm747, %v2773, %v2777
        %v2780 = vshrl.u32 %v2584, 16
        %v2782 = vrot.slane %v2780, 4
        %v2783 = vshll.u32 %v2584, 16
        %v2785 = vrot.slane %v2783, 5
        %v2786 = vor.u32 %v2782, %v2785
        %v2787 = vrot.slane %v2786, 4
        %v2789 = vshll.u32 %v2585, 16
        %v2791 = vrot.slane %v2789, 5
        %v2792 = vsel %vm747, %v2787, %v2791
        %v2793 = vshrl.u32 %v2585, 16
        %v2795 = vrot.slane %v2793, 4
        %v2796 = vor.u32 %v2795, %v2791
        %v2797 = vrot.slane %v2796, 4
        %v2799 = vshll.u32 %v2586, 16
        %v2801 = vrot.slane %v2799, 5
        %v2802 = vsel %vm747, %v2797, %v2801
        %v2804 = vshrl.u32 %v2587, 16
        %v2806 = vrot.slane %v2804, 4
        %v2807 = vshll.u32 %v2587, 16
        %v2809 = vrot.slane %v2807, 5
        %v2810 = vor.u32 %v2806, %v2809
        %v2811 = vrot.slane %v2810, 4
        %v2813 = vshll.u32 %v2588, 16
        %v2815 = vrot.slane %v2813, 5
        %v2816 = vsel %vm747, %v2811, %v2815
        %v2817 = vshrl.u32 %v2588, 16
        %v2819 = vrot.slane %v2817, 4
        %v2820 = vor.u32 %v2819, %v2815
        %v2821 = vrot.slane %v2820, 4
        %v2823 = vshll.u32 %v2589, 16
        %v2825 = vrot.slane %v2823, 5
        %v2826 = vsel %vm747, %v2821, %v2825
        %v2828 = vshrl.u32 %v2590, 16
        %v2830 = vrot.slane %v2828, 4
        %v2831 = vshll.u32 %v2590, 16
        %v2833 = vrot.slane %v2831, 5
        %v2834 = vor.u32 %v2830, %v2833
        %v2835 = vrot.slane %v2834, 4
        %v2837 = vshll.u32 %v2591, 16
        %v2839 = vrot.slane %v2837, 5
        %v2840 = vsel %vm747, %v2835, %v2839
        %v2841 = vshrl.u32 %v2591, 16
        %v2843 = vrot.slane %v2841, 4
        %v2844 = vor.u32 %v2843, %v2839
        %v2845 = vrot.slane %v2844, 4
        %v2847 = vshll.u32 %v2592, 16
        %v2849 = vrot.slane %v2847, 5
        %v2850 = vsel %vm747, %v2845, %v2849
        %v2852 = vshrl.u32 %v2593, 16
        %v2854 = vrot.slane %v2852, 4
        %v2855 = vshll.u32 %v2593, 16
        %v2857 = vrot.slane %v2855, 5
        %v2858 = vor.u32 %v2854, %v2857
        %v2859 = vrot.slane %v2858, 4
        %v2861 = vshll.u32 %v2594, 16
        %v2863 = vrot.slane %v2861, 5
        %v2864 = vsel %vm747, %v2859, %v2863
        %v2865 = vshrl.u32 %v2594, 16
        %v2867 = vrot.slane %v2865, 4
        %v2868 = vor.u32 %v2867, %v2863
        %v2869 = vrot.slane %v2868, 4
        %v2871 = vshll.u32 %v2595, 16
        %v2873 = vrot.slane %v2871, 5
        %v2874 = vsel %vm747, %v2869, %v2873
        %v2876 = vshrl.u32 %v2596, 16
        %v2878 = vrot.slane %v2876, 4
        %v2879 = vshll.u32 %v2596, 16
        %v2881 = vrot.slane %v2879, 5
        %v2882 = vor.u32 %v2878, %v2881
        %v2883 = vrot.slane %v2882, 4
        %v2885 = vshll.u32 %v2597, 16
        %v2887 = vrot.slane %v2885, 5
        %v2888 = vsel %vm747, %v2883, %v2887
        %v2889 = vshrl.u32 %v2597, 16
        %v2891 = vrot.slane %v2889, 4
        %v2892 = vor.u32 %v2891, %v2887
        %v2893 = vrot.slane %v2892, 4
        %v2895 = vshll.u32 %v2598, 16
        %v2897 = vrot.slane %v2895, 5
        %v2898 = vsel %vm747, %v2893, %v2897
        %v2900 = vshrl.u32 %v2599, 16
        %v2902 = vrot.slane %v2900, 4
        %v2903 = vshll.u32 %v2599, 16
        %v2905 = vrot.slane %v2903, 5
        %v2906 = vor.u32 %v2902, %v2905
        %v2907 = vrot.slane %v2906, 4
        %v2909 = vshll.u32 %v2600, 16
        %v2911 = vrot.slane %v2909, 5
        %v2912 = vsel %vm747, %v2907, %v2911
        %v2913 = vshrl.u32 %v2600, 16
        %v2915 = vrot.slane %v2913, 4
        %v2916 = vor.u32 %v2915, %v2911
        %v2917 = vrot.slane %v2916, 4
        %v2919 = vshll.u32 %v2601, 16
        %v2921 = vrot.slane %v2919, 5
        %v2922 = vsel %vm747, %v2917, %v2921
        %v2924 = vshrl.u32 %v2602, 16
        %v2926 = vrot.slane %v2924, 4
        %v2927 = vshll.u32 %v2602, 16
        %v2929 = vrot.slane %v2927, 5
        %v2930 = vor.u32 %v2926, %v2929
        %v2931 = vrot.slane %v2930, 4
        %v2933 = vshll.u32 %v2603, 16
        %v2935 = vrot.slane %v2933, 5
        %v2936 = vsel %vm747, %v2931, %v2935
        %v2937 = vshrl.u32 %v2603, 16
        %v2939 = vrot.slane %v2937, 4
        %v2940 = vor.u32 %v2939, %v2935
        %v2941 = vrot.slane %v2940, 4
        %v2943 = vshll.u32 %v2604, 16
        %v2945 = vrot.slane %v2943, 5
        %v2946 = vsel %vm747, %v2941, %v2945
        %v2948 = vshrl.u32 %v2605, 16
        %v2950 = vrot.slane %v2948, 4
        %v2951 = vshll.u32 %v2605, 16
        %v2953 = vrot.slane %v2951, 5
        %v2954 = vor.u32 %v2950, %v2953
        %v2955 = vrot.slane %v2954, 4
        %v2957 = vshll.u32 %v2606, 16
        %v2959 = vrot.slane %v2957, 5
        %v2960 = vsel %vm747, %v2955, %v2959
        %v2961 = vshrl.u32 %v2606, 16
        %v2963 = vrot.slane %v2961, 4
        %v2964 = vor.u32 %v2963, %v2959
        %v2965 = vrot.slane %v2964, 4
        %v2967 = vshll.u32 %v2607, 16
        %v2969 = vrot.slane %v2967, 5
        %v2970 = vsel %vm747, %v2965, %v2969
        %v2972 = vshrl.u32 %v2608, 16
        %v2974 = vrot.slane %v2972, 4
        %v2975 = vshll.u32 %v2608, 16
        %v2977 = vrot.slane %v2975, 5
        %v2978 = vor.u32 %v2974, %v2977
        %v2979 = vrot.slane %v2978, 4
        %v2981 = vshll.u32 %v2609, 16
        %v2983 = vrot.slane %v2981, 5
        %v2984 = vsel %vm747, %v2979, %v2983
        %v2985 = vshrl.u32 %v2609, 16
        %v2987 = vrot.slane %v2985, 4
        %v2988 = vor.u32 %v2987, %v2983
        %v2989 = vrot.slane %v2988, 4
        %v2991 = vshll.u32 %v2610, 16
        %v2993 = vrot.slane %v2991, 5
        %v2994 = vsel %vm747, %v2989, %v2993
        %v2995 = vld [vmem:[#allocation2] sm:$0xff]
        %v2996 = vld [vmem:[#allocation2 + $0x8] sm:$0xff]
        %v2997 = vld [vmem:[#allocation2 + $0x10] sm:$0xff]
        %v2998 = vld [vmem:[#allocation2 + $0x18] sm:$0xff]
        %v2999 = vld [vmem:[#allocation2 + $0x20] sm:$0xff]
        %v3000 = vld [vmem:[#allocation2 + $0x28] sm:$0xff]
        %v3001 = vld [vmem:[#allocation2 + $0x30] sm:$0xff]
        %v3002 = vld [vmem:[#allocation2 + $0x38] sm:$0xff]
        %v3003 = vld [vmem:[#allocation2 + $0x40] sm:$0xff]
        %v3004 = vld [vmem:[#allocation2 + $0x48] sm:$0xff]
        %v3005 = vld [vmem:[#allocation2 + $0x50] sm:$0xff]
        %v3006 = vld [vmem:[#allocation2 + $0x58] sm:$0xff]
        %v3007 = vld [vmem:[#allocation2 + $0x60] sm:$0xff]
        %v3008 = vld [vmem:[#allocation2 + $0x68] sm:$0xff]
        %v3009 = vld [vmem:[#allocation2 + $0x70] sm:$0xff]
        %v3010 = vld [vmem:[#allocation2 + $0x78] sm:$0xff]
        %v3011 = vld [vmem:[#allocation2 + $0x80] sm:$0xff]
        %v3012 = vld [vmem:[#allocation2 + $0x88] sm:$0xff]
        %v3013 = vld [vmem:[#allocation2 + $0x90] sm:$0xff]
        %v3014 = vld [vmem:[#allocation2 + $0x98] sm:$0xff]
        %v3015 = vld [vmem:[#allocation2 + $0xa0] sm:$0xff]
        %v3016 = vld [vmem:[#allocation2 + $0xa8] sm:$0xff]
        %v3017 = vld [vmem:[#allocation2 + $0xb0] sm:$0xff]
        %v3018 = vld [vmem:[#allocation2 + $0xb8] sm:$0xff]
        %v3019 = vld [vmem:[#allocation2 + $0xc0] sm:$0xff]
        %v3020 = vld [vmem:[#allocation2 + $0xc8] sm:$0xff]
        %v3021 = vld [vmem:[#allocation2 + $0xd0] sm:$0xff]
        %v3022 = vld [vmem:[#allocation2 + $0xd8] sm:$0xff]
        %v3023 = vld [vmem:[#allocation2 + $0xe0] sm:$0xff]
        %v3024 = vld [vmem:[#allocation2 + $0xe8] sm:$0xff]
        %v3025 = vld [vmem:[#allocation2 + $0xf0] sm:$0xff]
        %v3026 = vld [vmem:[#allocation2 + $0xf8] sm:$0xff]
        %v3027 = vld [vmem:[%s210 + $0x80] sm:$0xf]
        %v3028 = vld [vmem:[%s210 + $0x84] sm:$0xf]
        %v3029 = vld [vmem:[%s210 + $0x88] sm:$0xf]
        %v3030 = vld [vmem:[%s210 + $0x8c] sm:$0xf]
        %v3031 = vld [vmem:[%s210 + $0x90] sm:$0xf]
        %v3032 = vld [vmem:[%s210 + $0x94] sm:$0xf]
        %v3033 = vld [vmem:[%s210 + $0x98] sm:$0xf]
        %v3034 = vld [vmem:[%s210 + $0x9c] sm:$0xf]
        %v3035 = vunpack.c.l.b16 %v2624
        %v3036 = vunpack.c.l.b16 %v2634
        %v3037 = vunpack.c.l.b16 %v2648
        %v3038 = vunpack.c.l.b16 %v2658
        %v3039 = vunpack.c.l.b16 %v2672
        %v3040 = vunpack.c.l.b16 %v2682
        %v3041 = vunpack.c.l.b16 %v2696
        %v3042 = vunpack.c.l.b16 %v2706
        %v3043 = vunpack.c.l.b16 %v2720
        %v3044 = vunpack.c.l.b16 %v2730
        %v3045 = vunpack.c.l.b16 %v2744
        %v3046 = vunpack.c.l.b16 %v2754
        %v3047 = vunpack.c.l.b16 %v2768
        %v3048 = vunpack.c.l.b16 %v2778
        %v3049 = vunpack.c.l.b16 %v2792
        %v3050 = vunpack.c.l.b16 %v2802
        %v3051 = vunpack.c.l.b16 %v2816
        %v3052 = vunpack.c.l.b16 %v2826
        %v3053 = vunpack.c.l.b16 %v2840
        %v3054 = vunpack.c.l.b16 %v2850
        %v3055 = vunpack.c.l.b16 %v2864
        %v3056 = vunpack.c.l.b16 %v2874
        %v3057 = vunpack.c.l.b16 %v2888
        %v3058 = vunpack.c.l.b16 %v2898
        %v3059 = vunpack.c.l.b16 %v2912
        %v3060 = vunpack.c.l.b16 %v2922
        %v3061 = vunpack.c.l.b16 %v2936
        %v3062 = vunpack.c.l.b16 %v2946
        %v3063 = vunpack.c.l.b16 %v2960
        %v3064 = vunpack.c.l.b16 %v2970
        %v3065 = vunpack.c.l.b16 %v2984
        %v3066 = vunpack.c.l.b16 %v2994
        %v3067 = vpack.c.b16 %v3036, %v3035
        %v3068 = vpack.c.b16 %v3038, %v3037
        %v3069 = vpack.c.b16 %v3040, %v3039
        %v3070 = vpack.c.b16 %v3042, %v3041
        %v3071 = vpack.c.b16 %v3044, %v3043
        %v3072 = vpack.c.b16 %v3046, %v3045
        %v3073 = vpack.c.b16 %v3048, %v3047
        %v3074 = vpack.c.b16 %v3050, %v3049
        %v3075 = vpack.c.b16 %v3052, %v3051
        %v3076 = vpack.c.b16 %v3054, %v3053
        %v3077 = vpack.c.b16 %v3056, %v3055
        %v3078 = vpack.c.b16 %v3058, %v3057
        %v3079 = vpack.c.b16 %v3060, %v3059
        %v3080 = vpack.c.b16 %v3062, %v3061
        %v3081 = vpack.c.b16 %v3064, %v3063
        %v3082 = vpack.c.b16 %v3066, %v3065
        %v3091 = vunpack.c.l.b16 %v3027
        %v3092 = vunpack.c.l.b16 %v3028
        %v3093 = vunpack.c.l.b16 %v3029
        %v3094 = vunpack.c.l.b16 %v3030
        %v3095 = vunpack.c.l.b16 %v3031
        %v3096 = vunpack.c.l.b16 %v3032
        %v3097 = vunpack.c.l.b16 %v3033
        %v3098 = vunpack.c.l.b16 %v3034
        %v3099 = vpack.c.b16 %v3092, %v3091
        %v3100 = vpack.c.b16 %v3094, %v3093
        %v3101 = vpack.c.b16 %v3096, %v3095
        %v3102 = vpack.c.b16 %v3098, %v3097
        %v3108 = vsel %vm215, %v3067, 0
        %v3111 = vsel %vm215, %v3068, 0
        %v3114 = vsel %vm215, %v3069, 0
        %v3117 = vsel %vm215, %v3070, 0
        %v3120 = vsel %vm215, %v3071, 0
        %v3123 = vsel %vm215, %v3072, 0
        %v3126 = vsel %vm215, %v3073, 0
        %v3129 = vsel %vm215, %v3074, 0
        %v3132 = vsel %vm215, %v3075, 0
        %v3135 = vsel %vm215, %v3076, 0
        %v3138 = vsel %vm215, %v3077, 0
        %v3141 = vsel %vm215, %v3078, 0
        %v3144 = vsel %vm215, %v3079, 0
        %v3147 = vsel %vm215, %v3080, 0
        %v3150 = vsel %vm215, %v3081, 0
        %v3153 = vsel %vm215, %v3082, 0
        %3155 = vmatprep.subr.bf16.mxu0 0
        %3156 = vmatpush1.bf16.msra.mxu0 %v3099
        %3157 = vmatprep.subr.bf16.mxu0 0
        %3158 = vmatpush1.bf16.msra.mxu0 %v3100
        %3159 = vmatprep.subr.bf16.mxu0 0
        %3160 = vmatpush1.bf16.msra.mxu0 %v3101
        %3161 = vmatprep.subr.bf16.mxu0 0
        %3162 = vmatpush1.bf16.msra.mxu0 %v3102
        %3163 = vmatprep.subr.bf16.mxu0 0
        %3164 = vmatpush1.bf16.msra.mxu0 0
        %3165 = vmatprep.subr.bf16.mxu0 0
        %3166 = vmatpush1.bf16.msra.mxu0 0
        %3167 = vmatprep.subr.bf16.mxu0 0
        %3168 = vmatpush1.bf16.msra.mxu0 0
        %3169 = vmatprep.subr.bf16.mxu0 0
        %3170 = vmatpush1.bf16.msra.mxu0 0
        %3171 = vmatprep.subr.bf16.mxu0 0
        %3172 = vmatpush1.bf16.msra.mxu0 0
        %3173 = vmatprep.subr.bf16.mxu0 0
        %3174 = vmatpush1.bf16.msra.mxu0 0
        %3175 = vmatprep.subr.bf16.mxu0 0
        %3176 = vmatpush1.bf16.msra.mxu0 0
        %3177 = vmatprep.subr.bf16.mxu0 0
        %3178 = vmatpush1.bf16.msra.mxu0 0
        %3179 = vmatprep.subr.bf16.mxu0 0
        %3180 = vmatpush1.bf16.msra.mxu0 0
        %3181 = vmatprep.subr.bf16.mxu0 0
        %3182 = vmatpush1.bf16.msra.mxu0 0
        %3183 = vmatprep.subr.bf16.mxu0 0
        %3184 = vmatpush1.bf16.msra.mxu0 0
        %3185 = vmatprep.subr.bf16.mxu0 0
        %3186 = vmatpush1.bf16.msra.mxu0 0
        %3187 = vmatprep.mubr.bf16.mxu0 0
        %3188 = vmatmul.mubr.bf16.gmra.mrb[0].mxu0 %v3108
        %v3189 = vpop.f32.mrb[0].mxu0
        %v3190 = vadd.f32 0.0, %v3189
        %v3191 = vpop.f32.mrb[0].mxu0
        %v3192 = vpop.f32.mrb[0].mxu0
        %v3193 = vadd.f32 0.0, %v3192
        %v3194 = vpop.f32.mrb[0].mxu0
        %3195 = vmatprep.mubr.bf16.mxu0 0
        %3196 = vmatmul.mubr.bf16.gmra.mrb[0].mxu0 %v3111
        %v3197 = vpop.f32.mrb[0].mxu0
        %v3198 = vadd.f32 0.0, %v3197
        %v3199 = vpop.f32.mrb[0].mxu0
        %v3200 = vpop.f32.mrb[0].mxu0
        %v3201 = vadd.f32 0.0, %v3200
        %v3202 = vpop.f32.mrb[0].mxu0
        %3203 = vmatprep.mubr.bf16.mxu0 0
        %3204 = vmatmul.mubr.bf16.gmra.mrb[0].mxu0 %v3114
        %v3205 = vpop.f32.mrb[0].mxu0
        %v3206 = vadd.f32 0.0, %v3205
        %v3207 = vpop.f32.mrb[0].mxu0
        %v3208 = vpop.f32.mrb[0].mxu0
        %v3209 = vadd.f32 0.0, %v3208
        %v3210 = vpop.f32.mrb[0].mxu0
        %3211 = vmatprep.mubr.bf16.mxu0 0
        %3212 = vmatmul.mubr.bf16.gmra.mrb[0].mxu0 %v3117
        %v3213 = vpop.f32.mrb[0].mxu0
        %v3214 = vadd.f32 0.0, %v3213
        %v3215 = vpop.f32.mrb[0].mxu0
        %v3216 = vpop.f32.mrb[0].mxu0
        %v3217 = vadd.f32 0.0, %v3216
        %v3218 = vpop.f32.mrb[0].mxu0
        %3219 = vmatprep.mubr.bf16.mxu0 0
        %3220 = vmatmul.mubr.bf16.gmra.mrb[0].mxu0 %v3120
        %v3221 = vpop.f32.mrb[0].mxu0
        %v3222 = vadd.f32 0.0, %v3221
        %v3223 = vpop.f32.mrb[0].mxu0
        %v3224 = vpop.f32.mrb[0].mxu0
        %v3225 = vadd.f32 0.0, %v3224
        %v3226 = vpop.f32.mrb[0].mxu0
        %3227 = vmatprep.mubr.bf16.mxu0 0
        %3228 = vmatmul.mubr.bf16.gmra.mrb[0].mxu0 %v3123
        %v3229 = vpop.f32.mrb[0].mxu0
        %v3230 = vadd.f32 0.0, %v3229
        %v3231 = vpop.f32.mrb[0].mxu0
        %v3232 = vpop.f32.mrb[0].mxu0
        %v3233 = vadd.f32 0.0, %v3232
        %v3234 = vpop.f32.mrb[0].mxu0
        %3235 = vmatprep.mubr.bf16.mxu0 0
        %3236 = vmatmul.mubr.bf16.gmra.mrb[0].mxu0 %v3126
        %v3237 = vpop.f32.mrb[0].mxu0
        %v3238 = vadd.f32 0.0, %v3237
        %v3239 = vpop.f32.mrb[0].mxu0
        %v3240 = vpop.f32.mrb[0].mxu0
        %v3241 = vadd.f32 0.0, %v3240
        %v3242 = vpop.f32.mrb[0].mxu0
        %3243 = vmatprep.mubr.bf16.mxu0 0
        %3244 = vmatmul.mubr.bf16.gmra.mrb[0].mxu0 %v3129
        %v3245 = vpop.f32.mrb[0].mxu0
        %v3246 = vadd.f32 0.0, %v3245
        %v3247 = vpop.f32.mrb[0].mxu0
        %v3248 = vpop.f32.mrb[0].mxu0
        %v3249 = vadd.f32 0.0, %v3248
        %v3250 = vpop.f32.mrb[0].mxu0
        %3251 = vmatprep.mubr.bf16.mxu0 0
        %3252 = vmatmul.mubr.bf16.gmra.mrb[0].mxu0 %v3132
        %v3253 = vpop.f32.mrb[0].mxu0
        %v3254 = vadd.f32 0.0, %v3253
        %v3255 = vpop.f32.mrb[0].mxu0
        %v3256 = vpop.f32.mrb[0].mxu0
        %v3257 = vadd.f32 0.0, %v3256
        %v3258 = vpop.f32.mrb[0].mxu0
        %3259 = vmatprep.mubr.bf16.mxu0 0
        %3260 = vmatmul.mubr.bf16.gmra.mrb[0].mxu0 %v3135
        %v3261 = vpop.f32.mrb[0].mxu0
        %v3262 = vadd.f32 0.0, %v3261
        %v3263 = vpop.f32.mrb[0].mxu0
        %v3264 = vpop.f32.mrb[0].mxu0
        %v3265 = vadd.f32 0.0, %v3264
        %v3266 = vpop.f32.mrb[0].mxu0
        %3267 = vmatprep.mubr.bf16.mxu0 0
        %3268 = vmatmul.mubr.bf16.gmra.mrb[0].mxu0 %v3138
        %v3269 = vpop.f32.mrb[0].mxu0
        %v3270 = vadd.f32 0.0, %v3269
        %v3271 = vpop.f32.mrb[0].mxu0
        %v3272 = vpop.f32.mrb[0].mxu0
        %v3273 = vadd.f32 0.0, %v3272
        %v3274 = vpop.f32.mrb[0].mxu0
        %3275 = vmatprep.mubr.bf16.mxu0 0
        %3276 = vmatmul.mubr.bf16.gmra.mrb[0].mxu0 %v3141
        %v3277 = vpop.f32.mrb[0].mxu0
        %v3278 = vadd.f32 0.0, %v3277
        %v3279 = vpop.f32.mrb[0].mxu0
        %v3280 = vpop.f32.mrb[0].mxu0
        %v3281 = vadd.f32 0.0, %v3280
        %v3282 = vpop.f32.mrb[0].mxu0
        %3283 = vmatprep.mubr.bf16.mxu0 0
        %3284 = vmatmul.mubr.bf16.gmra.mrb[0].mxu0 %v3144
        %v3285 = vpop.f32.mrb[0].mxu0
        %v3286 = vadd.f32 0.0, %v3285
        %v3287 = vpop.f32.mrb[0].mxu0
        %v3288 = vpop.f32.mrb[0].mxu0
        %v3289 = vadd.f32 0.0, %v3288
        %v3290 = vpop.f32.mrb[0].mxu0
        %3291 = vmatprep.mubr.bf16.mxu0 0
        %3292 = vmatmul.mubr.bf16.gmra.mrb[0].mxu0 %v3147
        %v3293 = vpop.f32.mrb[0].mxu0
        %v3294 = vadd.f32 0.0, %v3293
        %v3295 = vpop.f32.mrb[0].mxu0
        %v3296 = vpop.f32.mrb[0].mxu0
        %v3297 = vadd.f32 0.0, %v3296
        %v3298 = vpop.f32.mrb[0].mxu0
        %3299 = vmatprep.mubr.bf16.mxu0 0
        %3300 = vmatmul.mubr.bf16.gmra.mrb[0].mxu0 %v3150
        %v3301 = vpop.f32.mrb[0].mxu0
        %v3302 = vadd.f32 0.0, %v3301
        %v3303 = vpop.f32.mrb[0].mxu0
        %v3304 = vpop.f32.mrb[0].mxu0
        %v3305 = vadd.f32 0.0, %v3304
        %v3306 = vpop.f32.mrb[0].mxu0
        %3307 = vmatprep.mubr.bf16.mxu0 0
        %3308 = vmatmul.mubr.bf16.gmra.mrb[0].mxu0 %v3153
        %v3309 = vpop.f32.mrb[0].mxu0
        %v3310 = vadd.f32 0.0, %v3309
        %v3311 = vpop.f32.mrb[0].mxu0
        %v3312 = vpop.f32.mrb[0].mxu0
        %v3313 = vadd.f32 0.0, %v3312
        %v3314 = vpop.f32.mrb[0].mxu0
        %3315 = vdwg.mxu0
        %v3316 = vadd.f32 %v2995, %v3190
        %v3317 = vadd.f32 %v2996, %v3193
        %v3318 = vadd.f32 %v2997, %v3198
        %v3319 = vadd.f32 %v2998, %v3201
        %v3320 = vadd.f32 %v2999, %v3206
        %v3321 = vadd.f32 %v3000, %v3209
        %v3322 = vadd.f32 %v3001, %v3214
        %v3323 = vadd.f32 %v3002, %v3217
        %v3324 = vadd.f32 %v3003, %v3222
        %v3325 = vadd.f32 %v3004, %v3225
        %v3326 = vadd.f32 %v3005, %v3230
        %v3327 = vadd.f32 %v3006, %v3233
        %v3328 = vadd.f32 %v3007, %v3238
        %v3329 = vadd.f32 %v3008, %v3241
        %v3330 = vadd.f32 %v3009, %v3246
        %v3331 = vadd.f32 %v3010, %v3249
        %v3332 = vadd.f32 %v3011, %v3254
        %v3333 = vadd.f32 %v3012, %v3257
        %v3334 = vadd.f32 %v3013, %v3262
        %v3335 = vadd.f32 %v3014, %v3265
        %v3336 = vadd.f32 %v3015, %v3270
        %v3337 = vadd.f32 %v3016, %v3273
        %v3338 = vadd.f32 %v3017, %v3278
        %v3339 = vadd.f32 %v3018, %v3281
        %v3340 = vadd.f32 %v3019, %v3286
        %v3341 = vadd.f32 %v3020, %v3289
        %v3342 = vadd.f32 %v3021, %v3294
        %v3343 = vadd.f32 %v3022, %v3297
        %v3344 = vadd.f32 %v3023, %v3302
        %v3345 = vadd.f32 %v3024, %v3305
        %v3346 = vadd.f32 %v3025, %v3310
        %v3347 = vadd.f32 %v3026, %v3313
        %3348 = vst.msk [vmem:[#allocation2] sm:$0xff] %vm215, %v3316
        %3349 = vst.msk [vmem:[#allocation2 + $0x8] sm:$0xff] %vm215, %v3317
        %3350 = vst.msk [vmem:[#allocation2 + $0x10] sm:$0xff] %vm215, %v3318
        %3351 = vst.msk [vmem:[#allocation2 + $0x18] sm:$0xff] %vm215, %v3319
        %3352 = vst.msk [vmem:[#allocation2 + $0x20] sm:$0xff] %vm215, %v3320
        %3353 = vst.msk [vmem:[#allocation2 + $0x28] sm:$0xff] %vm215, %v3321
        %3354 = vst.msk [vmem:[#allocation2 + $0x30] sm:$0xff] %vm215, %v3322
        %3355 = vst.msk [vmem:[#allocation2 + $0x38] sm:$0xff] %vm215, %v3323
        %3356 = vst.msk [vmem:[#allocation2 + $0x40] sm:$0xff] %vm215, %v3324
        %3357 = vst.msk [vmem:[#allocation2 + $0x48] sm:$0xff] %vm215, %v3325
        %3358 = vst.msk [vmem:[#allocation2 + $0x50] sm:$0xff] %vm215, %v3326
        %3359 = vst.msk [vmem:[#allocation2 + $0x58] sm:$0xff] %vm215, %v3327
        %3360 = vst.msk [vmem:[#allocation2 + $0x60] sm:$0xff] %vm215, %v3328
        %3361 = vst.msk [vmem:[#allocation2 + $0x68] sm:$0xff] %vm215, %v3329
        %3362 = vst.msk [vmem:[#allocation2 + $0x70] sm:$0xff] %vm215, %v3330
        %3363 = vst.msk [vmem:[#allocation2 + $0x78] sm:$0xff] %vm215, %v3331
        %3364 = vst.msk [vmem:[#allocation2 + $0x80] sm:$0xff] %vm215, %v3332
        %3365 = vst.msk [vmem:[#allocation2 + $0x88] sm:$0xff] %vm215, %v3333
        %3366 = vst.msk [vmem:[#allocation2 + $0x90] sm:$0xff] %vm215, %v3334
        %3367 = vst.msk [vmem:[#allocation2 + $0x98] sm:$0xff] %vm215, %v3335
        %3368 = vst.msk [vmem:[#allocation2 + $0xa0] sm:$0xff] %vm215, %v3336
        %3369 = vst.msk [vmem:[#allocation2 + $0xa8] sm:$0xff] %vm215, %v3337
        %3370 = vst.msk [vmem:[#allocation2 + $0xb0] sm:$0xff] %vm215, %v3338
        %3371 = vst.msk [vmem:[#allocation2 + $0xb8] sm:$0xff] %vm215, %v3339
        %3372 = vst.msk [vmem:[#allocation2 + $0xc0] sm:$0xff] %vm215, %v3340
        %3373 = vst.msk [vmem:[#allocation2 + $0xc8] sm:$0xff] %vm215, %v3341
        %3374 = vst.msk [vmem:[#allocation2 + $0xd0] sm:$0xff] %vm215, %v3342
        %3375 = vst.msk [vmem:[#allocation2 + $0xd8] sm:$0xff] %vm215, %v3343
        %3376 = vst.msk [vmem:[#allocation2 + $0xe0] sm:$0xff] %vm215, %v3344
        %3377 = vst.msk [vmem:[#allocation2 + $0xe8] sm:$0xff] %vm215, %v3345
        %3378 = vst.msk [vmem:[#allocation2 + $0xf0] sm:$0xff] %vm215, %v3346
        %3379 = vst.msk [vmem:[#allocation2 + $0xf8] sm:$0xff] %vm215, %v3347
        %v3380 = vld [vmem:[%s2113] sm:$0xe]
        %v3381 = vld [vmem:[%s2113 + $0x4] sm:$0xf]
        %v3382 = vld [vmem:[%s2113 + $0x8] sm:$0x1]
        %v3383 = vld [vmem:[%s2113 + $0xc] sm:$0xe]
        %v3384 = vld [vmem:[%s2113 + $0x10] sm:$0xf]
        %v3385 = vld [vmem:[%s2113 + $0x14] sm:$0x1]
        %v3386 = vld [vmem:[%s2113 + $0x18] sm:$0xe]
        %v3387 = vld [vmem:[%s2113 + $0x1c] sm:$0xf]
        %v3388 = vld [vmem:[%s2113 + $0x20] sm:$0x1]
        %v3389 = vld [vmem:[%s2113 + $0x24] sm:$0xe]
        %v3390 = vld [vmem:[%s2113 + $0x28] sm:$0xf]
        %v3391 = vld [vmem:[%s2113 + $0x2c] sm:$0x1]
        %v3392 = vld [vmem:[%s2113 + $0x30] sm:$0xe]
        %v3393 = vld [vmem:[%s2113 + $0x34] sm:$0xf]
        %v3394 = vld [vmem:[%s2113 + $0x38] sm:$0x1]
        %v3395 = vld [vmem:[%s2113 + $0x3c] sm:$0xe]
        %v3396 = vld [vmem:[%s2113 + $0x40] sm:$0xf]
        %v3397 = vld [vmem:[%s2113 + $0x44] sm:$0x1]
        %v3398 = vld [vmem:[%s2113 + $0x48] sm:$0xe]
        %v3399 = vld [vmem:[%s2113 + $0x4c] sm:$0xf]
        %v3400 = vld [vmem:[%s2113 + $0x50] sm:$0x1]
        %v3401 = vld [vmem:[%s2113 + $0x54] sm:$0xe]
        %v3402 = vld [vmem:[%s2113 + $0x58] sm:$0xf]
        %v3403 = vld [vmem:[%s2113 + $0x5c] sm:$0x1]
        %v3404 = vld [vmem:[%s2113 + $0x60] sm:$0xe]
        %v3405 = vld [vmem:[%s2113 + $0x64] sm:$0xf]
        %v3406 = vld [vmem:[%s2113 + $0x68] sm:$0x1]
        %v3407 = vld [vmem:[%s2113 + $0x6c] sm:$0xe]
        %v3408 = vld [vmem:[%s2113 + $0x70] sm:$0xf]
        %v3409 = vld [vmem:[%s2113 + $0x74] sm:$0x1]
        %v3410 = vld [vmem:[%s2113 + $0x78] sm:$0xe]
        %v3411 = vld [vmem:[%s2113 + $0x7c] sm:$0xf]
        %v3412 = vld [vmem:[%s2113 + $0x80] sm:$0x1]
        %v3413 = vld [vmem:[%s2113 + $0x84] sm:$0xe]
        %v3414 = vld [vmem:[%s2113 + $0x88] sm:$0xf]
        %v3415 = vld [vmem:[%s2113 + $0x8c] sm:$0x1]
        %v3416 = vld [vmem:[%s2113 + $0x90] sm:$0xe]
        %v3417 = vld [vmem:[%s2113 + $0x94] sm:$0xf]
        %v3418 = vld [vmem:[%s2113 + $0x98] sm:$0x1]
        %v3419 = vld [vmem:[%s2113 + $0x9c] sm:$0xe]
        %v3420 = vld [vmem:[%s2113 + $0xa0] sm:$0xf]
        %v3421 = vld [vmem:[%s2113 + $0xa4] sm:$0x1]
        %v3422 = vld [vmem:[%s2113 + $0xa8] sm:$0xe]
        %v3423 = vld [vmem:[%s2113 + $0xac] sm:$0xf]
        %v3424 = vld [vmem:[%s2113 + $0xb0] sm:$0x1]
        %v3425 = vld [vmem:[%s2113 + $0xb4] sm:$0xe]
        %v3426 = vld [vmem:[%s2113 + $0xb8] sm:$0xf]
        %v3427 = vld [vmem:[%s2113 + $0xbc] sm:$0x1]
        %v3476 = vrot.slane %v3380, 5
        %v3477 = vrot.slane %v3476, 4
        %v3478 = vrot.slane %v3381, 5
        %v3479 = vsel %vm1615, %v3477, %v3478
        %v3480 = vrot.slane %v3478, 4
        %v3481 = vrot.slane %v3382, 5
        %v3482 = vsel %vm1615, %v3480, %v3481
        %v3483 = vrot.slane %v3383, 5
        %v3484 = vrot.slane %v3483, 4
        %v3485 = vrot.slane %v3384, 5
        %v3486 = vsel %vm1615, %v3484, %v3485
        %v3487 = vrot.slane %v3485, 4
        %v3488 = vrot.slane %v3385, 5
        %v3489 = vsel %vm1615, %v3487, %v3488
        %v3490 = vrot.slane %v3386, 5
        %v3491 = vrot.slane %v3490, 4
        %v3492 = vrot.slane %v3387, 5
        %v3493 = vsel %vm1615, %v3491, %v3492
        %v3494 = vrot.slane %v3492, 4
        %v3495 = vrot.slane %v3388, 5
        %v3496 = vsel %vm1615, %v3494, %v3495
        %v3497 = vrot.slane %v3389, 5
        %v3498 = vrot.slane %v3497, 4
        %v3499 = vrot.slane %v3390, 5
        %v3500 = vsel %vm1615, %v3498, %v3499
        %v3501 = vrot.slane %v3499, 4
        %v3502 = vrot.slane %v3391, 5
        %v3503 = vsel %vm1615, %v3501, %v3502
        %v3504 = vrot.slane %v3392, 5
        %v3505 = vrot.slane %v3504, 4
        %v3506 = vrot.slane %v3393, 5
        %v3507 = vsel %vm1615, %v3505, %v3506
        %v3508 = vrot.slane %v3506, 4
        %v3509 = vrot.slane %v3394, 5
        %v3510 = vsel %vm1615, %v3508, %v3509
        %v3511 = vrot.slane %v3395, 5
        %v3512 = vrot.slane %v3511, 4
        %v3513 = vrot.slane %v3396, 5
        %v3514 = vsel %vm1615, %v3512, %v3513
        %v3515 = vrot.slane %v3513, 4
        %v3516 = vrot.slane %v3397, 5
        %v3517 = vsel %vm1615, %v3515, %v3516
        %v3518 = vrot.slane %v3398, 5
        %v3519 = vrot.slane %v3518, 4
        %v3520 = vrot.slane %v3399, 5
        %v3521 = vsel %vm1615, %v3519, %v3520
        %v3522 = vrot.slane %v3520, 4
        %v3523 = vrot.slane %v3400, 5
        %v3524 = vsel %vm1615, %v3522, %v3523
        %v3525 = vrot.slane %v3401, 5
        %v3526 = vrot.slane %v3525, 4
        %v3527 = vrot.slane %v3402, 5
        %v3528 = vsel %vm1615, %v3526, %v3527
        %v3529 = vrot.slane %v3527, 4
        %v3530 = vrot.slane %v3403, 5
        %v3531 = vsel %vm1615, %v3529, %v3530
        %v3532 = vrot.slane %v3404, 5
        %v3533 = vrot.slane %v3532, 4
        %v3534 = vrot.slane %v3405, 5
        %v3535 = vsel %vm1615, %v3533, %v3534
        %v3536 = vrot.slane %v3534, 4
        %v3537 = vrot.slane %v3406, 5
        %v3538 = vsel %vm1615, %v3536, %v3537
        %v3539 = vrot.slane %v3407, 5
        %v3540 = vrot.slane %v3539, 4
        %v3541 = vrot.slane %v3408, 5
        %v3542 = vsel %vm1615, %v3540, %v3541
        %v3543 = vrot.slane %v3541, 4
        %v3544 = vrot.slane %v3409, 5
        %v3545 = vsel %vm1615, %v3543, %v3544
        %v3546 = vrot.slane %v3410, 5
        %v3547 = vrot.slane %v3546, 4
        %v3548 = vrot.slane %v3411, 5
        %v3549 = vsel %vm1615, %v3547, %v3548
        %v3550 = vrot.slane %v3548, 4
        %v3551 = vrot.slane %v3412, 5
        %v3552 = vsel %vm1615, %v3550, %v3551
        %v3553 = vrot.slane %v3413, 5
        %v3554 = vrot.slane %v3553, 4
        %v3555 = vrot.slane %v3414, 5
        %v3556 = vsel %vm1615, %v3554, %v3555
        %v3557 = vrot.slane %v3555, 4
        %v3558 = vrot.slane %v3415, 5
        %v3559 = vsel %vm1615, %v3557, %v3558
        %v3560 = vrot.slane %v3416, 5
        %v3561 = vrot.slane %v3560, 4
        %v3562 = vrot.slane %v3417, 5
        %v3563 = vsel %vm1615, %v3561, %v3562
        %v3564 = vrot.slane %v3562, 4
        %v3565 = vrot.slane %v3418, 5
        %v3566 = vsel %vm1615, %v3564, %v3565
        %v3567 = vrot.slane %v3419, 5
        %v3568 = vrot.slane %v3567, 4
        %v3569 = vrot.slane %v3420, 5
        %v3570 = vsel %vm1615, %v3568, %v3569
        %v3571 = vrot.slane %v3569, 4
        %v3572 = vrot.slane %v3421, 5
        %v3573 = vsel %vm1615, %v3571, %v3572
        %v3574 = vrot.slane %v3422, 5
        %v3575 = vrot.slane %v3574, 4
        %v3576 = vrot.slane %v3423, 5
        %v3577 = vsel %vm1615, %v3575, %v3576
        %v3578 = vrot.slane %v3576, 4
        %v3579 = vrot.slane %v3424, 5
        %v3580 = vsel %vm1615, %v3578, %v3579
        %v3581 = vrot.slane %v3425, 5
        %v3582 = vrot.slane %v3581, 4
        %v3583 = vrot.slane %v3426, 5
        %v3584 = vsel %vm1615, %v3582, %v3583
        %v3585 = vrot.slane %v3583, 4
        %v3586 = vrot.slane %v3427, 5
        %v3587 = vsel %vm1615, %v3585, %v3586
        %v3588 = vld [vmem:[#allocation2] sm:$0xff]
        %v3589 = vld [vmem:[#allocation2 + $0x8] sm:$0xff]
        %v3590 = vld [vmem:[#allocation2 + $0x10] sm:$0xff]
        %v3591 = vld [vmem:[#allocation2 + $0x18] sm:$0xff]
        %v3592 = vld [vmem:[#allocation2 + $0x20] sm:$0xff]
        %v3593 = vld [vmem:[#allocation2 + $0x28] sm:$0xff]
        %v3594 = vld [vmem:[#allocation2 + $0x30] sm:$0xff]
        %v3595 = vld [vmem:[#allocation2 + $0x38] sm:$0xff]
        %v3596 = vld [vmem:[#allocation2 + $0x40] sm:$0xff]
        %v3597 = vld [vmem:[#allocation2 + $0x48] sm:$0xff]
        %v3598 = vld [vmem:[#allocation2 + $0x50] sm:$0xff]
        %v3599 = vld [vmem:[#allocation2 + $0x58] sm:$0xff]
        %v3600 = vld [vmem:[#allocation2 + $0x60] sm:$0xff]
        %v3601 = vld [vmem:[#allocation2 + $0x68] sm:$0xff]
        %v3602 = vld [vmem:[#allocation2 + $0x70] sm:$0xff]
        %v3603 = vld [vmem:[#allocation2 + $0x78] sm:$0xff]
        %v3604 = vld [vmem:[#allocation2 + $0x80] sm:$0xff]
        %v3605 = vld [vmem:[#allocation2 + $0x88] sm:$0xff]
        %v3606 = vld [vmem:[#allocation2 + $0x90] sm:$0xff]
        %v3607 = vld [vmem:[#allocation2 + $0x98] sm:$0xff]
        %v3608 = vld [vmem:[#allocation2 + $0xa0] sm:$0xff]
        %v3609 = vld [vmem:[#allocation2 + $0xa8] sm:$0xff]
        %v3610 = vld [vmem:[#allocation2 + $0xb0] sm:$0xff]
        %v3611 = vld [vmem:[#allocation2 + $0xb8] sm:$0xff]
        %v3612 = vld [vmem:[#allocation2 + $0xc0] sm:$0xff]
        %v3613 = vld [vmem:[#allocation2 + $0xc8] sm:$0xff]
        %v3614 = vld [vmem:[#allocation2 + $0xd0] sm:$0xff]
        %v3615 = vld [vmem:[#allocation2 + $0xd8] sm:$0xff]
        %v3616 = vld [vmem:[#allocation2 + $0xe0] sm:$0xff]
        %v3617 = vld [vmem:[#allocation2 + $0xe8] sm:$0xff]
        %v3618 = vld [vmem:[#allocation2 + $0xf0] sm:$0xff]
        %v3619 = vld [vmem:[#allocation2 + $0xf8] sm:$0xff]
        %v3620 = vld [vmem:[%s210 + $0xa0] sm:$0xf]
        %v3621 = vld [vmem:[%s210 + $0xa4] sm:$0xf]
        %v3622 = vld [vmem:[%s210 + $0xa8] sm:$0xf]
        %v3623 = vld [vmem:[%s210 + $0xac] sm:$0xf]
        %v3624 = vld [vmem:[%s210 + $0xb0] sm:$0xf]
        %v3625 = vld [vmem:[%s210 + $0xb4] sm:$0xf]
        %v3626 = vld [vmem:[%s210 + $0xb8] sm:$0xf]
        %v3627 = vld [vmem:[%s210 + $0xbc] sm:$0xf]
        %v3628 = vunpack.c.l.b16 %v3479
        %v3629 = vunpack.c.l.b16 %v3482
        %v3630 = vunpack.c.l.b16 %v3486
        %v3631 = vunpack.c.l.b16 %v3489
        %v3632 = vunpack.c.l.b16 %v3493
        %v3633 = vunpack.c.l.b16 %v3496
        %v3634 = vunpack.c.l.b16 %v3500
        %v3635 = vunpack.c.l.b16 %v3503
        %v3636 = vunpack.c.l.b16 %v3507
        %v3637 = vunpack.c.l.b16 %v3510
        %v3638 = vunpack.c.l.b16 %v3514
        %v3639 = vunpack.c.l.b16 %v3517
        %v3640 = vunpack.c.l.b16 %v3521
        %v3641 = vunpack.c.l.b16 %v3524
        %v3642 = vunpack.c.l.b16 %v3528
        %v3643 = vunpack.c.l.b16 %v3531
        %v3644 = vunpack.c.l.b16 %v3535
        %v3645 = vunpack.c.l.b16 %v3538
        %v3646 = vunpack.c.l.b16 %v3542
        %v3647 = vunpack.c.l.b16 %v3545
        %v3648 = vunpack.c.l.b16 %v3549
        %v3649 = vunpack.c.l.b16 %v3552
        %v3650 = vunpack.c.l.b16 %v3556
        %v3651 = vunpack.c.l.b16 %v3559
        %v3652 = vunpack.c.l.b16 %v3563
        %v3653 = vunpack.c.l.b16 %v3566
        %v3654 = vunpack.c.l.b16 %v3570
        %v3655 = vunpack.c.l.b16 %v3573
        %v3656 = vunpack.c.l.b16 %v3577
        %v3657 = vunpack.c.l.b16 %v3580
        %v3658 = vunpack.c.l.b16 %v3584
        %v3659 = vunpack.c.l.b16 %v3587
        %v3660 = vpack.c.b16 %v3629, %v3628
        %v3661 = vpack.c.b16 %v3631, %v3630
        %v3662 = vpack.c.b16 %v3633, %v3632
        %v3663 = vpack.c.b16 %v3635, %v3634
        %v3664 = vpack.c.b16 %v3637, %v3636
        %v3665 = vpack.c.b16 %v3639, %v3638
        %v3666 = vpack.c.b16 %v3641, %v3640
        %v3667 = vpack.c.b16 %v3643, %v3642
        %v3668 = vpack.c.b16 %v3645, %v3644
        %v3669 = vpack.c.b16 %v3647, %v3646
        %v3670 = vpack.c.b16 %v3649, %v3648
        %v3671 = vpack.c.b16 %v3651, %v3650
        %v3672 = vpack.c.b16 %v3653, %v3652
        %v3673 = vpack.c.b16 %v3655, %v3654
        %v3674 = vpack.c.b16 %v3657, %v3656
        %v3675 = vpack.c.b16 %v3659, %v3658
        %v3684 = vunpack.c.l.b16 %v3620
        %v3685 = vunpack.c.l.b16 %v3621
        %v3686 = vunpack.c.l.b16 %v3622
        %v3687 = vunpack.c.l.b16 %v3623
        %v3688 = vunpack.c.l.b16 %v3624
        %v3689 = vunpack.c.l.b16 %v3625
        %v3690 = vunpack.c.l.b16 %v3626
        %v3691 = vunpack.c.l.b16 %v3627
        %v3692 = vpack.c.b16 %v3685, %v3684
        %v3693 = vpack.c.b16 %v3687, %v3686
        %v3694 = vpack.c.b16 %v3689, %v3688
        %v3695 = vpack.c.b16 %v3691, %v3690
        %v3701 = vsel %vm215, %v3660, 0
        %v3704 = vsel %vm215, %v3661, 0
        %v3707 = vsel %vm215, %v3662, 0
        %v3710 = vsel %vm215, %v3663, 0
        %v3713 = vsel %vm215, %v3664, 0
        %v3716 = vsel %vm215, %v3665, 0
        %v3719 = vsel %vm215, %v3666, 0
        %v3722 = vsel %vm215, %v3667, 0
        %v3725 = vsel %vm215, %v3668, 0
        %v3728 = vsel %vm215, %v3669, 0
        %v3731 = vsel %vm215, %v3670, 0
        %v3734 = vsel %vm215, %v3671, 0
        %v3737 = vsel %vm215, %v3672, 0
        %v3740 = vsel %vm215, %v3673, 0
        %v3743 = vsel %vm215, %v3674, 0
        %v3746 = vsel %vm215, %v3675, 0
        %3748 = vmatprep.subr.bf16.mxu0 0
        %3749 = vmatpush1.bf16.msra.mxu0 %v3692
        %3750 = vmatprep.subr.bf16.mxu0 0
        %3751 = vmatpush1.bf16.msra.mxu0 %v3693
        %3752 = vmatprep.subr.bf16.mxu0 0
        %3753 = vmatpush1.bf16.msra.mxu0 %v3694
        %3754 = vmatprep.subr.bf16.mxu0 0
        %3755 = vmatpush1.bf16.msra.mxu0 %v3695
        %3756 = vmatprep.subr.bf16.mxu0 0
        %3757 = vmatpush1.bf16.msra.mxu0 0
        %3758 = vmatprep.subr.bf16.mxu0 0
        %3759 = vmatpush1.bf16.msra.mxu0 0
        %3760 = vmatprep.subr.bf16.mxu0 0
        %3761 = vmatpush1.bf16.msra.mxu0 0
        %3762 = vmatprep.subr.bf16.mxu0 0
        %3763 = vmatpush1.bf16.msra.mxu0 0
        %3764 = vmatprep.subr.bf16.mxu0 0
        %3765 = vmatpush1.bf16.msra.mxu0 0
        %3766 = vmatprep.subr.bf16.mxu0 0
        %3767 = vmatpush1.bf16.msra.mxu0 0
        %3768 = vmatprep.subr.bf16.mxu0 0
        %3769 = vmatpush1.bf16.msra.mxu0 0
        %3770 = vmatprep.subr.bf16.mxu0 0
        %3771 = vmatpush1.bf16.msra.mxu0 0
        %3772 = vmatprep.subr.bf16.mxu0 0
        %3773 = vmatpush1.bf16.msra.mxu0 0
        %3774 = vmatprep.subr.bf16.mxu0 0
        %3775 = vmatpush1.bf16.msra.mxu0 0
        %3776 = vmatprep.subr.bf16.mxu0 0
        %3777 = vmatpush1.bf16.msra.mxu0 0
        %3778 = vmatprep.subr.bf16.mxu0 0
        %3779 = vmatpush1.bf16.msra.mxu0 0
        %3780 = vmatprep.mubr.bf16.mxu0 0
        %3781 = vmatmul.mubr.bf16.gmra.mrb[0].mxu0 %v3701
        %v3782 = vpop.f32.mrb[0].mxu0
        %v3783 = vadd.f32 0.0, %v3782
        %v3784 = vpop.f32.mrb[0].mxu0
        %v3785 = vpop.f32.mrb[0].mxu0
        %v3786 = vadd.f32 0.0, %v3785
        %v3787 = vpop.f32.mrb[0].mxu0
        %3788 = vmatprep.mubr.bf16.mxu0 0
        %3789 = vmatmul.mubr.bf16.gmra.mrb[0].mxu0 %v3704
        %v3790 = vpop.f32.mrb[0].mxu0
        %v3791 = vadd.f32 0.0, %v3790
        %v3792 = vpop.f32.mrb[0].mxu0
        %v3793 = vpop.f32.mrb[0].mxu0
        %v3794 = vadd.f32 0.0, %v3793
        %v3795 = vpop.f32.mrb[0].mxu0
        %3796 = vmatprep.mubr.bf16.mxu0 0
        %3797 = vmatmul.mubr.bf16.gmra.mrb[0].mxu0 %v3707
        %v3798 = vpop.f32.mrb[0].mxu0
        %v3799 = vadd.f32 0.0, %v3798
        %v3800 = vpop.f32.mrb[0].mxu0
        %v3801 = vpop.f32.mrb[0].mxu0
        %v3802 = vadd.f32 0.0, %v3801
        %v3803 = vpop.f32.mrb[0].mxu0
        %3804 = vmatprep.mubr.bf16.mxu0 0
        %3805 = vmatmul.mubr.bf16.gmra.mrb[0].mxu0 %v3710
        %v3806 = vpop.f32.mrb[0].mxu0
        %v3807 = vadd.f32 0.0, %v3806
        %v3808 = vpop.f32.mrb[0].mxu0
        %v3809 = vpop.f32.mrb[0].mxu0
        %v3810 = vadd.f32 0.0, %v3809
        %v3811 = vpop.f32.mrb[0].mxu0
        %3812 = vmatprep.mubr.bf16.mxu0 0
        %3813 = vmatmul.mubr.bf16.gmra.mrb[0].mxu0 %v3713
        %v3814 = vpop.f32.mrb[0].mxu0
        %v3815 = vadd.f32 0.0, %v3814
        %v3816 = vpop.f32.mrb[0].mxu0
        %v3817 = vpop.f32.mrb[0].mxu0
        %v3818 = vadd.f32 0.0, %v3817
        %v3819 = vpop.f32.mrb[0].mxu0
        %3820 = vmatprep.mubr.bf16.mxu0 0
        %3821 = vmatmul.mubr.bf16.gmra.mrb[0].mxu0 %v3716
        %v3822 = vpop.f32.mrb[0].mxu0
        %v3823 = vadd.f32 0.0, %v3822
        %v3824 = vpop.f32.mrb[0].mxu0
        %v3825 = vpop.f32.mrb[0].mxu0
        %v3826 = vadd.f32 0.0, %v3825
        %v3827 = vpop.f32.mrb[0].mxu0
        %3828 = vmatprep.mubr.bf16.mxu0 0
        %3829 = vmatmul.mubr.bf16.gmra.mrb[0].mxu0 %v3719
        %v3830 = vpop.f32.mrb[0].mxu0
        %v3831 = vadd.f32 0.0, %v3830
        %v3832 = vpop.f32.mrb[0].mxu0
        %v3833 = vpop.f32.mrb[0].mxu0
        %v3834 = vadd.f32 0.0, %v3833
        %v3835 = vpop.f32.mrb[0].mxu0
        %3836 = vmatprep.mubr.bf16.mxu0 0
        %3837 = vmatmul.mubr.bf16.gmra.mrb[0].mxu0 %v3722
        %v3838 = vpop.f32.mrb[0].mxu0
        %v3839 = vadd.f32 0.0, %v3838
        %v3840 = vpop.f32.mrb[0].mxu0
        %v3841 = vpop.f32.mrb[0].mxu0
        %v3842 = vadd.f32 0.0, %v3841
        %v3843 = vpop.f32.mrb[0].mxu0
        %3844 = vmatprep.mubr.bf16.mxu0 0
        %3845 = vmatmul.mubr.bf16.gmra.mrb[0].mxu0 %v3725
        %v3846 = vpop.f32.mrb[0].mxu0
        %v3847 = vadd.f32 0.0, %v3846
        %v3848 = vpop.f32.mrb[0].mxu0
        %v3849 = vpop.f32.mrb[0].mxu0
        %v3850 = vadd.f32 0.0, %v3849
        %v3851 = vpop.f32.mrb[0].mxu0
        %3852 = vmatprep.mubr.bf16.mxu0 0
        %3853 = vmatmul.mubr.bf16.gmra.mrb[0].mxu0 %v3728
        %v3854 = vpop.f32.mrb[0].mxu0
        %v3855 = vadd.f32 0.0, %v3854
        %v3856 = vpop.f32.mrb[0].mxu0
        %v3857 = vpop.f32.mrb[0].mxu0
        %v3858 = vadd.f32 0.0, %v3857
        %v3859 = vpop.f32.mrb[0].mxu0
        %3860 = vmatprep.mubr.bf16.mxu0 0
        %3861 = vmatmul.mubr.bf16.gmra.mrb[0].mxu0 %v3731
        %v3862 = vpop.f32.mrb[0].mxu0
        %v3863 = vadd.f32 0.0, %v3862
        %v3864 = vpop.f32.mrb[0].mxu0
        %v3865 = vpop.f32.mrb[0].mxu0
        %v3866 = vadd.f32 0.0, %v3865
        %v3867 = vpop.f32.mrb[0].mxu0
        %3868 = vmatprep.mubr.bf16.mxu0 0
        %3869 = vmatmul.mubr.bf16.gmra.mrb[0].mxu0 %v3734
        %v3870 = vpop.f32.mrb[0].mxu0
        %v3871 = vadd.f32 0.0, %v3870
        %v3872 = vpop.f32.mrb[0].mxu0
        %v3873 = vpop.f32.mrb[0].mxu0
        %v3874 = vadd.f32 0.0, %v3873
        %v3875 = vpop.f32.mrb[0].mxu0
        %3876 = vmatprep.mubr.bf16.mxu0 0
        %3877 = vmatmul.mubr.bf16.gmra.mrb[0].mxu0 %v3737
        %v3878 = vpop.f32.mrb[0].mxu0
        %v3879 = vadd.f32 0.0, %v3878
        %v3880 = vpop.f32.mrb[0].mxu0
        %v3881 = vpop.f32.mrb[0].mxu0
        %v3882 = vadd.f32 0.0, %v3881
        %v3883 = vpop.f32.mrb[0].mxu0
        %3884 = vmatprep.mubr.bf16.mxu0 0
        %3885 = vmatmul.mubr.bf16.gmra.mrb[0].mxu0 %v3740
        %v3886 = vpop.f32.mrb[0].mxu0
        %v3887 = vadd.f32 0.0, %v3886
        %v3888 = vpop.f32.mrb[0].mxu0
        %v3889 = vpop.f32.mrb[0].mxu0
        %v3890 = vadd.f32 0.0, %v3889
        %v3891 = vpop.f32.mrb[0].mxu0
        %3892 = vmatprep.mubr.bf16.mxu0 0
        %3893 = vmatmul.mubr.bf16.gmra.mrb[0].mxu0 %v3743
        %v3894 = vpop.f32.mrb[0].mxu0
        %v3895 = vadd.f32 0.0, %v3894
        %v3896 = vpop.f32.mrb[0].mxu0
        %v3897 = vpop.f32.mrb[0].mxu0
        %v3898 = vadd.f32 0.0, %v3897
        %v3899 = vpop.f32.mrb[0].mxu0
        %3900 = vmatprep.mubr.bf16.mxu0 0
        %3901 = vmatmul.mubr.bf16.gmra.mrb[0].mxu0 %v3746
        %v3902 = vpop.f32.mrb[0].mxu0
        %v3903 = vadd.f32 0.0, %v3902
        %v3904 = vpop.f32.mrb[0].mxu0
        %v3905 = vpop.f32.mrb[0].mxu0
        %v3906 = vadd.f32 0.0, %v3905
        %v3907 = vpop.f32.mrb[0].mxu0
        %3908 = vdwg.mxu0
        %v3909 = vadd.f32 %v3588, %v3783
        %v3910 = vadd.f32 %v3589, %v3786
        %v3911 = vadd.f32 %v3590, %v3791
        %v3912 = vadd.f32 %v3591, %v3794
        %v3913 = vadd.f32 %v3592, %v3799
        %v3914 = vadd.f32 %v3593, %v3802
        %v3915 = vadd.f32 %v3594, %v3807
        %v3916 = vadd.f32 %v3595, %v3810
        %v3917 = vadd.f32 %v3596, %v3815
        %v3918 = vadd.f32 %v3597, %v3818
        %v3919 = vadd.f32 %v3598, %v3823
        %v3920 = vadd.f32 %v3599, %v3826
        %v3921 = vadd.f32 %v3600, %v3831
        %v3922 = vadd.f32 %v3601, %v3834
        %v3923 = vadd.f32 %v3602, %v3839
        %v3924 = vadd.f32 %v3603, %v3842
        %v3925 = vadd.f32 %v3604, %v3847
        %v3926 = vadd.f32 %v3605, %v3850
        %v3927 = vadd.f32 %v3606, %v3855
        %v3928 = vadd.f32 %v3607, %v3858
        %v3929 = vadd.f32 %v3608, %v3863
        %v3930 = vadd.f32 %v3609, %v3866
        %v3931 = vadd.f32 %v3610, %v3871
        %v3932 = vadd.f32 %v3611, %v3874
        %v3933 = vadd.f32 %v3612, %v3879
        %v3934 = vadd.f32 %v3613, %v3882
        %v3935 = vadd.f32 %v3614, %v3887
        %v3936 = vadd.f32 %v3615, %v3890
        %v3937 = vadd.f32 %v3616, %v3895
        %v3938 = vadd.f32 %v3617, %v3898
        %v3939 = vadd.f32 %v3618, %v3903
        %v3940 = vadd.f32 %v3619, %v3906
        %3941 = vst.msk [vmem:[#allocation2] sm:$0xff] %vm215, %v3909
        %3942 = vst.msk [vmem:[#allocation2 + $0x8] sm:$0xff] %vm215, %v3910
        %3943 = vst.msk [vmem:[#allocation2 + $0x10] sm:$0xff] %vm215, %v3911
        %3944 = vst.msk [vmem:[#allocation2 + $0x18] sm:$0xff] %vm215, %v3912
        %3945 = vst.msk [vmem:[#allocation2 + $0x20] sm:$0xff] %vm215, %v3913
        %3946 = vst.msk [vmem:[#allocation2 + $0x28] sm:$0xff] %vm215, %v3914
        %3947 = vst.msk [vmem:[#allocation2 + $0x30] sm:$0xff] %vm215, %v3915
        %3948 = vst.msk [vmem:[#allocation2 + $0x38] sm:$0xff] %vm215, %v3916
        %3949 = vst.msk [vmem:[#allocation2 + $0x40] sm:$0xff] %vm215, %v3917
        %3950 = vst.msk [vmem:[#allocation2 + $0x48] sm:$0xff] %vm215, %v3918
        %3951 = vst.msk [vmem:[#allocation2 + $0x50] sm:$0xff] %vm215, %v3919
        %3952 = vst.msk [vmem:[#allocation2 + $0x58] sm:$0xff] %vm215, %v3920
        %3953 = vst.msk [vmem:[#allocation2 + $0x60] sm:$0xff] %vm215, %v3921
        %3954 = vst.msk [vmem:[#allocation2 + $0x68] sm:$0xff] %vm215, %v3922
        %3955 = vst.msk [vmem:[#allocation2 + $0x70] sm:$0xff] %vm215, %v3923
        %3956 = vst.msk [vmem:[#allocation2 + $0x78] sm:$0xff] %vm215, %v3924
        %3957 = vst.msk [vmem:[#allocation2 + $0x80] sm:$0xff] %vm215, %v3925
        %3958 = vst.msk [vmem:[#allocation2 + $0x88] sm:$0xff] %vm215, %v3926
        %3959 = vst.msk [vmem:[#allocation2 + $0x90] sm:$0xff] %vm215, %v3927
        %3960 = vst.msk [vmem:[#allocation2 + $0x98] sm:$0xff] %vm215, %v3928
        %3961 = vst.msk [vmem:[#allocation2 + $0xa0] sm:$0xff] %vm215, %v3929
        %3962 = vst.msk [vmem:[#allocation2 + $0xa8] sm:$0xff] %vm215, %v3930
        %3963 = vst.msk [vmem:[#allocation2 + $0xb0] sm:$0xff] %vm215, %v3931
        %3964 = vst.msk [vmem:[#allocation2 + $0xb8] sm:$0xff] %vm215, %v3932
        %3965 = vst.msk [vmem:[#allocation2 + $0xc0] sm:$0xff] %vm215, %v3933
        %3966 = vst.msk [vmem:[#allocation2 + $0xc8] sm:$0xff] %vm215, %v3934
        %3967 = vst.msk [vmem:[#allocation2 + $0xd0] sm:$0xff] %vm215, %v3935
        %3968 = vst.msk [vmem:[#allocation2 + $0xd8] sm:$0xff] %vm215, %v3936
        %3969 = vst.msk [vmem:[#allocation2 + $0xe0] sm:$0xff] %vm215, %v3937
        %3970 = vst.msk [vmem:[#allocation2 + $0xe8] sm:$0xff] %vm215, %v3938
        %3971 = vst.msk [vmem:[#allocation2 + $0xf0] sm:$0xff] %vm215, %v3939
        %3972 = vst.msk [vmem:[#allocation2 + $0xf8] sm:$0xff] %vm215, %v3940
        %s3973 = scalar_lea.vmem %s206, 24
        %v3974 = vld [vmem:[%s3973] sm:$0xf]
        %v3975 = vld [vmem:[%s3973 + $0x4] sm:$0xf]
        %v3976 = vld [vmem:[%s3973 + $0xc] sm:$0xf]
        %v3977 = vld [vmem:[%s3973 + $0x10] sm:$0xf]
        %v3978 = vld [vmem:[%s3973 + $0x18] sm:$0xf]
        %v3979 = vld [vmem:[%s3973 + $0x1c] sm:$0xf]
        %v3980 = vld [vmem:[%s3973 + $0x24] sm:$0xf]
        %v3981 = vld [vmem:[%s3973 + $0x28] sm:$0xf]
        %v3982 = vld [vmem:[%s3973 + $0x30] sm:$0xf]
        %v3983 = vld [vmem:[%s3973 + $0x34] sm:$0xf]
        %v3984 = vld [vmem:[%s3973 + $0x3c] sm:$0xf]
        %v3985 = vld [vmem:[%s3973 + $0x40] sm:$0xf]
        %v3986 = vld [vmem:[%s3973 + $0x48] sm:$0xf]
        %v3987 = vld [vmem:[%s3973 + $0x4c] sm:$0xf]
        %v3988 = vld [vmem:[%s3973 + $0x54] sm:$0xf]
        %v3989 = vld [vmem:[%s3973 + $0x58] sm:$0xf]
        %v3990 = vld [vmem:[%s3973 + $0x60] sm:$0xf]
        %v3991 = vld [vmem:[%s3973 + $0x64] sm:$0xf]
        %v3992 = vld [vmem:[%s3973 + $0x6c] sm:$0xf]
        %v3993 = vld [vmem:[%s3973 + $0x70] sm:$0xf]
        %v3994 = vld [vmem:[%s3973 + $0x78] sm:$0xf]
        %v3995 = vld [vmem:[%s3973 + $0x7c] sm:$0xf]
        %v3996 = vld [vmem:[%s3973 + $0x84] sm:$0xf]
        %v3997 = vld [vmem:[%s3973 + $0x88] sm:$0xf]
        %v3998 = vld [vmem:[%s3973 + $0x90] sm:$0xf]
        %v3999 = vld [vmem:[%s3973 + $0x94] sm:$0xf]
        %v4000 = vld [vmem:[%s3973 + $0x9c] sm:$0xf]
        %v4001 = vld [vmem:[%s3973 + $0xa0] sm:$0xf]
        %v4002 = vld [vmem:[%s3973 + $0xa8] sm:$0xf]
        %v4003 = vld [vmem:[%s3973 + $0xac] sm:$0xf]
        %v4004 = vld [vmem:[%s3973 + $0xb4] sm:$0xf]
        %v4005 = vld [vmem:[%s3973 + $0xb8] sm:$0xf]
        %v4006 = vld [vmem:[#allocation2] sm:$0xff]
        %v4007 = vld [vmem:[#allocation2 + $0x8] sm:$0xff]
        %v4008 = vld [vmem:[#allocation2 + $0x10] sm:$0xff]
        %v4009 = vld [vmem:[#allocation2 + $0x18] sm:$0xff]
        %v4010 = vld [vmem:[#allocation2 + $0x20] sm:$0xff]
        %v4011 = vld [vmem:[#allocation2 + $0x28] sm:$0xff]
        %v4012 = vld [vmem:[#allocation2 + $0x30] sm:$0xff]
        %v4013 = vld [vmem:[#allocation2 + $0x38] sm:$0xff]
        %v4014 = vld [vmem:[#allocation2 + $0x40] sm:$0xff]
        %v4015 = vld [vmem:[#allocation2 + $0x48] sm:$0xff]
        %v4016 = vld [vmem:[#allocation2 + $0x50] sm:$0xff]
        %v4017 = vld [vmem:[#allocation2 + $0x58] sm:$0xff]
        %v4018 = vld [vmem:[#allocation2 + $0x60] sm:$0xff]
        %v4019 = vld [vmem:[#allocation2 + $0x68] sm:$0xff]
        %v4020 = vld [vmem:[#allocation2 + $0x70] sm:$0xff]
        %v4021 = vld [vmem:[#allocation2 + $0x78] sm:$0xff]
        %v4022 = vld [vmem:[#allocation2 + $0x80] sm:$0xff]
        %v4023 = vld [vmem:[#allocation2 + $0x88] sm:$0xff]
        %v4024 = vld [vmem:[#allocation2 + $0x90] sm:$0xff]
        %v4025 = vld [vmem:[#allocation2 + $0x98] sm:$0xff]
        %v4026 = vld [vmem:[#allocation2 + $0xa0] sm:$0xff]
        %v4027 = vld [vmem:[#allocation2 + $0xa8] sm:$0xff]
        %v4028 = vld [vmem:[#allocation2 + $0xb0] sm:$0xff]
        %v4029 = vld [vmem:[#allocation2 + $0xb8] sm:$0xff]
        %v4030 = vld [vmem:[#allocation2 + $0xc0] sm:$0xff]
        %v4031 = vld [vmem:[#allocation2 + $0xc8] sm:$0xff]
        %v4032 = vld [vmem:[#allocation2 + $0xd0] sm:$0xff]
        %v4033 = vld [vmem:[#allocation2 + $0xd8] sm:$0xff]
        %v4034 = vld [vmem:[#allocation2 + $0xe0] sm:$0xff]
        %v4035 = vld [vmem:[#allocation2 + $0xe8] sm:$0xff]
        %v4036 = vld [vmem:[#allocation2 + $0xf0] sm:$0xff]
        %v4037 = vld [vmem:[#allocation2 + $0xf8] sm:$0xff]
        %v4038 = vld [vmem:[%s210 + $0xc0] sm:$0xf]
        %v4039 = vld [vmem:[%s210 + $0xc4] sm:$0xf]
        %v4040 = vld [vmem:[%s210 + $0xc8] sm:$0xf]
        %v4041 = vld [vmem:[%s210 + $0xcc] sm:$0xf]
        %v4042 = vld [vmem:[%s210 + $0xd0] sm:$0xf]
        %v4043 = vld [vmem:[%s210 + $0xd4] sm:$0xf]
        %v4044 = vld [vmem:[%s210 + $0xd8] sm:$0xf]
        %v4045 = vld [vmem:[%s210 + $0xdc] sm:$0xf]
        %v4078 = vunpack.c.l.b16 %v3974
        %v4079 = vunpack.c.l.b16 %v3975
        %v4080 = vunpack.c.l.b16 %v3976
        %v4081 = vunpack.c.l.b16 %v3977
        %v4082 = vunpack.c.l.b16 %v3978
        %v4083 = vunpack.c.l.b16 %v3979
        %v4084 = vunpack.c.l.b16 %v3980
        %v4085 = vunpack.c.l.b16 %v3981
        %v4086 = vunpack.c.l.b16 %v3982
        %v4087 = vunpack.c.l.b16 %v3983
        %v4088 = vunpack.c.l.b16 %v3984
        %v4089 = vunpack.c.l.b16 %v3985
        %v4090 = vunpack.c.l.b16 %v3986
        %v4091 = vunpack.c.l.b16 %v3987
        %v4092 = vunpack.c.l.b16 %v3988
        %v4093 = vunpack.c.l.b16 %v3989
        %v4094 = vunpack.c.l.b16 %v3990
        %v4095 = vunpack.c.l.b16 %v3991
        %v4096 = vunpack.c.l.b16 %v3992
        %v4097 = vunpack.c.l.b16 %v3993
        %v4098 = vunpack.c.l.b16 %v3994
        %v4099 = vunpack.c.l.b16 %v3995
        %v4100 = vunpack.c.l.b16 %v3996
        %v4101 = vunpack.c.l.b16 %v3997
        %v4102 = vunpack.c.l.b16 %v3998
        %v4103 = vunpack.c.l.b16 %v3999
        %v4104 = vunpack.c.l.b16 %v4000
        %v4105 = vunpack.c.l.b16 %v4001
        %v4106 = vunpack.c.l.b16 %v4002
        %v4107 = vunpack.c.l.b16 %v4003
        %v4108 = vunpack.c.l.b16 %v4004
        %v4109 = vunpack.c.l.b16 %v4005
        %v4110 = vpack.c.b16 %v4079, %v4078
        %v4111 = vpack.c.b16 %v4081, %v4080
        %v4112 = vpack.c.b16 %v4083, %v4082
        %v4113 = vpack.c.b16 %v4085, %v4084
        %v4114 = vpack.c.b16 %v4087, %v4086
        %v4115 = vpack.c.b16 %v4089, %v4088
        %v4116 = vpack.c.b16 %v4091, %v4090
        %v4117 = vpack.c.b16 %v4093, %v4092
        %v4118 = vpack.c.b16 %v4095, %v4094
        %v4119 = vpack.c.b16 %v4097, %v4096
        %v4120 = vpack.c.b16 %v4099, %v4098
        %v4121 = vpack.c.b16 %v4101, %v4100
        %v4122 = vpack.c.b16 %v4103, %v4102
        %v4123 = vpack.c.b16 %v4105, %v4104
        %v4124 = vpack.c.b16 %v4107, %v4106
        %v4125 = vpack.c.b16 %v4109, %v4108
        %v4134 = vunpack.c.l.b16 %v4038
        %v4135 = vunpack.c.l.b16 %v4039
        %v4136 = vunpack.c.l.b16 %v4040
        %v4137 = vunpack.c.l.b16 %v4041
        %v4138 = vunpack.c.l.b16 %v4042
        %v4139 = vunpack.c.l.b16 %v4043
        %v4140 = vunpack.c.l.b16 %v4044
        %v4141 = vunpack.c.l.b16 %v4045
        %v4142 = vpack.c.b16 %v4135, %v4134
        %v4143 = vpack.c.b16 %v4137, %v4136
        %v4144 = vpack.c.b16 %v4139, %v4138
        %v4145 = vpack.c.b16 %v4141, %v4140
        %v4151 = vsel %vm215, %v4110, 0
        %v4154 = vsel %vm215, %v4111, 0
        %v4157 = vsel %vm215, %v4112, 0
        %v4160 = vsel %vm215, %v4113, 0
        %v4163 = vsel %vm215, %v4114, 0
        %v4166 = vsel %vm215, %v4115, 0
        %v4169 = vsel %vm215, %v4116, 0
        %v4172 = vsel %vm215, %v4117, 0
        %v4175 = vsel %vm215, %v4118, 0
        %v4178 = vsel %vm215, %v4119, 0
        %v4181 = vsel %vm215, %v4120, 0
        %v4184 = vsel %vm215, %v4121, 0
        %v4187 = vsel %vm215, %v4122, 0
        %v4190 = vsel %vm215, %v4123, 0
        %v4193 = vsel %vm215, %v4124, 0
        %v4196 = vsel %vm215, %v4125, 0
        %4198 = vmatprep.subr.bf16.mxu0 0
        %4199 = vmatpush1.bf16.msra.mxu0 %v4142
        %4200 = vmatprep.subr.bf16.mxu0 0
        %4201 = vmatpush1.bf16.msra.mxu0 %v4143
        %4202 = vmatprep.subr.bf16.mxu0 0
        %4203 = vmatpush1.bf16.msra.mxu0 %v4144
        %4204 = vmatprep.subr.bf16.mxu0 0
        %4205 = vmatpush1.bf16.msra.mxu0 %v4145
        %4206 = vmatprep.subr.bf16.mxu0 0
        %4207 = vmatpush1.bf16.msra.mxu0 0
        %4208 = vmatprep.subr.bf16.mxu0 0
        %4209 = vmatpush1.bf16.msra.mxu0 0
        %4210 = vmatprep.subr.bf16.mxu0 0
        %4211 = vmatpush1.bf16.msra.mxu0 0
        %4212 = vmatprep.subr.bf16.mxu0 0
        %4213 = vmatpush1.bf16.msra.mxu0 0
        %4214 = vmatprep.subr.bf16.mxu0 0
        %4215 = vmatpush1.bf16.msra.mxu0 0
        %4216 = vmatprep.subr.bf16.mxu0 0
        %4217 = vmatpush1.bf16.msra.mxu0 0
        %4218 = vmatprep.subr.bf16.mxu0 0
        %4219 = vmatpush1.bf16.msra.mxu0 0
        %4220 = vmatprep.subr.bf16.mxu0 0
        %4221 = vmatpush1.bf16.msra.mxu0 0
        %4222 = vmatprep.subr.bf16.mxu0 0
        %4223 = vmatpush1.bf16.msra.mxu0 0
        %4224 = vmatprep.subr.bf16.mxu0 0
        %4225 = vmatpush1.bf16.msra.mxu0 0
        %4226 = vmatprep.subr.bf16.mxu0 0
        %4227 = vmatpush1.bf16.msra.mxu0 0
        %4228 = vmatprep.subr.bf16.mxu0 0
        %4229 = vmatpush1.bf16.msra.mxu0 0
        %4230 = vmatprep.mubr.bf16.mxu0 0
        %4231 = vmatmul.mubr.bf16.gmra.mrb[0].mxu0 %v4151
        %v4232 = vpop.f32.mrb[0].mxu0
        %v4233 = vadd.f32 0.0, %v4232
        %v4234 = vpop.f32.mrb[0].mxu0
        %v4235 = vpop.f32.mrb[0].mxu0
        %v4236 = vadd.f32 0.0, %v4235
        %v4237 = vpop.f32.mrb[0].mxu0
        %4238 = vmatprep.mubr.bf16.mxu0 0
        %4239 = vmatmul.mubr.bf16.gmra.mrb[0].mxu0 %v4154
        %v4240 = vpop.f32.mrb[0].mxu0
        %v4241 = vadd.f32 0.0, %v4240
        %v4242 = vpop.f32.mrb[0].mxu0
        %v4243 = vpop.f32.mrb[0].mxu0
        %v4244 = vadd.f32 0.0, %v4243
        %v4245 = vpop.f32.mrb[0].mxu0
        %4246 = vmatprep.mubr.bf16.mxu0 0
        %4247 = vmatmul.mubr.bf16.gmra.mrb[0].mxu0 %v4157
        %v4248 = vpop.f32.mrb[0].mxu0
        %v4249 = vadd.f32 0.0, %v4248
        %v4250 = vpop.f32.mrb[0].mxu0
        %v4251 = vpop.f32.mrb[0].mxu0
        %v4252 = vadd.f32 0.0, %v4251
        %v4253 = vpop.f32.mrb[0].mxu0
        %4254 = vmatprep.mubr.bf16.mxu0 0
        %4255 = vmatmul.mubr.bf16.gmra.mrb[0].mxu0 %v4160
        %v4256 = vpop.f32.mrb[0].mxu0
        %v4257 = vadd.f32 0.0, %v4256
        %v4258 = vpop.f32.mrb[0].mxu0
        %v4259 = vpop.f32.mrb[0].mxu0
        %v4260 = vadd.f32 0.0, %v4259
        %v4261 = vpop.f32.mrb[0].mxu0
        %4262 = vmatprep.mubr.bf16.mxu0 0
        %4263 = vmatmul.mubr.bf16.gmra.mrb[0].mxu0 %v4163
        %v4264 = vpop.f32.mrb[0].mxu0
        %v4265 = vadd.f32 0.0, %v4264
        %v4266 = vpop.f32.mrb[0].mxu0
        %v4267 = vpop.f32.mrb[0].mxu0
        %v4268 = vadd.f32 0.0, %v4267
        %v4269 = vpop.f32.mrb[0].mxu0
        %4270 = vmatprep.mubr.bf16.mxu0 0
        %4271 = vmatmul.mubr.bf16.gmra.mrb[0].mxu0 %v4166
        %v4272 = vpop.f32.mrb[0].mxu0
        %v4273 = vadd.f32 0.0, %v4272
        %v4274 = vpop.f32.mrb[0].mxu0
        %v4275 = vpop.f32.mrb[0].mxu0
        %v4276 = vadd.f32 0.0, %v4275
        %v4277 = vpop.f32.mrb[0].mxu0
        %4278 = vmatprep.mubr.bf16.mxu0 0
        %4279 = vmatmul.mubr.bf16.gmra.mrb[0].mxu0 %v4169
        %v4280 = vpop.f32.mrb[0].mxu0
        %v4281 = vadd.f32 0.0, %v4280
        %v4282 = vpop.f32.mrb[0].mxu0
        %v4283 = vpop.f32.mrb[0].mxu0
        %v4284 = vadd.f32 0.0, %v4283
        %v4285 = vpop.f32.mrb[0].mxu0
        %4286 = vmatprep.mubr.bf16.mxu0 0
        %4287 = vmatmul.mubr.bf16.gmra.mrb[0].mxu0 %v4172
        %v4288 = vpop.f32.mrb[0].mxu0
        %v4289 = vadd.f32 0.0, %v4288
        %v4290 = vpop.f32.mrb[0].mxu0
        %v4291 = vpop.f32.mrb[0].mxu0
        %v4292 = vadd.f32 0.0, %v4291
        %v4293 = vpop.f32.mrb[0].mxu0
        %4294 = vmatprep.mubr.bf16.mxu0 0
        %4295 = vmatmul.mubr.bf16.gmra.mrb[0].mxu0 %v4175
        %v4296 = vpop.f32.mrb[0].mxu0
        %v4297 = vadd.f32 0.0, %v4296
        %v4298 = vpop.f32.mrb[0].mxu0
        %v4299 = vpop.f32.mrb[0].mxu0
        %v4300 = vadd.f32 0.0, %v4299
        %v4301 = vpop.f32.mrb[0].mxu0
        %4302 = vmatprep.mubr.bf16.mxu0 0
        %4303 = vmatmul.mubr.bf16.gmra.mrb[0].mxu0 %v4178
        %v4304 = vpop.f32.mrb[0].mxu0
        %v4305 = vadd.f32 0.0, %v4304
        %v4306 = vpop.f32.mrb[0].mxu0
        %v4307 = vpop.f32.mrb[0].mxu0
        %v4308 = vadd.f32 0.0, %v4307
        %v4309 = vpop.f32.mrb[0].mxu0
        %4310 = vmatprep.mubr.bf16.mxu0 0
        %4311 = vmatmul.mubr.bf16.gmra.mrb[0].mxu0 %v4181
        %v4312 = vpop.f32.mrb[0].mxu0
        %v4313 = vadd.f32 0.0, %v4312
        %v4314 = vpop.f32.mrb[0].mxu0
        %v4315 = vpop.f32.mrb[0].mxu0
        %v4316 = vadd.f32 0.0, %v4315
        %v4317 = vpop.f32.mrb[0].mxu0
        %4318 = vmatprep.mubr.bf16.mxu0 0
        %4319 = vmatmul.mubr.bf16.gmra.mrb[0].mxu0 %v4184
        %v4320 = vpop.f32.mrb[0].mxu0
        %v4321 = vadd.f32 0.0, %v4320
        %v4322 = vpop.f32.mrb[0].mxu0
        %v4323 = vpop.f32.mrb[0].mxu0
        %v4324 = vadd.f32 0.0, %v4323
        %v4325 = vpop.f32.mrb[0].mxu0
        %4326 = vmatprep.mubr.bf16.mxu0 0
        %4327 = vmatmul.mubr.bf16.gmra.mrb[0].mxu0 %v4187
        %v4328 = vpop.f32.mrb[0].mxu0
        %v4329 = vadd.f32 0.0, %v4328
        %v4330 = vpop.f32.mrb[0].mxu0
        %v4331 = vpop.f32.mrb[0].mxu0
        %v4332 = vadd.f32 0.0, %v4331
        %v4333 = vpop.f32.mrb[0].mxu0
        %4334 = vmatprep.mubr.bf16.mxu0 0
        %4335 = vmatmul.mubr.bf16.gmra.mrb[0].mxu0 %v4190
        %v4336 = vpop.f32.mrb[0].mxu0
        %v4337 = vadd.f32 0.0, %v4336
        %v4338 = vpop.f32.mrb[0].mxu0
        %v4339 = vpop.f32.mrb[0].mxu0
        %v4340 = vadd.f32 0.0, %v4339
        %v4341 = vpop.f32.mrb[0].mxu0
        %4342 = vmatprep.mubr.bf16.mxu0 0
        %4343 = vmatmul.mubr.bf16.gmra.mrb[0].mxu0 %v4193
        %v4344 = vpop.f32.mrb[0].mxu0
        %v4345 = vadd.f32 0.0, %v4344
        %v4346 = vpop.f32.mrb[0].mxu0
        %v4347 = vpop.f32.mrb[0].mxu0
        %v4348 = vadd.f32 0.0, %v4347
        %v4349 = vpop.f32.mrb[0].mxu0
        %4350 = vmatprep.mubr.bf16.mxu0 0
        %4351 = vmatmul.mubr.bf16.gmra.mrb[0].mxu0 %v4196
        %v4352 = vpop.f32.mrb[0].mxu0
        %v4353 = vadd.f32 0.0, %v4352
        %v4354 = vpop.f32.mrb[0].mxu0
        %v4355 = vpop.f32.mrb[0].mxu0
        %v4356 = vadd.f32 0.0, %v4355
        %v4357 = vpop.f32.mrb[0].mxu0
        %4358 = vdwg.mxu0
        %v4359 = vadd.f32 %v4006, %v4233
        %v4360 = vadd.f32 %v4007, %v4236
        %v4361 = vadd.f32 %v4008, %v4241
        %v4362 = vadd.f32 %v4009, %v4244
        %v4363 = vadd.f32 %v4010, %v4249
        %v4364 = vadd.f32 %v4011, %v4252
        %v4365 = vadd.f32 %v4012, %v4257
        %v4366 = vadd.f32 %v4013, %v4260
        %v4367 = vadd.f32 %v4014, %v4265
        %v4368 = vadd.f32 %v4015, %v4268
        %v4369 = vadd.f32 %v4016, %v4273
        %v4370 = vadd.f32 %v4017, %v4276
        %v4371 = vadd.f32 %v4018, %v4281
        %v4372 = vadd.f32 %v4019, %v4284
        %v4373 = vadd.f32 %v4020, %v4289
        %v4374 = vadd.f32 %v4021, %v4292
        %v4375 = vadd.f32 %v4022, %v4297
        %v4376 = vadd.f32 %v4023, %v4300
        %v4377 = vadd.f32 %v4024, %v4305
        %v4378 = vadd.f32 %v4025, %v4308
        %v4379 = vadd.f32 %v4026, %v4313
        %v4380 = vadd.f32 %v4027, %v4316
        %v4381 = vadd.f32 %v4028, %v4321
        %v4382 = vadd.f32 %v4029, %v4324
        %v4383 = vadd.f32 %v4030, %v4329
        %v4384 = vadd.f32 %v4031, %v4332
        %v4385 = vadd.f32 %v4032, %v4337
        %v4386 = vadd.f32 %v4033, %v4340
        %v4387 = vadd.f32 %v4034, %v4345
        %v4388 = vadd.f32 %v4035, %v4348
        %v4389 = vadd.f32 %v4036, %v4353
        %v4390 = vadd.f32 %v4037, %v4356
        %4391 = vst.msk [vmem:[#allocation2] sm:$0xff] %vm215, %v4359
        %4392 = vst.msk [vmem:[#allocation2 + $0x8] sm:$0xff] %vm215, %v4360
        %4393 = vst.msk [vmem:[#allocation2 + $0x10] sm:$0xff] %vm215, %v4361
        %4394 = vst.msk [vmem:[#allocation2 + $0x18] sm:$0xff] %vm215, %v4362
        %4395 = vst.msk [vmem:[#allocation2 + $0x20] sm:$0xff] %vm215, %v4363
        %4396 = vst.msk [vmem:[#allocation2 + $0x28] sm:$0xff] %vm215, %v4364
        %4397 = vst.msk [vmem:[#allocation2 + $0x30] sm:$0xff] %vm215, %v4365
        %4398 = vst.msk [vmem:[#allocation2 + $0x38] sm:$0xff] %vm215, %v4366
        %4399 = vst.msk [vmem:[#allocation2 + $0x40] sm:$0xff] %vm215, %v4367
        %4400 = vst.msk [vmem:[#allocation2 + $0x48] sm:$0xff] %vm215, %v4368
        %4401 = vst.msk [vmem:[#allocation2 + $0x50] sm:$0xff] %vm215, %v4369
        %4402 = vst.msk [vmem:[#allocation2 + $0x58] sm:$0xff] %vm215, %v4370
        %4403 = vst.msk [vmem:[#allocation2 + $0x60] sm:$0xff] %vm215, %v4371
        %4404 = vst.msk [vmem:[#allocation2 + $0x68] sm:$0xff] %vm215, %v4372
        %4405 = vst.msk [vmem:[#allocation2 + $0x70] sm:$0xff] %vm215, %v4373
        %4406 = vst.msk [vmem:[#allocation2 + $0x78] sm:$0xff] %vm215, %v4374
        %4407 = vst.msk [vmem:[#allocation2 + $0x80] sm:$0xff] %vm215, %v4375
        %4408 = vst.msk [vmem:[#allocation2 + $0x88] sm:$0xff] %vm215, %v4376
        %4409 = vst.msk [vmem:[#allocation2 + $0x90] sm:$0xff] %vm215, %v4377
        %4410 = vst.msk [vmem:[#allocation2 + $0x98] sm:$0xff] %vm215, %v4378
        %4411 = vst.msk [vmem:[#allocation2 + $0xa0] sm:$0xff] %vm215, %v4379
        %4412 = vst.msk [vmem:[#allocation2 + $0xa8] sm:$0xff] %vm215, %v4380
        %4413 = vst.msk [vmem:[#allocation2 + $0xb0] sm:$0xff] %vm215, %v4381
        %4414 = vst.msk [vmem:[#allocation2 + $0xb8] sm:$0xff] %vm215, %v4382
        %4415 = vst.msk [vmem:[#allocation2 + $0xc0] sm:$0xff] %vm215, %v4383
        %4416 = vst.msk [vmem:[#allocation2 + $0xc8] sm:$0xff] %vm215, %v4384
        %4417 = vst.msk [vmem:[#allocation2 + $0xd0] sm:$0xff] %vm215, %v4385
        %4418 = vst.msk [vmem:[#allocation2 + $0xd8] sm:$0xff] %vm215, %v4386
        %4419 = vst.msk [vmem:[#allocation2 + $0xe0] sm:$0xff] %vm215, %v4387
        %4420 = vst.msk [vmem:[#allocation2 + $0xe8] sm:$0xff] %vm215, %v4388
        %4421 = vst.msk [vmem:[#allocation2 + $0xf0] sm:$0xff] %vm215, %v4389
        %4422 = vst.msk [vmem:[#allocation2 + $0xf8] sm:$0xff] %vm215, %v4390
        %v4423 = vld [vmem:[%s3973] sm:$0xf]
        %v4424 = vld [vmem:[%s3973 + $0x4] sm:$0xf]
        %v4425 = vld [vmem:[%s3973 + $0x8] sm:$0x1]
        %v4426 = vld [vmem:[%s3973 + $0xc] sm:$0xf]
        %v4427 = vld [vmem:[%s3973 + $0x10] sm:$0xf]
        %v4428 = vld [vmem:[%s3973 + $0x14] sm:$0x1]
        %v4429 = vld [vmem:[%s3973 + $0x18] sm:$0xf]
        %v4430 = vld [vmem:[%s3973 + $0x1c] sm:$0xf]
        %v4431 = vld [vmem:[%s3973 + $0x20] sm:$0x1]
        %v4432 = vld [vmem:[%s3973 + $0x24] sm:$0xf]
        %v4433 = vld [vmem:[%s3973 + $0x28] sm:$0xf]
        %v4434 = vld [vmem:[%s3973 + $0x2c] sm:$0x1]
        %v4435 = vld [vmem:[%s3973 + $0x30] sm:$0xf]
        %v4436 = vld [vmem:[%s3973 + $0x34] sm:$0xf]
        %v4437 = vld [vmem:[%s3973 + $0x38] sm:$0x1]
        %v4438 = vld [vmem:[%s3973 + $0x3c] sm:$0xf]
        %v4439 = vld [vmem:[%s3973 + $0x40] sm:$0xf]
        %v4440 = vld [vmem:[%s3973 + $0x44] sm:$0x1]
        %v4441 = vld [vmem:[%s3973 + $0x48] sm:$0xf]
        %v4442 = vld [vmem:[%s3973 + $0x4c] sm:$0xf]
        %v4443 = vld [vmem:[%s3973 + $0x50] sm:$0x1]
        %v4444 = vld [vmem:[%s3973 + $0x54] sm:$0xf]
        %v4445 = vld [vmem:[%s3973 + $0x58] sm:$0xf]
        %v4446 = vld [vmem:[%s3973 + $0x5c] sm:$0x1]
        %v4447 = vld [vmem:[%s3973 + $0x60] sm:$0xf]
        %v4448 = vld [vmem:[%s3973 + $0x64] sm:$0xf]
        %v4449 = vld [vmem:[%s3973 + $0x68] sm:$0x1]
        %v4450 = vld [vmem:[%s3973 + $0x6c] sm:$0xf]
        %v4451 = vld [vmem:[%s3973 + $0x70] sm:$0xf]
        %v4452 = vld [vmem:[%s3973 + $0x74] sm:$0x1]
        %v4453 = vld [vmem:[%s3973 + $0x78] sm:$0xf]
        %v4454 = vld [vmem:[%s3973 + $0x7c] sm:$0xf]
        %v4455 = vld [vmem:[%s3973 + $0x80] sm:$0x1]
        %v4456 = vld [vmem:[%s3973 + $0x84] sm:$0xf]
        %v4457 = vld [vmem:[%s3973 + $0x88] sm:$0xf]
        %v4458 = vld [vmem:[%s3973 + $0x8c] sm:$0x1]
        %v4459 = vld [vmem:[%s3973 + $0x90] sm:$0xf]
        %v4460 = vld [vmem:[%s3973 + $0x94] sm:$0xf]
        %v4461 = vld [vmem:[%s3973 + $0x98] sm:$0x1]
        %v4462 = vld [vmem:[%s3973 + $0x9c] sm:$0xf]
        %v4463 = vld [vmem:[%s3973 + $0xa0] sm:$0xf]
        %v4464 = vld [vmem:[%s3973 + $0xa4] sm:$0x1]
        %v4465 = vld [vmem:[%s3973 + $0xa8] sm:$0xf]
        %v4466 = vld [vmem:[%s3973 + $0xac] sm:$0xf]
        %v4467 = vld [vmem:[%s3973 + $0xb0] sm:$0x1]
        %v4468 = vld [vmem:[%s3973 + $0xb4] sm:$0xf]
        %v4469 = vld [vmem:[%s3973 + $0xb8] sm:$0xf]
        %v4470 = vld [vmem:[%s3973 + $0xbc] sm:$0x1]
        %v4472 = vshrl.u32 %v4423, 16
        %v4474 = vrot.slane %v4472, 4
        %v4475 = vshll.u32 %v4423, 16
        %v4477 = vrot.slane %v4475, 5
        %v4478 = vor.u32 %v4474, %v4477
        %v4479 = vrot.slane %v4478, 4
        %v4481 = vshll.u32 %v4424, 16
        %v4483 = vrot.slane %v4481, 5
        %v4484 = vsel %vm747, %v4479, %v4483
        %v4485 = vshrl.u32 %v4424, 16
        %v4487 = vrot.slane %v4485, 4
        %v4488 = vor.u32 %v4487, %v4483
        %v4489 = vrot.slane %v4488, 4
        %v4491 = vshll.u32 %v4425, 16
        %v4493 = vrot.slane %v4491, 5
        %v4494 = vsel %vm747, %v4489, %v4493
        %v4496 = vshrl.u32 %v4426, 16
        %v4498 = vrot.slane %v4496, 4
        %v4499 = vshll.u32 %v4426, 16
        %v4501 = vrot.slane %v4499, 5
        %v4502 = vor.u32 %v4498, %v4501
        %v4503 = vrot.slane %v4502, 4
        %v4505 = vshll.u32 %v4427, 16
        %v4507 = vrot.slane %v4505, 5
        %v4508 = vsel %vm747, %v4503, %v4507
        %v4509 = vshrl.u32 %v4427, 16
        %v4511 = vrot.slane %v4509, 4
        %v4512 = vor.u32 %v4511, %v4507
        %v4513 = vrot.slane %v4512, 4
        %v4515 = vshll.u32 %v4428, 16
        %v4517 = vrot.slane %v4515, 5
        %v4518 = vsel %vm747, %v4513, %v4517
        %v4520 = vshrl.u32 %v4429, 16
        %v4522 = vrot.slane %v4520, 4
        %v4523 = vshll.u32 %v4429, 16
        %v4525 = vrot.slane %v4523, 5
        %v4526 = vor.u32 %v4522, %v4525
        %v4527 = vrot.slane %v4526, 4
        %v4529 = vshll.u32 %v4430, 16
        %v4531 = vrot.slane %v4529, 5
        %v4532 = vsel %vm747, %v4527, %v4531
        %v4533 = vshrl.u32 %v4430, 16
        %v4535 = vrot.slane %v4533, 4
        %v4536 = vor.u32 %v4535, %v4531
        %v4537 = vrot.slane %v4536, 4
        %v4539 = vshll.u32 %v4431, 16
        %v4541 = vrot.slane %v4539, 5
        %v4542 = vsel %vm747, %v4537, %v4541
        %v4544 = vshrl.u32 %v4432, 16
        %v4546 = vrot.slane %v4544, 4
        %v4547 = vshll.u32 %v4432, 16
        %v4549 = vrot.slane %v4547, 5
        %v4550 = vor.u32 %v4546, %v4549
        %v4551 = vrot.slane %v4550, 4
        %v4553 = vshll.u32 %v4433, 16
        %v4555 = vrot.slane %v4553, 5
        %v4556 = vsel %vm747, %v4551, %v4555
        %v4557 = vshrl.u32 %v4433, 16
        %v4559 = vrot.slane %v4557, 4
        %v4560 = vor.u32 %v4559, %v4555
        %v4561 = vrot.slane %v4560, 4
        %v4563 = vshll.u32 %v4434, 16
        %v4565 = vrot.slane %v4563, 5
        %v4566 = vsel %vm747, %v4561, %v4565
        %v4568 = vshrl.u32 %v4435, 16
        %v4570 = vrot.slane %v4568, 4
        %v4571 = vshll.u32 %v4435, 16
        %v4573 = vrot.slane %v4571, 5
        %v4574 = vor.u32 %v4570, %v4573
        %v4575 = vrot.slane %v4574, 4
        %v4577 = vshll.u32 %v4436, 16
        %v4579 = vrot.slane %v4577, 5
        %v4580 = vsel %vm747, %v4575, %v4579
        %v4581 = vshrl.u32 %v4436, 16
        %v4583 = vrot.slane %v4581, 4
        %v4584 = vor.u32 %v4583, %v4579
        %v4585 = vrot.slane %v4584, 4
        %v4587 = vshll.u32 %v4437, 16
        %v4589 = vrot.slane %v4587, 5
        %v4590 = vsel %vm747, %v4585, %v4589
        %v4592 = vshrl.u32 %v4438, 16
        %v4594 = vrot.slane %v4592, 4
        %v4595 = vshll.u32 %v4438, 16
        %v4597 = vrot.slane %v4595, 5
        %v4598 = vor.u32 %v4594, %v4597
        %v4599 = vrot.slane %v4598, 4
        %v4601 = vshll.u32 %v4439, 16
        %v4603 = vrot.slane %v4601, 5
        %v4604 = vsel %vm747, %v4599, %v4603
        %v4605 = vshrl.u32 %v4439, 16
        %v4607 = vrot.slane %v4605, 4
        %v4608 = vor.u32 %v4607, %v4603
        %v4609 = vrot.slane %v4608, 4
        %v4611 = vshll.u32 %v4440, 16
        %v4613 = vrot.slane %v4611, 5
        %v4614 = vsel %vm747, %v4609, %v4613
        %v4616 = vshrl.u32 %v4441, 16
        %v4618 = vrot.slane %v4616, 4
        %v4619 = vshll.u32 %v4441, 16
        %v4621 = vrot.slane %v4619, 5
        %v4622 = vor.u32 %v4618, %v4621
        %v4623 = vrot.slane %v4622, 4
        %v4625 = vshll.u32 %v4442, 16
        %v4627 = vrot.slane %v4625, 5
        %v4628 = vsel %vm747, %v4623, %v4627
        %v4629 = vshrl.u32 %v4442, 16
        %v4631 = vrot.slane %v4629, 4
        %v4632 = vor.u32 %v4631, %v4627
        %v4633 = vrot.slane %v4632, 4
        %v4635 = vshll.u32 %v4443, 16
        %v4637 = vrot.slane %v4635, 5
        %v4638 = vsel %vm747, %v4633, %v4637
        %v4640 = vshrl.u32 %v4444, 16
        %v4642 = vrot.slane %v4640, 4
        %v4643 = vshll.u32 %v4444, 16
        %v4645 = vrot.slane %v4643, 5
        %v4646 = vor.u32 %v4642, %v4645
        %v4647 = vrot.slane %v4646, 4
        %v4649 = vshll.u32 %v4445, 16
        %v4651 = vrot.slane %v4649, 5
        %v4652 = vsel %vm747, %v4647, %v4651
        %v4653 = vshrl.u32 %v4445, 16
        %v4655 = vrot.slane %v4653, 4
        %v4656 = vor.u32 %v4655, %v4651
        %v4657 = vrot.slane %v4656, 4
        %v4659 = vshll.u32 %v4446, 16
        %v4661 = vrot.slane %v4659, 5
        %v4662 = vsel %vm747, %v4657, %v4661
        %v4664 = vshrl.u32 %v4447, 16
        %v4666 = vrot.slane %v4664, 4
        %v4667 = vshll.u32 %v4447, 16
        %v4669 = vrot.slane %v4667, 5
        %v4670 = vor.u32 %v4666, %v4669
        %v4671 = vrot.slane %v4670, 4
        %v4673 = vshll.u32 %v4448, 16
        %v4675 = vrot.slane %v4673, 5
        %v4676 = vsel %vm747, %v4671, %v4675
        %v4677 = vshrl.u32 %v4448, 16
        %v4679 = vrot.slane %v4677, 4
        %v4680 = vor.u32 %v4679, %v4675
        %v4681 = vrot.slane %v4680, 4
        %v4683 = vshll.u32 %v4449, 16
        %v4685 = vrot.slane %v4683, 5
        %v4686 = vsel %vm747, %v4681, %v4685
        %v4688 = vshrl.u32 %v4450, 16
        %v4690 = vrot.slane %v4688, 4
        %v4691 = vshll.u32 %v4450, 16
        %v4693 = vrot.slane %v4691, 5
        %v4694 = vor.u32 %v4690, %v4693
        %v4695 = vrot.slane %v4694, 4
        %v4697 = vshll.u32 %v4451, 16
        %v4699 = vrot.slane %v4697, 5
        %v4700 = vsel %vm747, %v4695, %v4699
        %v4701 = vshrl.u32 %v4451, 16
        %v4703 = vrot.slane %v4701, 4
        %v4704 = vor.u32 %v4703, %v4699
        %v4705 = vrot.slane %v4704, 4
        %v4707 = vshll.u32 %v4452, 16
        %v4709 = vrot.slane %v4707, 5
        %v4710 = vsel %vm747, %v4705, %v4709
        %v4712 = vshrl.u32 %v4453, 16
        %v4714 = vrot.slane %v4712, 4
        %v4715 = vshll.u32 %v4453, 16
        %v4717 = vrot.slane %v4715, 5
        %v4718 = vor.u32 %v4714, %v4717
        %v4719 = vrot.slane %v4718, 4
        %v4721 = vshll.u32 %v4454, 16
        %v4723 = vrot.slane %v4721, 5
        %v4724 = vsel %vm747, %v4719, %v4723
        %v4725 = vshrl.u32 %v4454, 16
        %v4727 = vrot.slane %v4725, 4
        %v4728 = vor.u32 %v4727, %v4723
        %v4729 = vrot.slane %v4728, 4
        %v4731 = vshll.u32 %v4455, 16
        %v4733 = vrot.slane %v4731, 5
        %v4734 = vsel %vm747, %v4729, %v4733
        %v4736 = vshrl.u32 %v4456, 16
        %v4738 = vrot.slane %v4736, 4
        %v4739 = vshll.u32 %v4456, 16
        %v4741 = vrot.slane %v4739, 5
        %v4742 = vor.u32 %v4738, %v4741
        %v4743 = vrot.slane %v4742, 4
        %v4745 = vshll.u32 %v4457, 16
        %v4747 = vrot.slane %v4745, 5
        %v4748 = vsel %vm747, %v4743, %v4747
        %v4749 = vshrl.u32 %v4457, 16
        %v4751 = vrot.slane %v4749, 4
        %v4752 = vor.u32 %v4751, %v4747
        %v4753 = vrot.slane %v4752, 4
        %v4755 = vshll.u32 %v4458, 16
        %v4757 = vrot.slane %v4755, 5
        %v4758 = vsel %vm747, %v4753, %v4757
        %v4760 = vshrl.u32 %v4459, 16
        %v4762 = vrot.slane %v4760, 4
        %v4763 = vshll.u32 %v4459, 16
        %v4765 = vrot.slane %v4763, 5
        %v4766 = vor.u32 %v4762, %v4765
        %v4767 = vrot.slane %v4766, 4
        %v4769 = vshll.u32 %v4460, 16
        %v4771 = vrot.slane %v4769, 5
        %v4772 = vsel %vm747, %v4767, %v4771
        %v4773 = vshrl.u32 %v4460, 16
        %v4775 = vrot.slane %v4773, 4
        %v4776 = vor.u32 %v4775, %v4771
        %v4777 = vrot.slane %v4776, 4
        %v4779 = vshll.u32 %v4461, 16
        %v4781 = vrot.slane %v4779, 5
        %v4782 = vsel %vm747, %v4777, %v4781
        %v4784 = vshrl.u32 %v4462, 16
        %v4786 = vrot.slane %v4784, 4
        %v4787 = vshll.u32 %v4462, 16
        %v4789 = vrot.slane %v4787, 5
        %v4790 = vor.u32 %v4786, %v4789
        %v4791 = vrot.slane %v4790, 4
        %v4793 = vshll.u32 %v4463, 16
        %v4795 = vrot.slane %v4793, 5
        %v4796 = vsel %vm747, %v4791, %v4795
        %v4797 = vshrl.u32 %v4463, 16
        %v4799 = vrot.slane %v4797, 4
        %v4800 = vor.u32 %v4799, %v4795
        %v4801 = vrot.slane %v4800, 4
        %v4803 = vshll.u32 %v4464, 16
        %v4805 = vrot.slane %v4803, 5
        %v4806 = vsel %vm747, %v4801, %v4805
        %v4808 = vshrl.u32 %v4465, 16
        %v4810 = vrot.slane %v4808, 4
        %v4811 = vshll.u32 %v4465, 16
        %v4813 = vrot.slane %v4811, 5
        %v4814 = vor.u32 %v4810, %v4813
        %v4815 = vrot.slane %v4814, 4
        %v4817 = vshll.u32 %v4466, 16
        %v4819 = vrot.slane %v4817, 5
        %v4820 = vsel %vm747, %v4815, %v4819
        %v4821 = vshrl.u32 %v4466, 16
        %v4823 = vrot.slane %v4821, 4
        %v4824 = vor.u32 %v4823, %v4819
        %v4825 = vrot.slane %v4824, 4
        %v4827 = vshll.u32 %v4467, 16
        %v4829 = vrot.slane %v4827, 5
        %v4830 = vsel %vm747, %v4825, %v4829
        %v4832 = vshrl.u32 %v4468, 16
        %v4834 = vrot.slane %v4832, 4
        %v4835 = vshll.u32 %v4468, 16
        %v4837 = vrot.slane %v4835, 5
        %v4838 = vor.u32 %v4834, %v4837
        %v4839 = vrot.slane %v4838, 4
        %v4841 = vshll.u32 %v4469, 16
        %v4843 = vrot.slane %v4841, 5
        %v4844 = vsel %vm747, %v4839, %v4843
        %v4845 = vshrl.u32 %v4469, 16
        %v4847 = vrot.slane %v4845, 4
        %v4848 = vor.u32 %v4847, %v4843
        %v4849 = vrot.slane %v4848, 4
        %v4851 = vshll.u32 %v4470, 16
        %v4853 = vrot.slane %v4851, 5
        %v4854 = vsel %vm747, %v4849, %v4853
        %v4855 = vld [vmem:[#allocation2] sm:$0xff]
        %v4856 = vld [vmem:[#allocation2 + $0x8] sm:$0xff]
        %v4857 = vld [vmem:[#allocation2 + $0x10] sm:$0xff]
        %v4858 = vld [vmem:[#allocation2 + $0x18] sm:$0xff]
        %v4859 = vld [vmem:[#allocation2 + $0x20] sm:$0xff]
        %v4860 = vld [vmem:[#allocation2 + $0x28] sm:$0xff]
        %v4861 = vld [vmem:[#allocation2 + $0x30] sm:$0xff]
        %v4862 = vld [vmem:[#allocation2 + $0x38] sm:$0xff]
        %v4863 = vld [vmem:[#allocation2 + $0x40] sm:$0xff]
        %v4864 = vld [vmem:[#allocation2 + $0x48] sm:$0xff]
        %v4865 = vld [vmem:[#allocation2 + $0x50] sm:$0xff]
        %v4866 = vld [vmem:[#allocation2 + $0x58] sm:$0xff]
        %v4867 = vld [vmem:[#allocation2 + $0x60] sm:$0xff]
        %v4868 = vld [vmem:[#allocation2 + $0x68] sm:$0xff]
        %v4869 = vld [vmem:[#allocation2 + $0x70] sm:$0xff]
        %v4870 = vld [vmem:[#allocation2 + $0x78] sm:$0xff]
        %v4871 = vld [vmem:[#allocation2 + $0x80] sm:$0xff]
        %v4872 = vld [vmem:[#allocation2 + $0x88] sm:$0xff]
        %v4873 = vld [vmem:[#allocation2 + $0x90] sm:$0xff]
        %v4874 = vld [vmem:[#allocation2 + $0x98] sm:$0xff]
        %v4875 = vld [vmem:[#allocation2 + $0xa0] sm:$0xff]
        %v4876 = vld [vmem:[#allocation2 + $0xa8] sm:$0xff]
        %v4877 = vld [vmem:[#allocation2 + $0xb0] sm:$0xff]
        %v4878 = vld [vmem:[#allocation2 + $0xb8] sm:$0xff]
        %v4879 = vld [vmem:[#allocation2 + $0xc0] sm:$0xff]
        %v4880 = vld [vmem:[#allocation2 + $0xc8] sm:$0xff]
        %v4881 = vld [vmem:[#allocation2 + $0xd0] sm:$0xff]
        %v4882 = vld [vmem:[#allocation2 + $0xd8] sm:$0xff]
        %v4883 = vld [vmem:[#allocation2 + $0xe0] sm:$0xff]
        %v4884 = vld [vmem:[#allocation2 + $0xe8] sm:$0xff]
        %v4885 = vld [vmem:[#allocation2 + $0xf0] sm:$0xff]
        %v4886 = vld [vmem:[#allocation2 + $0xf8] sm:$0xff]
        %v4887 = vld [vmem:[%s210 + $0xe0] sm:$0xf]
        %v4888 = vld [vmem:[%s210 + $0xe4] sm:$0xf]
        %v4889 = vld [vmem:[%s210 + $0xe8] sm:$0xf]
        %v4890 = vld [vmem:[%s210 + $0xec] sm:$0xf]
        %v4891 = vld [vmem:[%s210 + $0xf0] sm:$0xf]
        %v4892 = vld [vmem:[%s210 + $0xf4] sm:$0xf]
        %v4893 = vld [vmem:[%s210 + $0xf8] sm:$0xf]
        %v4894 = vld [vmem:[%s210 + $0xfc] sm:$0xf]
        %v4895 = vunpack.c.l.b16 %v4484
        %v4896 = vunpack.c.l.b16 %v4494
        %v4897 = vunpack.c.l.b16 %v4508
        %v4898 = vunpack.c.l.b16 %v4518
        %v4899 = vunpack.c.l.b16 %v4532
        %v4900 = vunpack.c.l.b16 %v4542
        %v4901 = vunpack.c.l.b16 %v4556
        %v4902 = vunpack.c.l.b16 %v4566
        %v4903 = vunpack.c.l.b16 %v4580
        %v4904 = vunpack.c.l.b16 %v4590
        %v4905 = vunpack.c.l.b16 %v4604
        %v4906 = vunpack.c.l.b16 %v4614
        %v4907 = vunpack.c.l.b16 %v4628
        %v4908 = vunpack.c.l.b16 %v4638
        %v4909 = vunpack.c.l.b16 %v4652
        %v4910 = vunpack.c.l.b16 %v4662
        %v4911 = vunpack.c.l.b16 %v4676
        %v4912 = vunpack.c.l.b16 %v4686
        %v4913 = vunpack.c.l.b16 %v4700
        %v4914 = vunpack.c.l.b16 %v4710
        %v4915 = vunpack.c.l.b16 %v4724
        %v4916 = vunpack.c.l.b16 %v4734
        %v4917 = vunpack.c.l.b16 %v4748
        %v4918 = vunpack.c.l.b16 %v4758
        %v4919 = vunpack.c.l.b16 %v4772
        %v4920 = vunpack.c.l.b16 %v4782
        %v4921 = vunpack.c.l.b16 %v4796
        %v4922 = vunpack.c.l.b16 %v4806
        %v4923 = vunpack.c.l.b16 %v4820
        %v4924 = vunpack.c.l.b16 %v4830
        %v4925 = vunpack.c.l.b16 %v4844
        %v4926 = vunpack.c.l.b16 %v4854
        %v4927 = vpack.c.b16 %v4896, %v4895
        %v4928 = vpack.c.b16 %v4898, %v4897
        %v4929 = vpack.c.b16 %v4900, %v4899
        %v4930 = vpack.c.b16 %v4902, %v4901
        %v4931 = vpack.c.b16 %v4904, %v4903
        %v4932 = vpack.c.b16 %v4906, %v4905
        %v4933 = vpack.c.b16 %v4908, %v4907
        %v4934 = vpack.c.b16 %v4910, %v4909
        %v4935 = vpack.c.b16 %v4912, %v4911
        %v4936 = vpack.c.b16 %v4914, %v4913
        %v4937 = vpack.c.b16 %v4916, %v4915
        %v4938 = vpack.c.b16 %v4918, %v4917
        %v4939 = vpack.c.b16 %v4920, %v4919
        %v4940 = vpack.c.b16 %v4922, %v4921
        %v4941 = vpack.c.b16 %v4924, %v4923
        %v4942 = vpack.c.b16 %v4926, %v4925
        %v4951 = vunpack.c.l.b16 %v4887
        %v4952 = vunpack.c.l.b16 %v4888
        %v4953 = vunpack.c.l.b16 %v4889
        %v4954 = vunpack.c.l.b16 %v4890
        %v4955 = vunpack.c.l.b16 %v4891
        %v4956 = vunpack.c.l.b16 %v4892
        %v4957 = vunpack.c.l.b16 %v4893
        %v4958 = vunpack.c.l.b16 %v4894
        %v4959 = vpack.c.b16 %v4952, %v4951
        %v4960 = vpack.c.b16 %v4954, %v4953
        %v4961 = vpack.c.b16 %v4956, %v4955
        %v4962 = vpack.c.b16 %v4958, %v4957
        %v4968 = vsel %vm215, %v4927, 0
        %v4971 = vsel %vm215, %v4928, 0
        %v4974 = vsel %vm215, %v4929, 0
        %v4977 = vsel %vm215, %v4930, 0
        %v4980 = vsel %vm215, %v4931, 0
        %v4983 = vsel %vm215, %v4932, 0
        %v4986 = vsel %vm215, %v4933, 0
        %v4989 = vsel %vm215, %v4934, 0
        %v4992 = vsel %vm215, %v4935, 0
        %v4995 = vsel %vm215, %v4936, 0
        %v4998 = vsel %vm215, %v4937, 0
        %v5001 = vsel %vm215, %v4938, 0
        %v5004 = vsel %vm215, %v4939, 0
        %v5007 = vsel %vm215, %v4940, 0
        %v5010 = vsel %vm215, %v4941, 0
        %v5013 = vsel %vm215, %v4942, 0
        %5015 = vmatprep.subr.bf16.mxu0 0
        %5016 = vmatpush1.bf16.msra.mxu0 %v4959
        %5017 = vmatprep.subr.bf16.mxu0 0
        %5018 = vmatpush1.bf16.msra.mxu0 %v4960
        %5019 = vmatprep.subr.bf16.mxu0 0
        %5020 = vmatpush1.bf16.msra.mxu0 %v4961
        %5021 = vmatprep.subr.bf16.mxu0 0
        %5022 = vmatpush1.bf16.msra.mxu0 %v4962
        %5023 = vmatprep.subr.bf16.mxu0 0
        %5024 = vmatpush1.bf16.msra.mxu0 0
        %5025 = vmatprep.subr.bf16.mxu0 0
        %5026 = vmatpush1.bf16.msra.mxu0 0
        %5027 = vmatprep.subr.bf16.mxu0 0
        %5028 = vmatpush1.bf16.msra.mxu0 0
        %5029 = vmatprep.subr.bf16.mxu0 0
        %5030 = vmatpush1.bf16.msra.mxu0 0
        %5031 = vmatprep.subr.bf16.mxu0 0
        %5032 = vmatpush1.bf16.msra.mxu0 0
        %5033 = vmatprep.subr.bf16.mxu0 0
        %5034 = vmatpush1.bf16.msra.mxu0 0
        %5035 = vmatprep.subr.bf16.mxu0 0
        %5036 = vmatpush1.bf16.msra.mxu0 0
        %5037 = vmatprep.subr.bf16.mxu0 0
        %5038 = vmatpush1.bf16.msra.mxu0 0
        %5039 = vmatprep.subr.bf16.mxu0 0
        %5040 = vmatpush1.bf16.msra.mxu0 0
        %5041 = vmatprep.subr.bf16.mxu0 0
        %5042 = vmatpush1.bf16.msra.mxu0 0
        %5043 = vmatprep.subr.bf16.mxu0 0
        %5044 = vmatpush1.bf16.msra.mxu0 0
        %5045 = vmatprep.subr.bf16.mxu0 0
        %5046 = vmatpush1.bf16.msra.mxu0 0
        %5047 = vmatprep.mubr.bf16.mxu0 0
        %5048 = vmatmul.mubr.bf16.gmra.mrb[0].mxu0 %v4968
        %v5049 = vpop.f32.mrb[0].mxu0
        %v5050 = vadd.f32 0.0, %v5049
        %v5051 = vpop.f32.mrb[0].mxu0
        %v5052 = vpop.f32.mrb[0].mxu0
        %v5053 = vadd.f32 0.0, %v5052
        %v5054 = vpop.f32.mrb[0].mxu0
        %5055 = vmatprep.mubr.bf16.mxu0 0
        %5056 = vmatmul.mubr.bf16.gmra.mrb[0].mxu0 %v4971
        %v5057 = vpop.f32.mrb[0].mxu0
        %v5058 = vadd.f32 0.0, %v5057
        %v5059 = vpop.f32.mrb[0].mxu0
        %v5060 = vpop.f32.mrb[0].mxu0
        %v5061 = vadd.f32 0.0, %v5060
        %v5062 = vpop.f32.mrb[0].mxu0
        %5063 = vmatprep.mubr.bf16.mxu0 0
        %5064 = vmatmul.mubr.bf16.gmra.mrb[0].mxu0 %v4974
        %v5065 = vpop.f32.mrb[0].mxu0
        %v5066 = vadd.f32 0.0, %v5065
        %v5067 = vpop.f32.mrb[0].mxu0
        %v5068 = vpop.f32.mrb[0].mxu0
        %v5069 = vadd.f32 0.0, %v5068
        %v5070 = vpop.f32.mrb[0].mxu0
        %5071 = vmatprep.mubr.bf16.mxu0 0
        %5072 = vmatmul.mubr.bf16.gmra.mrb[0].mxu0 %v4977
        %v5073 = vpop.f32.mrb[0].mxu0
        %v5074 = vadd.f32 0.0, %v5073
        %v5075 = vpop.f32.mrb[0].mxu0
        %v5076 = vpop.f32.mrb[0].mxu0
        %v5077 = vadd.f32 0.0, %v5076
        %v5078 = vpop.f32.mrb[0].mxu0
        %5079 = vmatprep.mubr.bf16.mxu0 0
        %5080 = vmatmul.mubr.bf16.gmra.mrb[0].mxu0 %v4980
        %v5081 = vpop.f32.mrb[0].mxu0
        %v5082 = vadd.f32 0.0, %v5081
        %v5083 = vpop.f32.mrb[0].mxu0
        %v5084 = vpop.f32.mrb[0].mxu0
        %v5085 = vadd.f32 0.0, %v5084
        %v5086 = vpop.f32.mrb[0].mxu0
        %5087 = vmatprep.mubr.bf16.mxu0 0
        %5088 = vmatmul.mubr.bf16.gmra.mrb[0].mxu0 %v4983
        %v5089 = vpop.f32.mrb[0].mxu0
        %v5090 = vadd.f32 0.0, %v5089
        %v5091 = vpop.f32.mrb[0].mxu0
        %v5092 = vpop.f32.mrb[0].mxu0
        %v5093 = vadd.f32 0.0, %v5092
        %v5094 = vpop.f32.mrb[0].mxu0
        %5095 = vmatprep.mubr.bf16.mxu0 0
        %5096 = vmatmul.mubr.bf16.gmra.mrb[0].mxu0 %v4986
        %v5097 = vpop.f32.mrb[0].mxu0
        %v5098 = vadd.f32 0.0, %v5097
        %v5099 = vpop.f32.mrb[0].mxu0
        %v5100 = vpop.f32.mrb[0].mxu0
        %v5101 = vadd.f32 0.0, %v5100
        %v5102 = vpop.f32.mrb[0].mxu0
        %5103 = vmatprep.mubr.bf16.mxu0 0
        %5104 = vmatmul.mubr.bf16.gmra.mrb[0].mxu0 %v4989
        %v5105 = vpop.f32.mrb[0].mxu0
        %v5106 = vadd.f32 0.0, %v5105
        %v5107 = vpop.f32.mrb[0].mxu0
        %v5108 = vpop.f32.mrb[0].mxu0
        %v5109 = vadd.f32 0.0, %v5108
        %v5110 = vpop.f32.mrb[0].mxu0
        %5111 = vmatprep.mubr.bf16.mxu0 0
        %5112 = vmatmul.mubr.bf16.gmra.mrb[0].mxu0 %v4992
        %v5113 = vpop.f32.mrb[0].mxu0
        %v5114 = vadd.f32 0.0, %v5113
        %v5115 = vpop.f32.mrb[0].mxu0
        %v5116 = vpop.f32.mrb[0].mxu0
        %v5117 = vadd.f32 0.0, %v5116
        %v5118 = vpop.f32.mrb[0].mxu0
        %5119 = vmatprep.mubr.bf16.mxu0 0
        %5120 = vmatmul.mubr.bf16.gmra.mrb[0].mxu0 %v4995
        %v5121 = vpop.f32.mrb[0].mxu0
        %v5122 = vadd.f32 0.0, %v5121
        %v5123 = vpop.f32.mrb[0].mxu0
        %v5124 = vpop.f32.mrb[0].mxu0
        %v5125 = vadd.f32 0.0, %v5124
        %v5126 = vpop.f32.mrb[0].mxu0
        %5127 = vmatprep.mubr.bf16.mxu0 0
        %5128 = vmatmul.mubr.bf16.gmra.mrb[0].mxu0 %v4998
        %v5129 = vpop.f32.mrb[0].mxu0
        %v5130 = vadd.f32 0.0, %v5129
        %v5131 = vpop.f32.mrb[0].mxu0
        %v5132 = vpop.f32.mrb[0].mxu0
        %v5133 = vadd.f32 0.0, %v5132
        %v5134 = vpop.f32.mrb[0].mxu0
        %5135 = vmatprep.mubr.bf16.mxu0 0
        %5136 = vmatmul.mubr.bf16.gmra.mrb[0].mxu0 %v5001
        %v5137 = vpop.f32.mrb[0].mxu0
        %v5138 = vadd.f32 0.0, %v5137
        %v5139 = vpop.f32.mrb[0].mxu0
        %v5140 = vpop.f32.mrb[0].mxu0
        %v5141 = vadd.f32 0.0, %v5140
        %v5142 = vpop.f32.mrb[0].mxu0
        %5143 = vmatprep.mubr.bf16.mxu0 0
        %5144 = vmatmul.mubr.bf16.gmra.mrb[0].mxu0 %v5004
        %v5145 = vpop.f32.mrb[0].mxu0
        %v5146 = vadd.f32 0.0, %v5145
        %v5147 = vpop.f32.mrb[0].mxu0
        %v5148 = vpop.f32.mrb[0].mxu0
        %v5149 = vadd.f32 0.0, %v5148
        %v5150 = vpop.f32.mrb[0].mxu0
        %5151 = vmatprep.mubr.bf16.mxu0 0
        %5152 = vmatmul.mubr.bf16.gmra.mrb[0].mxu0 %v5007
        %v5153 = vpop.f32.mrb[0].mxu0
        %v5154 = vadd.f32 0.0, %v5153
        %v5155 = vpop.f32.mrb[0].mxu0
        %v5156 = vpop.f32.mrb[0].mxu0
        %v5157 = vadd.f32 0.0, %v5156
        %v5158 = vpop.f32.mrb[0].mxu0
        %5159 = vmatprep.mubr.bf16.mxu0 0
        %5160 = vmatmul.mubr.bf16.gmra.mrb[0].mxu0 %v5010
        %v5161 = vpop.f32.mrb[0].mxu0
        %v5162 = vadd.f32 0.0, %v5161
        %v5163 = vpop.f32.mrb[0].mxu0
        %v5164 = vpop.f32.mrb[0].mxu0
        %v5165 = vadd.f32 0.0, %v5164
        %v5166 = vpop.f32.mrb[0].mxu0
        %5167 = vmatprep.mubr.bf16.mxu0 0
        %5168 = vmatmul.mubr.bf16.gmra.mrb[0].mxu0 %v5013
        %v5169 = vpop.f32.mrb[0].mxu0
        %v5170 = vadd.f32 0.0, %v5169
        %v5171 = vpop.f32.mrb[0].mxu0
        %v5172 = vpop.f32.mrb[0].mxu0
        %v5173 = vadd.f32 0.0, %v5172
        %v5174 = vpop.f32.mrb[0].mxu0
        %5175 = vdwg.mxu0
        %v5176 = vadd.f32 %v4855, %v5050
        %v5177 = vadd.f32 %v4856, %v5053
        %v5178 = vadd.f32 %v4857, %v5058
        %v5179 = vadd.f32 %v4858, %v5061
        %v5180 = vadd.f32 %v4859, %v5066
        %v5181 = vadd.f32 %v4860, %v5069
        %v5182 = vadd.f32 %v4861, %v5074
        %v5183 = vadd.f32 %v4862, %v5077
        %v5184 = vadd.f32 %v4863, %v5082
        %v5185 = vadd.f32 %v4864, %v5085
        %v5186 = vadd.f32 %v4865, %v5090
        %v5187 = vadd.f32 %v4866, %v5093
        %v5188 = vadd.f32 %v4867, %v5098
        %v5189 = vadd.f32 %v4868, %v5101
        %v5190 = vadd.f32 %v4869, %v5106
        %v5191 = vadd.f32 %v4870, %v5109
        %v5192 = vadd.f32 %v4871, %v5114
        %v5193 = vadd.f32 %v4872, %v5117
        %v5194 = vadd.f32 %v4873, %v5122
        %v5195 = vadd.f32 %v4874, %v5125
        %v5196 = vadd.f32 %v4875, %v5130
        %v5197 = vadd.f32 %v4876, %v5133
        %v5198 = vadd.f32 %v4877, %v5138
        %v5199 = vadd.f32 %v4878, %v5141
        %v5200 = vadd.f32 %v4879, %v5146
        %v5201 = vadd.f32 %v4880, %v5149
        %v5202 = vadd.f32 %v4881, %v5154
        %v5203 = vadd.f32 %v4882, %v5157
        %v5204 = vadd.f32 %v4883, %v5162
        %v5205 = vadd.f32 %v4884, %v5165
        %v5206 = vadd.f32 %v4885, %v5170
        %v5207 = vadd.f32 %v4886, %v5173
        %5208 = vst.msk [vmem:[#allocation2] sm:$0xff] %vm215, %v5176
        %5209 = vst.msk [vmem:[#allocation2 + $0x8] sm:$0xff] %vm215, %v5177
        %5210 = vst.msk [vmem:[#allocation2 + $0x10] sm:$0xff] %vm215, %v5178
        %5211 = vst.msk [vmem:[#allocation2 + $0x18] sm:$0xff] %vm215, %v5179
        %5212 = vst.msk [vmem:[#allocation2 + $0x20] sm:$0xff] %vm215, %v5180
        %5213 = vst.msk [vmem:[#allocation2 + $0x28] sm:$0xff] %vm215, %v5181
        %5214 = vst.msk [vmem:[#allocation2 + $0x30] sm:$0xff] %vm215, %v5182
        %5215 = vst.msk [vmem:[#allocation2 + $0x38] sm:$0xff] %vm215, %v5183
        %5216 = vst.msk [vmem:[#allocation2 + $0x40] sm:$0xff] %vm215, %v5184
        %5217 = vst.msk [vmem:[#allocation2 + $0x48] sm:$0xff] %vm215, %v5185
        %5218 = vst.msk [vmem:[#allocation2 + $0x50] sm:$0xff] %vm215, %v5186
        %5219 = vst.msk [vmem:[#allocation2 + $0x58] sm:$0xff] %vm215, %v5187
        %5220 = vst.msk [vmem:[#allocation2 + $0x60] sm:$0xff] %vm215, %v5188
        %5221 = vst.msk [vmem:[#allocation2 + $0x68] sm:$0xff] %vm215, %v5189
        %5222 = vst.msk [vmem:[#allocation2 + $0x70] sm:$0xff] %vm215, %v5190
        %5223 = vst.msk [vmem:[#allocation2 + $0x78] sm:$0xff] %vm215, %v5191
        %5224 = vst.msk [vmem:[#allocation2 + $0x80] sm:$0xff] %vm215, %v5192
        %5225 = vst.msk [vmem:[#allocation2 + $0x88] sm:$0xff] %vm215, %v5193
        %5226 = vst.msk [vmem:[#allocation2 + $0x90] sm:$0xff] %vm215, %v5194
        %5227 = vst.msk [vmem:[#allocation2 + $0x98] sm:$0xff] %vm215, %v5195
        %5228 = vst.msk [vmem:[#allocation2 + $0xa0] sm:$0xff] %vm215, %v5196
        %5229 = vst.msk [vmem:[#allocation2 + $0xa8] sm:$0xff] %vm215, %v5197
        %5230 = vst.msk [vmem:[#allocation2 + $0xb0] sm:$0xff] %vm215, %v5198
        %5231 = vst.msk [vmem:[#allocation2 + $0xb8] sm:$0xff] %vm215, %v5199
        %5232 = vst.msk [vmem:[#allocation2 + $0xc0] sm:$0xff] %vm215, %v5200
        %5233 = vst.msk [vmem:[#allocation2 + $0xc8] sm:$0xff] %vm215, %v5201
        %5234 = vst.msk [vmem:[#allocation2 + $0xd0] sm:$0xff] %vm215, %v5202
        %5235 = vst.msk [vmem:[#allocation2 + $0xd8] sm:$0xff] %vm215, %v5203
        %5236 = vst.msk [vmem:[#allocation2 + $0xe0] sm:$0xff] %vm215, %v5204
        %5237 = vst.msk [vmem:[#allocation2 + $0xe8] sm:$0xff] %vm215, %v5205
        %5238 = vst.msk [vmem:[#allocation2 + $0xf0] sm:$0xff] %vm215, %v5206
        %5239 = vst.msk [vmem:[#allocation2 + $0xf8] sm:$0xff] %vm215, %v5207
        %v5240 = vld [vmem:[%s3973] sm:$0xe]
        %v5241 = vld [vmem:[%s3973 + $0x4] sm:$0xf]
        %v5242 = vld [vmem:[%s3973 + $0x8] sm:$0x1]
        %v5243 = vld [vmem:[%s3973 + $0xc] sm:$0xe]
        %v5244 = vld [vmem:[%s3973 + $0x10] sm:$0xf]
        %v5245 = vld [vmem:[%s3973 + $0x14] sm:$0x1]
        %v5246 = vld [vmem:[%s3973 + $0x18] sm:$0xe]
        %v5247 = vld [vmem:[%s3973 + $0x1c] sm:$0xf]
        %v5248 = vld [vmem:[%s3973 + $0x20] sm:$0x1]
        %v5249 = vld [vmem:[%s3973 + $0x24] sm:$0xe]
        %v5250 = vld [vmem:[%s3973 + $0x28] sm:$0xf]
        %v5251 = vld [vmem:[%s3973 + $0x2c] sm:$0x1]
        %v5252 = vld [vmem:[%s3973 + $0x30] sm:$0xe]
        %v5253 = vld [vmem:[%s3973 + $0x34] sm:$0xf]
        %v5254 = vld [vmem:[%s3973 + $0x38] sm:$0x1]
        %v5255 = vld [vmem:[%s3973 + $0x3c] sm:$0xe]
        %v5256 = vld [vmem:[%s3973 + $0x40] sm:$0xf]
        %v5257 = vld [vmem:[%s3973 + $0x44] sm:$0x1]
        %v5258 = vld [vmem:[%s3973 + $0x48] sm:$0xe]
        %v5259 = vld [vmem:[%s3973 + $0x4c] sm:$0xf]
        %v5260 = vld [vmem:[%s3973 + $0x50] sm:$0x1]
        %v5261 = vld [vmem:[%s3973 + $0x54] sm:$0xe]
        %v5262 = vld [vmem:[%s3973 + $0x58] sm:$0xf]
        %v5263 = vld [vmem:[%s3973 + $0x5c] sm:$0x1]
        %v5264 = vld [vmem:[%s3973 + $0x60] sm:$0xe]
        %v5265 = vld [vmem:[%s3973 + $0x64] sm:$0xf]
        %v5266 = vld [vmem:[%s3973 + $0x68] sm:$0x1]
        %v5267 = vld [vmem:[%s3973 + $0x6c] sm:$0xe]
        %v5268 = vld [vmem:[%s3973 + $0x70] sm:$0xf]
        %v5269 = vld [vmem:[%s3973 + $0x74] sm:$0x1]
        %v5270 = vld [vmem:[%s3973 + $0x78] sm:$0xe]
        %v5271 = vld [vmem:[%s3973 + $0x7c] sm:$0xf]
        %v5272 = vld [vmem:[%s3973 + $0x80] sm:$0x1]
        %v5273 = vld [vmem:[%s3973 + $0x84] sm:$0xe]
        %v5274 = vld [vmem:[%s3973 + $0x88] sm:$0xf]
        %v5275 = vld [vmem:[%s3973 + $0x8c] sm:$0x1]
        %v5276 = vld [vmem:[%s3973 + $0x90] sm:$0xe]
        %v5277 = vld [vmem:[%s3973 + $0x94] sm:$0xf]
        %v5278 = vld [vmem:[%s3973 + $0x98] sm:$0x1]
        %v5279 = vld [vmem:[%s3973 + $0x9c] sm:$0xe]
        %v5280 = vld [vmem:[%s3973 + $0xa0] sm:$0xf]
        %v5281 = vld [vmem:[%s3973 + $0xa4] sm:$0x1]
        %v5282 = vld [vmem:[%s3973 + $0xa8] sm:$0xe]
        %v5283 = vld [vmem:[%s3973 + $0xac] sm:$0xf]
        %v5284 = vld [vmem:[%s3973 + $0xb0] sm:$0x1]
        %v5285 = vld [vmem:[%s3973 + $0xb4] sm:$0xe]
        %v5286 = vld [vmem:[%s3973 + $0xb8] sm:$0xf]
        %v5287 = vld [vmem:[%s3973 + $0xbc] sm:$0x1]
        %v5336 = vrot.slane %v5240, 5
        %v5337 = vrot.slane %v5336, 4
        %v5338 = vrot.slane %v5241, 5
        %v5339 = vsel %vm1615, %v5337, %v5338
        %v5340 = vrot.slane %v5338, 4
        %v5341 = vrot.slane %v5242, 5
        %v5342 = vsel %vm1615, %v5340, %v5341
        %v5343 = vrot.slane %v5243, 5
        %v5344 = vrot.slane %v5343, 4
        %v5345 = vrot.slane %v5244, 5
        %v5346 = vsel %vm1615, %v5344, %v5345
        %v5347 = vrot.slane %v5345, 4
        %v5348 = vrot.slane %v5245, 5
        %v5349 = vsel %vm1615, %v5347, %v5348
        %v5350 = vrot.slane %v5246, 5
        %v5351 = vrot.slane %v5350, 4
        %v5352 = vrot.slane %v5247, 5
        %v5353 = vsel %vm1615, %v5351, %v5352
        %v5354 = vrot.slane %v5352, 4
        %v5355 = vrot.slane %v5248, 5
        %v5356 = vsel %vm1615, %v5354, %v5355
        %v5357 = vrot.slane %v5249, 5
        %v5358 = vrot.slane %v5357, 4
        %v5359 = vrot.slane %v5250, 5
        %v5360 = vsel %vm1615, %v5358, %v5359
        %v5361 = vrot.slane %v5359, 4
        %v5362 = vrot.slane %v5251, 5
        %v5363 = vsel %vm1615, %v5361, %v5362
        %v5364 = vrot.slane %v5252, 5
        %v5365 = vrot.slane %v5364, 4
        %v5366 = vrot.slane %v5253, 5
        %v5367 = vsel %vm1615, %v5365, %v5366
        %v5368 = vrot.slane %v5366, 4
        %v5369 = vrot.slane %v5254, 5
        %v5370 = vsel %vm1615, %v5368, %v5369
        %v5371 = vrot.slane %v5255, 5
        %v5372 = vrot.slane %v5371, 4
        %v5373 = vrot.slane %v5256, 5
        %v5374 = vsel %vm1615, %v5372, %v5373
        %v5375 = vrot.slane %v5373, 4
        %v5376 = vrot.slane %v5257, 5
        %v5377 = vsel %vm1615, %v5375, %v5376
        %v5378 = vrot.slane %v5258, 5
        %v5379 = vrot.slane %v5378, 4
        %v5380 = vrot.slane %v5259, 5
        %v5381 = vsel %vm1615, %v5379, %v5380
        %v5382 = vrot.slane %v5380, 4
        %v5383 = vrot.slane %v5260, 5
        %v5384 = vsel %vm1615, %v5382, %v5383
        %v5385 = vrot.slane %v5261, 5
        %v5386 = vrot.slane %v5385, 4
        %v5387 = vrot.slane %v5262, 5
        %v5388 = vsel %vm1615, %v5386, %v5387
        %v5389 = vrot.slane %v5387, 4
        %v5390 = vrot.slane %v5263, 5
        %v5391 = vsel %vm1615, %v5389, %v5390
        %v5392 = vrot.slane %v5264, 5
        %v5393 = vrot.slane %v5392, 4
        %v5394 = vrot.slane %v5265, 5
        %v5395 = vsel %vm1615, %v5393, %v5394
        %v5396 = vrot.slane %v5394, 4
        %v5397 = vrot.slane %v5266, 5
        %v5398 = vsel %vm1615, %v5396, %v5397
        %v5399 = vrot.slane %v5267, 5
        %v5400 = vrot.slane %v5399, 4
        %v5401 = vrot.slane %v5268, 5
        %v5402 = vsel %vm1615, %v5400, %v5401
        %v5403 = vrot.slane %v5401, 4
        %v5404 = vrot.slane %v5269, 5
        %v5405 = vsel %vm1615, %v5403, %v5404
        %v5406 = vrot.slane %v5270, 5
        %v5407 = vrot.slane %v5406, 4
        %v5408 = vrot.slane %v5271, 5
        %v5409 = vsel %vm1615, %v5407, %v5408
        %v5410 = vrot.slane %v5408, 4
        %v5411 = vrot.slane %v5272, 5
        %v5412 = vsel %vm1615, %v5410, %v5411
        %v5413 = vrot.slane %v5273, 5
        %v5414 = vrot.slane %v5413, 4
        %v5415 = vrot.slane %v5274, 5
        %v5416 = vsel %vm1615, %v5414, %v5415
        %v5417 = vrot.slane %v5415, 4
        %v5418 = vrot.slane %v5275, 5
        %v5419 = vsel %vm1615, %v5417, %v5418
        %v5420 = vrot.slane %v5276, 5
        %v5421 = vrot.slane %v5420, 4
        %v5422 = vrot.slane %v5277, 5
        %v5423 = vsel %vm1615, %v5421, %v5422
        %v5424 = vrot.slane %v5422, 4
        %v5425 = vrot.slane %v5278, 5
        %v5426 = vsel %vm1615, %v5424, %v5425
        %v5427 = vrot.slane %v5279, 5
        %v5428 = vrot.slane %v5427, 4
        %v5429 = vrot.slane %v5280, 5
        %v5430 = vsel %vm1615, %v5428, %v5429
        %v5431 = vrot.slane %v5429, 4
        %v5432 = vrot.slane %v5281, 5
        %v5433 = vsel %vm1615, %v5431, %v5432
        %v5434 = vrot.slane %v5282, 5
        %v5435 = vrot.slane %v5434, 4
        %v5436 = vrot.slane %v5283, 5
        %v5437 = vsel %vm1615, %v5435, %v5436
        %v5438 = vrot.slane %v5436, 4
        %v5439 = vrot.slane %v5284, 5
        %v5440 = vsel %vm1615, %v5438, %v5439
        %v5441 = vrot.slane %v5285, 5
        %v5442 = vrot.slane %v5441, 4
        %v5443 = vrot.slane %v5286, 5
        %v5444 = vsel %vm1615, %v5442, %v5443
        %v5445 = vrot.slane %v5443, 4
        %v5446 = vrot.slane %v5287, 5
        %v5447 = vsel %vm1615, %v5445, %v5446
        %v5448 = vld [vmem:[#allocation2] sm:$0xff]
        %v5449 = vld [vmem:[#allocation2 + $0x8] sm:$0xff]
        %v5450 = vld [vmem:[#allocation2 + $0x10] sm:$0xff]
        %v5451 = vld [vmem:[#allocation2 + $0x18] sm:$0xff]
        %v5452 = vld [vmem:[#allocation2 + $0x20] sm:$0xff]
        %v5453 = vld [vmem:[#allocation2 + $0x28] sm:$0xff]
        %v5454 = vld [vmem:[#allocation2 + $0x30] sm:$0xff]
        %v5455 = vld [vmem:[#allocation2 + $0x38] sm:$0xff]
        %v5456 = vld [vmem:[#allocation2 + $0x40] sm:$0xff]
        %v5457 = vld [vmem:[#allocation2 + $0x48] sm:$0xff]
        %v5458 = vld [vmem:[#allocation2 + $0x50] sm:$0xff]
        %v5459 = vld [vmem:[#allocation2 + $0x58] sm:$0xff]
        %v5460 = vld [vmem:[#allocation2 + $0x60] sm:$0xff]
        %v5461 = vld [vmem:[#allocation2 + $0x68] sm:$0xff]
        %v5462 = vld [vmem:[#allocation2 + $0x70] sm:$0xff]
        %v5463 = vld [vmem:[#allocation2 + $0x78] sm:$0xff]
        %v5464 = vld [vmem:[#allocation2 + $0x80] sm:$0xff]
        %v5465 = vld [vmem:[#allocation2 + $0x88] sm:$0xff]
        %v5466 = vld [vmem:[#allocation2 + $0x90] sm:$0xff]
        %v5467 = vld [vmem:[#allocation2 + $0x98] sm:$0xff]
        %v5468 = vld [vmem:[#allocation2 + $0xa0] sm:$0xff]
        %v5469 = vld [vmem:[#allocation2 + $0xa8] sm:$0xff]
        %v5470 = vld [vmem:[#allocation2 + $0xb0] sm:$0xff]
        %v5471 = vld [vmem:[#allocation2 + $0xb8] sm:$0xff]
        %v5472 = vld [vmem:[#allocation2 + $0xc0] sm:$0xff]
        %v5473 = vld [vmem:[#allocation2 + $0xc8] sm:$0xff]
        %v5474 = vld [vmem:[#allocation2 + $0xd0] sm:$0xff]
        %v5475 = vld [vmem:[#allocation2 + $0xd8] sm:$0xff]
        %v5476 = vld [vmem:[#allocation2 + $0xe0] sm:$0xff]
        %v5477 = vld [vmem:[#allocation2 + $0xe8] sm:$0xff]
        %v5478 = vld [vmem:[#allocation2 + $0xf0] sm:$0xff]
        %v5479 = vld [vmem:[#allocation2 + $0xf8] sm:$0xff]
        %v5480 = vld [vmem:[%s210 + $0x100] sm:$0xf]
        %v5481 = vld [vmem:[%s210 + $0x104] sm:$0xf]
        %v5482 = vld [vmem:[%s210 + $0x108] sm:$0xf]
        %v5483 = vld [vmem:[%s210 + $0x10c] sm:$0xf]
        %v5484 = vld [vmem:[%s210 + $0x110] sm:$0xf]
        %v5485 = vld [vmem:[%s210 + $0x114] sm:$0xf]
        %v5486 = vld [vmem:[%s210 + $0x118] sm:$0xf]
        %v5487 = vld [vmem:[%s210 + $0x11c] sm:$0xf]
        %v5488 = vunpack.c.l.b16 %v5339
        %v5489 = vunpack.c.l.b16 %v5342
        %v5490 = vunpack.c.l.b16 %v5346
        %v5491 = vunpack.c.l.b16 %v5349
        %v5492 = vunpack.c.l.b16 %v5353
        %v5493 = vunpack.c.l.b16 %v5356
        %v5494 = vunpack.c.l.b16 %v5360
        %v5495 = vunpack.c.l.b16 %v5363
        %v5496 = vunpack.c.l.b16 %v5367
        %v5497 = vunpack.c.l.b16 %v5370
        %v5498 = vunpack.c.l.b16 %v5374
        %v5499 = vunpack.c.l.b16 %v5377
        %v5500 = vunpack.c.l.b16 %v5381
        %v5501 = vunpack.c.l.b16 %v5384
        %v5502 = vunpack.c.l.b16 %v5388
        %v5503 = vunpack.c.l.b16 %v5391
        %v5504 = vunpack.c.l.b16 %v5395
        %v5505 = vunpack.c.l.b16 %v5398
        %v5506 = vunpack.c.l.b16 %v5402
        %v5507 = vunpack.c.l.b16 %v5405
        %v5508 = vunpack.c.l.b16 %v5409
        %v5509 = vunpack.c.l.b16 %v5412
        %v5510 = vunpack.c.l.b16 %v5416
        %v5511 = vunpack.c.l.b16 %v5419
        %v5512 = vunpack.c.l.b16 %v5423
        %v5513 = vunpack.c.l.b16 %v5426
        %v5514 = vunpack.c.l.b16 %v5430
        %v5515 = vunpack.c.l.b16 %v5433
        %v5516 = vunpack.c.l.b16 %v5437
        %v5517 = vunpack.c.l.b16 %v5440
        %v5518 = vunpack.c.l.b16 %v5444
        %v5519 = vunpack.c.l.b16 %v5447
        %v5520 = vpack.c.b16 %v5489, %v5488
        %v5521 = vpack.c.b16 %v5491, %v5490
        %v5522 = vpack.c.b16 %v5493, %v5492
        %v5523 = vpack.c.b16 %v5495, %v5494
        %v5524 = vpack.c.b16 %v5497, %v5496
        %v5525 = vpack.c.b16 %v5499, %v5498
        %v5526 = vpack.c.b16 %v5501, %v5500
        %v5527 = vpack.c.b16 %v5503, %v5502
        %v5528 = vpack.c.b16 %v5505, %v5504
        %v5529 = vpack.c.b16 %v5507, %v5506
        %v5530 = vpack.c.b16 %v5509, %v5508
        %v5531 = vpack.c.b16 %v5511, %v5510
        %v5532 = vpack.c.b16 %v5513, %v5512
        %v5533 = vpack.c.b16 %v5515, %v5514
        %v5534 = vpack.c.b16 %v5517, %v5516
        %v5535 = vpack.c.b16 %v5519, %v5518
        %v5544 = vunpack.c.l.b16 %v5480
        %v5545 = vunpack.c.l.b16 %v5481
        %v5546 = vunpack.c.l.b16 %v5482
        %v5547 = vunpack.c.l.b16 %v5483
        %v5548 = vunpack.c.l.b16 %v5484
        %v5549 = vunpack.c.l.b16 %v5485
        %v5550 = vunpack.c.l.b16 %v5486
        %v5551 = vunpack.c.l.b16 %v5487
        %v5552 = vpack.c.b16 %v5545, %v5544
        %v5553 = vpack.c.b16 %v5547, %v5546
        %v5554 = vpack.c.b16 %v5549, %v5548
        %v5555 = vpack.c.b16 %v5551, %v5550
        %v5561 = vsel %vm215, %v5520, 0
        %v5564 = vsel %vm215, %v5521, 0
        %v5567 = vsel %vm215, %v5522, 0
        %v5570 = vsel %vm215, %v5523, 0
        %v5573 = vsel %vm215, %v5524, 0
        %v5576 = vsel %vm215, %v5525, 0
        %v5579 = vsel %vm215, %v5526, 0
        %v5582 = vsel %vm215, %v5527, 0
        %v5585 = vsel %vm215, %v5528, 0
        %v5588 = vsel %vm215, %v5529, 0
        %v5591 = vsel %vm215, %v5530, 0
        %v5594 = vsel %vm215, %v5531, 0
        %v5597 = vsel %vm215, %v5532, 0
        %v5600 = vsel %vm215, %v5533, 0
        %v5603 = vsel %vm215, %v5534, 0
        %v5606 = vsel %vm215, %v5535, 0
        %5608 = vmatprep.subr.bf16.mxu0 0
        %5609 = vmatpush1.bf16.msra.mxu0 %v5552
        %5610 = vmatprep.subr.bf16.mxu0 0
        %5611 = vmatpush1.bf16.msra.mxu0 %v5553
        %5612 = vmatprep.subr.bf16.mxu0 0
        %5613 = vmatpush1.bf16.msra.mxu0 %v5554
        %5614 = vmatprep.subr.bf16.mxu0 0
        %5615 = vmatpush1.bf16.msra.mxu0 %v5555
        %5616 = vmatprep.subr.bf16.mxu0 0
        %5617 = vmatpush1.bf16.msra.mxu0 0
        %5618 = vmatprep.subr.bf16.mxu0 0
        %5619 = vmatpush1.bf16.msra.mxu0 0
        %5620 = vmatprep.subr.bf16.mxu0 0
        %5621 = vmatpush1.bf16.msra.mxu0 0
        %5622 = vmatprep.subr.bf16.mxu0 0
        %5623 = vmatpush1.bf16.msra.mxu0 0
        %5624 = vmatprep.subr.bf16.mxu0 0
        %5625 = vmatpush1.bf16.msra.mxu0 0
        %5626 = vmatprep.subr.bf16.mxu0 0
        %5627 = vmatpush1.bf16.msra.mxu0 0
        %5628 = vmatprep.subr.bf16.mxu0 0
        %5629 = vmatpush1.bf16.msra.mxu0 0
        %5630 = vmatprep.subr.bf16.mxu0 0
        %5631 = vmatpush1.bf16.msra.mxu0 0
        %5632 = vmatprep.subr.bf16.mxu0 0
        %5633 = vmatpush1.bf16.msra.mxu0 0
        %5634 = vmatprep.subr.bf16.mxu0 0
        %5635 = vmatpush1.bf16.msra.mxu0 0
        %5636 = vmatprep.subr.bf16.mxu0 0
        %5637 = vmatpush1.bf16.msra.mxu0 0
        %5638 = vmatprep.subr.bf16.mxu0 0
        %5639 = vmatpush1.bf16.msra.mxu0 0
        %5640 = vmatprep.mubr.bf16.mxu0 0
        %5641 = vmatmul.mubr.bf16.gmra.mrb[0].mxu0 %v5561
        %v5642 = vpop.f32.mrb[0].mxu0
        %v5643 = vadd.f32 0.0, %v5642
        %v5644 = vpop.f32.mrb[0].mxu0
        %v5645 = vpop.f32.mrb[0].mxu0
        %v5646 = vadd.f32 0.0, %v5645
        %v5647 = vpop.f32.mrb[0].mxu0
        %5648 = vmatprep.mubr.bf16.mxu0 0
        %5649 = vmatmul.mubr.bf16.gmra.mrb[0].mxu0 %v5564
        %v5650 = vpop.f32.mrb[0].mxu0
        %v5651 = vadd.f32 0.0, %v5650
        %v5652 = vpop.f32.mrb[0].mxu0
        %v5653 = vpop.f32.mrb[0].mxu0
        %v5654 = vadd.f32 0.0, %v5653
        %v5655 = vpop.f32.mrb[0].mxu0
        %5656 = vmatprep.mubr.bf16.mxu0 0
        %5657 = vmatmul.mubr.bf16.gmra.mrb[0].mxu0 %v5567
        %v5658 = vpop.f32.mrb[0].mxu0
        %v5659 = vadd.f32 0.0, %v5658
        %v5660 = vpop.f32.mrb[0].mxu0
        %v5661 = vpop.f32.mrb[0].mxu0
        %v5662 = vadd.f32 0.0, %v5661
        %v5663 = vpop.f32.mrb[0].mxu0
        %5664 = vmatprep.mubr.bf16.mxu0 0
        %5665 = vmatmul.mubr.bf16.gmra.mrb[0].mxu0 %v5570
        %v5666 = vpop.f32.mrb[0].mxu0
        %v5667 = vadd.f32 0.0, %v5666
        %v5668 = vpop.f32.mrb[0].mxu0
        %v5669 = vpop.f32.mrb[0].mxu0
        %v5670 = vadd.f32 0.0, %v5669
        %v5671 = vpop.f32.mrb[0].mxu0
        %5672 = vmatprep.mubr.bf16.mxu0 0
        %5673 = vmatmul.mubr.bf16.gmra.mrb[0].mxu0 %v5573
        %v5674 = vpop.f32.mrb[0].mxu0
        %v5675 = vadd.f32 0.0, %v5674
        %v5676 = vpop.f32.mrb[0].mxu0
        %v5677 = vpop.f32.mrb[0].mxu0
        %v5678 = vadd.f32 0.0, %v5677
        %v5679 = vpop.f32.mrb[0].mxu0
        %5680 = vmatprep.mubr.bf16.mxu0 0
        %5681 = vmatmul.mubr.bf16.gmra.mrb[0].mxu0 %v5576
        %v5682 = vpop.f32.mrb[0].mxu0
        %v5683 = vadd.f32 0.0, %v5682
        %v5684 = vpop.f32.mrb[0].mxu0
        %v5685 = vpop.f32.mrb[0].mxu0
        %v5686 = vadd.f32 0.0, %v5685
        %v5687 = vpop.f32.mrb[0].mxu0
        %5688 = vmatprep.mubr.bf16.mxu0 0
        %5689 = vmatmul.mubr.bf16.gmra.mrb[0].mxu0 %v5579
        %v5690 = vpop.f32.mrb[0].mxu0
        %v5691 = vadd.f32 0.0, %v5690
        %v5692 = vpop.f32.mrb[0].mxu0
        %v5693 = vpop.f32.mrb[0].mxu0
        %v5694 = vadd.f32 0.0, %v5693
        %v5695 = vpop.f32.mrb[0].mxu0
        %5696 = vmatprep.mubr.bf16.mxu0 0
        %5697 = vmatmul.mubr.bf16.gmra.mrb[0].mxu0 %v5582
        %v5698 = vpop.f32.mrb[0].mxu0
        %v5699 = vadd.f32 0.0, %v5698
        %v5700 = vpop.f32.mrb[0].mxu0
        %v5701 = vpop.f32.mrb[0].mxu0
        %v5702 = vadd.f32 0.0, %v5701
        %v5703 = vpop.f32.mrb[0].mxu0
        %5704 = vmatprep.mubr.bf16.mxu0 0
        %5705 = vmatmul.mubr.bf16.gmra.mrb[0].mxu0 %v5585
        %v5706 = vpop.f32.mrb[0].mxu0
        %v5707 = vadd.f32 0.0, %v5706
        %v5708 = vpop.f32.mrb[0].mxu0
        %v5709 = vpop.f32.mrb[0].mxu0
        %v5710 = vadd.f32 0.0, %v5709
        %v5711 = vpop.f32.mrb[0].mxu0
        %5712 = vmatprep.mubr.bf16.mxu0 0
        %5713 = vmatmul.mubr.bf16.gmra.mrb[0].mxu0 %v5588
        %v5714 = vpop.f32.mrb[0].mxu0
        %v5715 = vadd.f32 0.0, %v5714
        %v5716 = vpop.f32.mrb[0].mxu0
        %v5717 = vpop.f32.mrb[0].mxu0
        %v5718 = vadd.f32 0.0, %v5717
        %v5719 = vpop.f32.mrb[0].mxu0
        %5720 = vmatprep.mubr.bf16.mxu0 0
        %5721 = vmatmul.mubr.bf16.gmra.mrb[0].mxu0 %v5591
        %v5722 = vpop.f32.mrb[0].mxu0
        %v5723 = vadd.f32 0.0, %v5722
        %v5724 = vpop.f32.mrb[0].mxu0
        %v5725 = vpop.f32.mrb[0].mxu0
        %v5726 = vadd.f32 0.0, %v5725
        %v5727 = vpop.f32.mrb[0].mxu0
        %5728 = vmatprep.mubr.bf16.mxu0 0
        %5729 = vmatmul.mubr.bf16.gmra.mrb[0].mxu0 %v5594
        %v5730 = vpop.f32.mrb[0].mxu0
        %v5731 = vadd.f32 0.0, %v5730
        %v5732 = vpop.f32.mrb[0].mxu0
        %v5733 = vpop.f32.mrb[0].mxu0
        %v5734 = vadd.f32 0.0, %v5733
        %v5735 = vpop.f32.mrb[0].mxu0
        %5736 = vmatprep.mubr.bf16.mxu0 0
        %5737 = vmatmul.mubr.bf16.gmra.mrb[0].mxu0 %v5597
        %v5738 = vpop.f32.mrb[0].mxu0
        %v5739 = vadd.f32 0.0, %v5738
        %v5740 = vpop.f32.mrb[0].mxu0
        %v5741 = vpop.f32.mrb[0].mxu0
        %v5742 = vadd.f32 0.0, %v5741
        %v5743 = vpop.f32.mrb[0].mxu0
        %5744 = vmatprep.mubr.bf16.mxu0 0
        %5745 = vmatmul.mubr.bf16.gmra.mrb[0].mxu0 %v5600
        %v5746 = vpop.f32.mrb[0].mxu0
        %v5747 = vadd.f32 0.0, %v5746
        %v5748 = vpop.f32.mrb[0].mxu0
        %v5749 = vpop.f32.mrb[0].mxu0
        %v5750 = vadd.f32 0.0, %v5749
        %v5751 = vpop.f32.mrb[0].mxu0
        %5752 = vmatprep.mubr.bf16.mxu0 0
        %5753 = vmatmul.mubr.bf16.gmra.mrb[0].mxu0 %v5603
        %v5754 = vpop.f32.mrb[0].mxu0
        %v5755 = vadd.f32 0.0, %v5754
        %v5756 = vpop.f32.mrb[0].mxu0
        %v5757 = vpop.f32.mrb[0].mxu0
        %v5758 = vadd.f32 0.0, %v5757
        %v5759 = vpop.f32.mrb[0].mxu0
        %5760 = vmatprep.mubr.bf16.mxu0 0
        %5761 = vmatmul.mubr.bf16.gmra.mrb[0].mxu0 %v5606
        %v5762 = vpop.f32.mrb[0].mxu0
        %v5763 = vadd.f32 0.0, %v5762
        %v5764 = vpop.f32.mrb[0].mxu0
        %v5765 = vpop.f32.mrb[0].mxu0
        %v5766 = vadd.f32 0.0, %v5765
        %v5767 = vpop.f32.mrb[0].mxu0
        %5768 = vdwg.mxu0
        %v5769 = vadd.f32 %v5448, %v5643
        %v5770 = vadd.f32 %v5449, %v5646
        %v5771 = vadd.f32 %v5450, %v5651
        %v5772 = vadd.f32 %v5451, %v5654
        %v5773 = vadd.f32 %v5452, %v5659
        %v5774 = vadd.f32 %v5453, %v5662
        %v5775 = vadd.f32 %v5454, %v5667
        %v5776 = vadd.f32 %v5455, %v5670
        %v5777 = vadd.f32 %v5456, %v5675
        %v5778 = vadd.f32 %v5457, %v5678
        %v5779 = vadd.f32 %v5458, %v5683
        %v5780 = vadd.f32 %v5459, %v5686
        %v5781 = vadd.f32 %v5460, %v5691
        %v5782 = vadd.f32 %v5461, %v5694
        %v5783 = vadd.f32 %v5462, %v5699
        %v5784 = vadd.f32 %v5463, %v5702
        %v5785 = vadd.f32 %v5464, %v5707
        %v5786 = vadd.f32 %v5465, %v5710
        %v5787 = vadd.f32 %v5466, %v5715
        %v5788 = vadd.f32 %v5467, %v5718
        %v5789 = vadd.f32 %v5468, %v5723
        %v5790 = vadd.f32 %v5469, %v5726
        %v5791 = vadd.f32 %v5470, %v5731
        %v5792 = vadd.f32 %v5471, %v5734
        %v5793 = vadd.f32 %v5472, %v5739
        %v5794 = vadd.f32 %v5473, %v5742
        %v5795 = vadd.f32 %v5474, %v5747
        %v5796 = vadd.f32 %v5475, %v5750
        %v5797 = vadd.f32 %v5476, %v5755
        %v5798 = vadd.f32 %v5477, %v5758
        %v5799 = vadd.f32 %v5478, %v5763
        %v5800 = vadd.f32 %v5479, %v5766
        %5801 = vst.msk [vmem:[#allocation2] sm:$0xff] %vm215, %v5769
        %5802 = vst.msk [vmem:[#allocation2 + $0x8] sm:$0xff] %vm215, %v5770
        %5803 = vst.msk [vmem:[#allocation2 + $0x10] sm:$0xff] %vm215, %v5771
        %5804 = vst.msk [vmem:[#allocation2 + $0x18] sm:$0xff] %vm215, %v5772
        %5805 = vst.msk [vmem:[#allocation2 + $0x20] sm:$0xff] %vm215, %v5773
        %5806 = vst.msk [vmem:[#allocation2 + $0x28] sm:$0xff] %vm215, %v5774
        %5807 = vst.msk [vmem:[#allocation2 + $0x30] sm:$0xff] %vm215, %v5775
        %5808 = vst.msk [vmem:[#allocation2 + $0x38] sm:$0xff] %vm215, %v5776
        %5809 = vst.msk [vmem:[#allocation2 + $0x40] sm:$0xff] %vm215, %v5777
        %5810 = vst.msk [vmem:[#allocation2 + $0x48] sm:$0xff] %vm215, %v5778
        %5811 = vst.msk [vmem:[#allocation2 + $0x50] sm:$0xff] %vm215, %v5779
        %5812 = vst.msk [vmem:[#allocation2 + $0x58] sm:$0xff] %vm215, %v5780
        %5813 = vst.msk [vmem:[#allocation2 + $0x60] sm:$0xff] %vm215, %v5781
        %5814 = vst.msk [vmem:[#allocation2 + $0x68] sm:$0xff] %vm215, %v5782
        %5815 = vst.msk [vmem:[#allocation2 + $0x70] sm:$0xff] %vm215, %v5783
        %5816 = vst.msk [vmem:[#allocation2 + $0x78] sm:$0xff] %vm215, %v5784
        %5817 = vst.msk [vmem:[#allocation2 + $0x80] sm:$0xff] %vm215, %v5785
        %5818 = vst.msk [vmem:[#allocation2 + $0x88] sm:$0xff] %vm215, %v5786
        %5819 = vst.msk [vmem:[#allocation2 + $0x90] sm:$0xff] %vm215, %v5787
        %5820 = vst.msk [vmem:[#allocation2 + $0x98] sm:$0xff] %vm215, %v5788
        %5821 = vst.msk [vmem:[#allocation2 + $0xa0] sm:$0xff] %vm215, %v5789
        %5822 = vst.msk [vmem:[#allocation2 + $0xa8] sm:$0xff] %vm215, %v5790
        %5823 = vst.msk [vmem:[#allocation2 + $0xb0] sm:$0xff] %vm215, %v5791
        %5824 = vst.msk [vmem:[#allocation2 + $0xb8] sm:$0xff] %vm215, %v5792
        %5825 = vst.msk [vmem:[#allocation2 + $0xc0] sm:$0xff] %vm215, %v5793
        %5826 = vst.msk [vmem:[#allocation2 + $0xc8] sm:$0xff] %vm215, %v5794
        %5827 = vst.msk [vmem:[#allocation2 + $0xd0] sm:$0xff] %vm215, %v5795
        %5828 = vst.msk [vmem:[#allocation2 + $0xd8] sm:$0xff] %vm215, %v5796
        %5829 = vst.msk [vmem:[#allocation2 + $0xe0] sm:$0xff] %vm215, %v5797
        %5830 = vst.msk [vmem:[#allocation2 + $0xe8] sm:$0xff] %vm215, %v5798
        %5831 = vst.msk [vmem:[#allocation2 + $0xf0] sm:$0xff] %vm215, %v5799
        %5832 = vst.msk [vmem:[#allocation2 + $0xf8] sm:$0xff] %vm215, %v5800
        %v5833 = vld [vmem:[#allocation2] sm:$0xff]
        %v5834 = vld [vmem:[#allocation2 + $0x8] sm:$0xff]
        %v5835 = vld [vmem:[#allocation2 + $0x10] sm:$0xff]
        %v5836 = vld [vmem:[#allocation2 + $0x18] sm:$0xff]
        %v5837 = vld [vmem:[#allocation2 + $0x20] sm:$0xff]
        %v5838 = vld [vmem:[#allocation2 + $0x28] sm:$0xff]
        %v5839 = vld [vmem:[#allocation2 + $0x30] sm:$0xff]
        %v5840 = vld [vmem:[#allocation2 + $0x38] sm:$0xff]
        %v5841 = vld [vmem:[#allocation2 + $0x40] sm:$0xff]
        %v5842 = vld [vmem:[#allocation2 + $0x48] sm:$0xff]
        %v5843 = vld [vmem:[#allocation2 + $0x50] sm:$0xff]
        %v5844 = vld [vmem:[#allocation2 + $0x58] sm:$0xff]
        %v5845 = vld [vmem:[#allocation2 + $0x60] sm:$0xff]
        %v5846 = vld [vmem:[#allocation2 + $0x68] sm:$0xff]
        %v5847 = vld [vmem:[#allocation2 + $0x70] sm:$0xff]
        %v5848 = vld [vmem:[#allocation2 + $0x78] sm:$0xff]
        %v5849 = vld [vmem:[#allocation2 + $0x80] sm:$0xff]
        %v5850 = vld [vmem:[#allocation2 + $0x88] sm:$0xff]
        %v5851 = vld [vmem:[#allocation2 + $0x90] sm:$0xff]
        %v5852 = vld [vmem:[#allocation2 + $0x98] sm:$0xff]
        %v5853 = vld [vmem:[#allocation2 + $0xa0] sm:$0xff]
        %v5854 = vld [vmem:[#allocation2 + $0xa8] sm:$0xff]
        %v5855 = vld [vmem:[#allocation2 + $0xb0] sm:$0xff]
        %v5856 = vld [vmem:[#allocation2 + $0xb8] sm:$0xff]
        %v5857 = vld [vmem:[#allocation2 + $0xc0] sm:$0xff]
        %v5858 = vld [vmem:[#allocation2 + $0xc8] sm:$0xff]
        %v5859 = vld [vmem:[#allocation2 + $0xd0] sm:$0xff]
        %v5860 = vld [vmem:[#allocation2 + $0xd8] sm:$0xff]
        %v5861 = vld [vmem:[#allocation2 + $0xe0] sm:$0xff]
        %v5862 = vld [vmem:[#allocation2 + $0xe8] sm:$0xff]
        %v5863 = vld [vmem:[#allocation2 + $0xf0] sm:$0xff]
        %v5864 = vld [vmem:[#allocation2 + $0xf8] sm:$0xff]
        %v5865 = vld [vmem:[%s213] sm:$0x1]
        %v5867 = vlaneseq
        %v5868 = vshrl.u32 %v5867, 7
        %v5869 = vsub.s32 0, %v5868
        %v5870 = vrot.slane %v5865, %v5869
        %v5872 = vadd.f32 %v5833, %v5870
        %v5873 = vadd.f32 %v5834, %v5870
        %v5874 = vadd.f32 %v5835, %v5870
        %v5875 = vadd.f32 %v5836, %v5870
        %v5876 = vadd.f32 %v5837, %v5870
        %v5877 = vadd.f32 %v5838, %v5870
        %v5878 = vadd.f32 %v5839, %v5870
        %v5879 = vadd.f32 %v5840, %v5870
        %v5880 = vadd.f32 %v5841, %v5870
        %v5881 = vadd.f32 %v5842, %v5870
        %v5882 = vadd.f32 %v5843, %v5870
        %v5883 = vadd.f32 %v5844, %v5870
        %v5884 = vadd.f32 %v5845, %v5870
        %v5885 = vadd.f32 %v5846, %v5870
        %v5886 = vadd.f32 %v5847, %v5870
        %v5887 = vadd.f32 %v5848, %v5870
        %v5888 = vadd.f32 %v5849, %v5870
        %v5889 = vadd.f32 %v5850, %v5870
        %v5890 = vadd.f32 %v5851, %v5870
        %v5891 = vadd.f32 %v5852, %v5870
        %v5892 = vadd.f32 %v5853, %v5870
        %v5893 = vadd.f32 %v5854, %v5870
        %v5894 = vadd.f32 %v5855, %v5870
        %v5895 = vadd.f32 %v5856, %v5870
        %v5896 = vadd.f32 %v5857, %v5870
        %v5897 = vadd.f32 %v5858, %v5870
        %v5898 = vadd.f32 %v5859, %v5870
        %v5899 = vadd.f32 %v5860, %v5870
        %v5900 = vadd.f32 %v5861, %v5870
        %v5901 = vadd.f32 %v5862, %v5870
        %v5902 = vadd.f32 %v5863, %v5870
        %v5903 = vadd.f32 %v5864, %v5870
        %v5904 = vmax.f32 %v5872, 0.0
        %v5905 = vmax.f32 %v5873, 0.0
        %v5906 = vmax.f32 %v5874, 0.0
        %v5907 = vmax.f32 %v5875, 0.0
        %v5908 = vmax.f32 %v5876, 0.0
        %v5909 = vmax.f32 %v5877, 0.0
        %v5910 = vmax.f32 %v5878, 0.0
        %v5911 = vmax.f32 %v5879, 0.0
        %v5912 = vmax.f32 %v5880, 0.0
        %v5913 = vmax.f32 %v5881, 0.0
        %v5914 = vmax.f32 %v5882, 0.0
        %v5915 = vmax.f32 %v5883, 0.0
        %v5916 = vmax.f32 %v5884, 0.0
        %v5917 = vmax.f32 %v5885, 0.0
        %v5918 = vmax.f32 %v5886, 0.0
        %v5919 = vmax.f32 %v5887, 0.0
        %v5920 = vmax.f32 %v5888, 0.0
        %v5921 = vmax.f32 %v5889, 0.0
        %v5922 = vmax.f32 %v5890, 0.0
        %v5923 = vmax.f32 %v5891, 0.0
        %v5924 = vmax.f32 %v5892, 0.0
        %v5925 = vmax.f32 %v5893, 0.0
        %v5926 = vmax.f32 %v5894, 0.0
        %v5927 = vmax.f32 %v5895, 0.0
        %v5928 = vmax.f32 %v5896, 0.0
        %v5929 = vmax.f32 %v5897, 0.0
        %v5930 = vmax.f32 %v5898, 0.0
        %v5931 = vmax.f32 %v5899, 0.0
        %v5932 = vmax.f32 %v5900, 0.0
        %v5933 = vmax.f32 %v5901, 0.0
        %v5934 = vmax.f32 %v5902, 0.0
        %v5935 = vmax.f32 %v5903, 0.0
        %v5936 = vpack.c.bf16 %v5905, %v5904
        %v5937 = vpack.c.bf16 %v5907, %v5906
        %v5938 = vpack.c.bf16 %v5909, %v5908
        %v5939 = vpack.c.bf16 %v5911, %v5910
        %v5940 = vpack.c.bf16 %v5913, %v5912
        %v5941 = vpack.c.bf16 %v5915, %v5914
        %v5942 = vpack.c.bf16 %v5917, %v5916
        %v5943 = vpack.c.bf16 %v5919, %v5918
        %v5944 = vpack.c.bf16 %v5921, %v5920
        %v5945 = vpack.c.bf16 %v5923, %v5922
        %v5946 = vpack.c.bf16 %v5925, %v5924
        %v5947 = vpack.c.bf16 %v5927, %v5926
        %v5948 = vpack.c.bf16 %v5929, %v5928
        %v5949 = vpack.c.bf16 %v5931, %v5930
        %v5950 = vpack.c.bf16 %v5933, %v5932
        %v5951 = vpack.c.bf16 %v5935, %v5934
        %v5968 = vunpack.c.l.b16 %v5936
        %v5969 = vunpack.c.h.b16 %v5936
        %v5970 = vunpack.c.l.b16 %v5937
        %v5971 = vunpack.c.h.b16 %v5937
        %v5972 = vunpack.c.l.b16 %v5938
        %v5973 = vunpack.c.h.b16 %v5938
        %v5974 = vunpack.c.l.b16 %v5939
        %v5975 = vunpack.c.h.b16 %v5939
        %v5976 = vunpack.c.l.b16 %v5940
        %v5977 = vunpack.c.h.b16 %v5940
        %v5978 = vunpack.c.l.b16 %v5941
        %v5979 = vunpack.c.h.b16 %v5941
        %v5980 = vunpack.c.l.b16 %v5942
        %v5981 = vunpack.c.h.b16 %v5942
        %v5982 = vunpack.c.l.b16 %v5943
        %v5983 = vunpack.c.h.b16 %v5943
        %v5984 = vunpack.c.l.b16 %v5944
        %v5985 = vunpack.c.h.b16 %v5944
        %v5986 = vunpack.c.l.b16 %v5945
        %v5987 = vunpack.c.h.b16 %v5945
        %v5988 = vunpack.c.l.b16 %v5946
        %v5989 = vunpack.c.h.b16 %v5946
        %v5990 = vunpack.c.l.b16 %v5947
        %v5991 = vunpack.c.h.b16 %v5947
        %v5992 = vunpack.c.l.b16 %v5948
        %v5993 = vunpack.c.h.b16 %v5948
        %v5994 = vunpack.c.l.b16 %v5949
        %v5995 = vunpack.c.h.b16 %v5949
        %v5996 = vunpack.c.l.b16 %v5950
        %v5997 = vunpack.c.h.b16 %v5950
        %v5998 = vunpack.c.l.b16 %v5951
        %v5999 = vunpack.c.h.b16 %v5951
        %v6000 = vpack.c.b16 %v5968, %v5968
        %v6001 = vpack.c.b16 %v5969, %v5969
        %v6002 = vpack.c.b16 %v5970, %v5970
        %v6003 = vpack.c.b16 %v5971, %v5971
        %v6004 = vpack.c.b16 %v5972, %v5972
        %v6005 = vpack.c.b16 %v5973, %v5973
        %v6006 = vpack.c.b16 %v5974, %v5974
        %v6007 = vpack.c.b16 %v5975, %v5975
        %v6008 = vpack.c.b16 %v5976, %v5976
        %v6009 = vpack.c.b16 %v5977, %v5977
        %v6010 = vpack.c.b16 %v5978, %v5978
        %v6011 = vpack.c.b16 %v5979, %v5979
        %v6012 = vpack.c.b16 %v5980, %v5980
        %v6013 = vpack.c.b16 %v5981, %v5981
        %v6014 = vpack.c.b16 %v5982, %v5982
        %v6015 = vpack.c.b16 %v5983, %v5983
        %v6016 = vpack.c.b16 %v5984, %v5984
        %v6017 = vpack.c.b16 %v5985, %v5985
        %v6018 = vpack.c.b16 %v5986, %v5986
        %v6019 = vpack.c.b16 %v5987, %v5987
        %v6020 = vpack.c.b16 %v5988, %v5988
        %v6021 = vpack.c.b16 %v5989, %v5989
        %v6022 = vpack.c.b16 %v5990, %v5990
        %v6023 = vpack.c.b16 %v5991, %v5991
        %v6024 = vpack.c.b16 %v5992, %v5992
        %v6025 = vpack.c.b16 %v5993, %v5993
        %v6026 = vpack.c.b16 %v5994, %v5994
        %v6027 = vpack.c.b16 %v5995, %v5995
        %v6028 = vpack.c.b16 %v5996, %v5996
        %v6029 = vpack.c.b16 %v5997, %v5997
        %v6030 = vpack.c.b16 %v5998, %v5998
        %v6031 = vpack.c.b16 %v5999, %v5999
        %vm6064 = vcmask 519168
        %6065 = vst.msk [vmem:[%s201] sm:$0xf] %vm6064, %v6000
        %6066 = vst.msk [vmem:[%s201 + $0x4] sm:$0xf] %vm6064, %v6001
        %6067 = vst.msk [vmem:[%s201 + $0x8] sm:$0xf] %vm6064, %v6002
        %6068 = vst.msk [vmem:[%s201 + $0xc] sm:$0xf] %vm6064, %v6003
        %6069 = vst.msk [vmem:[%s201 + $0x10] sm:$0xf] %vm6064, %v6004
        %6070 = vst.msk [vmem:[%s201 + $0x14] sm:$0xf] %vm6064, %v6005
        %6071 = vst.msk [vmem:[%s201 + $0x18] sm:$0xf] %vm6064, %v6006
        %6072 = vst.msk [vmem:[%s201 + $0x1c] sm:$0xf] %vm6064, %v6007
        %6073 = vst.msk [vmem:[%s201 + $0x20] sm:$0xf] %vm6064, %v6008
        %6074 = vst.msk [vmem:[%s201 + $0x24] sm:$0xf] %vm6064, %v6009
        %6075 = vst.msk [vmem:[%s201 + $0x28] sm:$0xf] %vm6064, %v6010
        %6076 = vst.msk [vmem:[%s201 + $0x2c] sm:$0xf] %vm6064, %v6011
        %6077 = vst.msk [vmem:[%s201 + $0x30] sm:$0xf] %vm6064, %v6012
        %6078 = vst.msk [vmem:[%s201 + $0x34] sm:$0xf] %vm6064, %v6013
        %6079 = vst.msk [vmem:[%s201 + $0x38] sm:$0xf] %vm6064, %v6014
        %6080 = vst.msk [vmem:[%s201 + $0x3c] sm:$0xf] %vm6064, %v6015
        %6081 = vst.msk [vmem:[%s201 + $0x40] sm:$0xf] %vm6064, %v6016
        %6082 = vst.msk [vmem:[%s201 + $0x44] sm:$0xf] %vm6064, %v6017
        %6083 = vst.msk [vmem:[%s201 + $0x48] sm:$0xf] %vm6064, %v6018
        %6084 = vst.msk [vmem:[%s201 + $0x4c] sm:$0xf] %vm6064, %v6019
        %6085 = vst.msk [vmem:[%s201 + $0x50] sm:$0xf] %vm6064, %v6020
        %6086 = vst.msk [vmem:[%s201 + $0x54] sm:$0xf] %vm6064, %v6021
        %6087 = vst.msk [vmem:[%s201 + $0x58] sm:$0xf] %vm6064, %v6022
        %6088 = vst.msk [vmem:[%s201 + $0x5c] sm:$0xf] %vm6064, %v6023
        %6089 = vst.msk [vmem:[%s201 + $0x60] sm:$0xf] %vm6064, %v6024
        %6090 = vst.msk [vmem:[%s201 + $0x64] sm:$0xf] %vm6064, %v6025
        %6091 = vst.msk [vmem:[%s201 + $0x68] sm:$0xf] %vm6064, %v6026
        %6092 = vst.msk [vmem:[%s201 + $0x6c] sm:$0xf] %vm6064, %v6027
        %6093 = vst.msk [vmem:[%s201 + $0x70] sm:$0xf] %vm6064, %v6028
        %6094 = vst.msk [vmem:[%s201 + $0x74] sm:$0xf] %vm6064, %v6029
        %6095 = vst.msk [vmem:[%s201 + $0x78] sm:$0xf] %vm6064, %v6030
        %6096 = vst.msk [vmem:[%s201 + $0x7c] sm:$0xf] %vm6064, %v6031
        %s6097 = sand.u32 %s117, 1
        %s6098 = scalar_lea.sflag [#allocation4], %s6097
        %s6099 = sand.u32 %s117, 1
        %s6100 = smul.addr %s6099, 128
        %s6101 = scalar_lea.vmem [#allocation3], %s6100
        // Predicated region
        $region33: #{conv3x3.1} parent=31 // pred_check
          %p6102 = pneg %p127
        $region34: #{conv3x3.1} parent=31 // pred_check_branch
          %6104 = sbr.rel (%p6102) target = $region36
        $region35: #{conv3x3.1} parent=31 // pred_region
          %s6106 = ssub.s32 2048, 2048
          %6107 = vsyncadd %s6098, %s6106
          %s6108 = smul.addr %s21, 32
          %s6109 = sadd.s32 %s22, %s6108
          %s6110 = smul.addr %s6109, 64
          %s6111 = scalar_lea.hbm %s3, %s6110
          %s6112 = sshll.u32 %s6101, 4
          %s6113 = int_to_ptr.vmem [resolvable:$true] %s6112
          %6118 = dma.vmem_to_hbm [thread:$0]  %s6113, 2048, %s6111, %s6098, 64, 64, 4
        $region36: #{conv3x3.1} parent=31 // pred_fallthru
          _
      $region32: #{conv3x3.1} parent=5 // pred_fallthru
        _
      %p6119 = scmp.le.s32.totalorder 2, %s12
      // Predicated region
      $region37: #{conv3x3.1} parent=5 // pred_check
        %p6120 = pneg %p6119
      $region38: #{conv3x3.1} parent=5 // pred_check_branch
        %6122 = sbr.rel (%p6120) target = $region40
      $region39: #{conv3x3.1} parent=5 // pred_region
        %s6123 = ssub.s32 %s12, 2
        // Predicated region
        $region41: #{conv3x3.1} parent=39 // pred_check
          %p6124 = pneg %p133
        $region42: #{conv3x3.1} parent=39 // pred_check_branch
          %6126 = sbr.rel (%p6124) target = $region44
        $region43: #{conv3x3.1} parent=39 // pred_region
          %s6127 = sand.u32 %s118, 1
          %s6128 = scalar_lea.sflag [#allocation4], %s6127
          %s6129 = sand.u32 %s118, 1
          %s6130 = smul.addr %s6129, 128
          %s6131 = scalar_lea.vmem [#allocation3], %s6130
          %6132 = dma.done %s6128, 2048
        $region44: #{conv3x3.1} parent=39 // pred_fallthru
          _
      $region40: #{conv3x3.1} parent=5 // pred_fallthru
        _
    $region6: #{conv3x3.1} parent=1 // loop_footer
      %s16 = sadd.s32 1, %s12
    $region7: #{conv3x3.1} parent=1 // loop_footer_branch
      %11 = sbr.rel target = $region3
    $region8: #{conv3x3.1} parent=1 // loop_exit
      _
    %6133 = vsyncpa [#allocation4], 1
    %s6134 = scalar_lea.sflag [#allocation4], 1
    %6135 = vsyncpa %s6134, 1

</llo_original>
